<compile_context>
chip_gen: v7x
topology: tpu7x:2x2x1
jax: 0.10.0
libtpu: 0.0.40
codegen_flags: <defaults>
</compile_context>

<pallas_src>
import functools

import jax
import jax.numpy as jnp
from jax import lax
from jax.experimental import pallas as pl
from jax.experimental.pallas import tpu as pltpu

D_MODEL = 32
NHEAD = 4
HEAD_DIM = D_MODEL // NHEAD
LN_EPS = 1e-5


def _cross_attn_kernel(tgt_ref, qpos_ref, mem_ref, pos_ref,
                       w_qkv_ref, w_oh_ref, b_qkv_ref, vec_ref, out_ref,
                       *, N, L, S):
    """tgt/qpos refs: (N*L, E); mem/pos refs: (N*S, E); out ref: (N, L, E)."""
    H = NHEAD

    b_out = vec_ref[0:1, :]     # (1, E)
    gamma = vec_ref[1:2, :]     # (1, E)
    beta = vec_ref[2:3, :]      # (1, E)

    t = tgt_ref[...]                                # (N*L, E)
    mem = mem_ref[...]                              # (N*S, E)
    x_q = t + qpos_ref[...]                         # (N*L, E)  tgt + query_pos
    x_k = mem + pos_ref[...]                        # (N*S, E)  memory + pos

    # Per-batch accumulators: residual + out-proj bias; per-head projected
    # context accumulates in.  Row slices are sublane-aligned (L, S mult of 8).
    accs = [t[n * L:(n + 1) * L, :] + b_out for n in range(N)]   # (L, E) f32

    # contract last dim of both operands (q @ k^T without an explicit transpose)
    dn = (((1,), (1,)), ((), ()))

    for h in range(H):                              # static unroll over heads
        # Head-split, pre-transposed weights: plain right-multiplies over the
        # whole flattened batch.  q weight/bias carry the 1/sqrt(Dh) scale.
        qh = jnp.dot(x_q, w_qkv_ref[0, h],
                     preferred_element_type=jnp.float32) + b_qkv_ref[0, h]
        kh = jnp.dot(x_k, w_qkv_ref[1, h],
                     preferred_element_type=jnp.float32) + b_qkv_ref[1, h]
        vh = jnp.dot(mem, w_qkv_ref[2, h],
                     preferred_element_type=jnp.float32) + b_qkv_ref[2, h]
        w_o = w_oh_ref[h]                           # (Dh, E)

        for n in range(N):                          # static unroll over batch
            qn = qh[n * L:(n + 1) * L, :]           # (L, Dh)
            kn = kh[n * S:(n + 1) * S, :]           # (S, Dh)
            vn = vh[n * S:(n + 1) * S, :]           # (S, Dh)

            s = lax.dot_general(qn, kn, dn,
                                preferred_element_type=jnp.float32)   # (L, S)
            s = s - jnp.max(s, axis=-1, keepdims=True)
            p = jnp.exp(s)
            p = p * (1.0 / jnp.sum(p, axis=-1, keepdims=True))
            ctx = jnp.dot(p, vn, preferred_element_type=jnp.float32)  # (L, Dh)
            # accumulate this head's slice of the output projection directly
            accs[n] = accs[n] + jnp.dot(ctx, w_o,
                                        preferred_element_type=jnp.float32)

    for n in range(N):
        acc = accs[n]
        mean = jnp.mean(acc, axis=-1, keepdims=True)
        var = jnp.mean((acc - mean) ** 2, axis=-1, keepdims=True)
        normed = (acc - mean) * lax.rsqrt(var + LN_EPS)
        out_ref[n] = normed * gamma + beta


def cross_attention_layer(tgt, memory, w_in, b_in, w_out, b_out, gamma, beta,
                          pos=None, query_pos=None):
    """tgt: (N, L, E), memory: (N, S, E). Returns (N, L, E)."""
    N, L, E = tgt.shape
    S = memory.shape[1]
    H, Dh = NHEAD, HEAD_DIM
    scale = 1.0 / (Dh ** 0.5)

    if query_pos is None:
        query_pos = jnp.zeros_like(tgt)
    if pos is None:
        pos = jnp.zeros_like(memory)

    # PyTorch in_proj_weight is (3E, E) applied as x @ W.T.  Split / transpose /
    # head-split / fold the softmax scale on the host (one-time layout work).
    w_q = w_in[0:E].T * scale                        # (E, E)
    w_k = w_in[E:2 * E].T
    w_v = w_in[2 * E:3 * E].T

    def to_heads(w):                                 # (E, E) -> (H, E, Dh)
        return w.reshape(E, H, Dh).transpose(1, 0, 2)

    w_qkv = jnp.stack([to_heads(w_q), to_heads(w_k), to_heads(w_v)])  # (3,H,E,Dh)
    w_out_h = w_out.T.reshape(H, Dh, E)              # out = concat(ctx) @ w_out.T

    b_q = b_in[0:E] * scale
    b_k = b_in[E:2 * E]
    b_v = b_in[2 * E:3 * E]
    b_qkv = jnp.stack([b_q, b_k, b_v]).reshape(3, H, 1, Dh)
    vecs = jnp.stack([b_out, gamma, beta])           # (3, E)

    kernel = functools.partial(_cross_attn_kernel, N=N, L=L, S=S)
    vmem = pl.BlockSpec(memory_space=pltpu.MemorySpace.VMEM)
    return pl.pallas_call(
        kernel,
        out_shape=jax.ShapeDtypeStruct((N, L, E), jnp.float32),
        in_specs=[vmem] * 8,          # grid=() : single invocation, all in VMEM
        out_specs=vmem,
    )(tgt.reshape(N * L, E), query_pos.reshape(N * L, E),
      memory.reshape(N * S, E), pos.reshape(N * S, E),
      w_qkv, w_out_h, b_qkv, vecs)


def reference(tgt, memory, pos, query_pos, w_in, b_in, w_out, b_out, gamma, beta):
    """Pure-JAX replica of the PyTorch forward (for verification)."""
    E, H, Dh = D_MODEL, NHEAD, HEAD_DIM
    N, L, _ = tgt.shape
    S = memory.shape[1]
    q = (tgt + query_pos) @ w_in[0:E].T + b_in[0:E]
    k = (memory + pos) @ w_in[E:2 * E].T + b_in[E:2 * E]
    v = memory @ w_in[2 * E:].T + b_in[2 * E:]
    qh = q.reshape(N, L, H, Dh).transpose(0, 2, 1, 3)
    kh = k.reshape(N, S, H, Dh).transpose(0, 2, 1, 3)
    vh = v.reshape(N, S, H, Dh).transpose(0, 2, 1, 3)
    s = jnp.einsum('nhld,nhsd->nhls', qh, kh) / (Dh ** 0.5)
    p = jax.nn.softmax(s, axis=-1)
    o = jnp.einsum('nhls,nhsd->nhld', p, vh).transpose(0, 2, 1, 3).reshape(N, L, E)
    proj = o @ w_out.T + b_out
    res = tgt + proj
    mean = res.mean(-1, keepdims=True)
    var = ((res - mean) ** 2).mean(-1, keepdims=True)
    return (res - mean) / jnp.sqrt(var + LN_EPS) * gamma + beta


def xavier_uniform(key, shape):
    fan_out, fan_in = shape
    bound = (6.0 / (fan_in + fan_out)) ** 0.5
    return jax.random.uniform(key, shape, jnp.float32, -bound, bound)


if __name__ == "__main__":
    N, L, S, E = 2, 8, 16, D_MODEL

    key = jax.random.PRNGKey(0)
    k_tgt, k_mem, k_pos, k_qpos, k_win, k_wout = jax.random.split(key, 6)

    tgt = jax.random.normal(k_tgt, (N, L, E), jnp.float32)
    memory = jax.random.normal(k_mem, (N, S, E), jnp.float32)
    pos = jax.random.normal(k_pos, (N, S, E), jnp.float32)
    query_pos = jax.random.normal(k_qpos, (N, L, E), jnp.float32)

    # Parameters (matches nn.MultiheadAttention + nn.LayerNorm init after
    # _reset_parameters: xavier_uniform on >1-dim weights, zero biases,
    # LayerNorm weight=1 / bias=0).
    w_in = xavier_uniform(k_win, (3 * E, E))
    b_in = jnp.zeros((3 * E,), jnp.float32)
    w_out = xavier_uniform(k_wout, (E, E))
    b_out = jnp.zeros((E,), jnp.float32)
    gamma = jnp.ones((E,), jnp.float32)
    beta = jnp.zeros((E,), jnp.float32)

    out = cross_attention_layer(tgt, memory, w_in, b_in, w_out, b_out,
                                gamma, beta, pos=pos, query_pos=query_pos)
    out = jax.block_until_ready(out)

    ref = reference(tgt, memory, pos, query_pos, w_in, b_in, w_out, b_out,
                    gamma, beta)
    assert out.shape == (N, L, E)
    assert jnp.allclose(out, ref, atol=2e-5, rtol=2e-5), \
        float(jnp.max(jnp.abs(out - ref)))

    print("KERNEL_OK")
</pallas_src>

<mosaic_0001>
module attributes {stable_mosaic.version = 11 : i64} {
  func.func @_cross_attn_kernel(%arg0: memref<16x32xf32, #tpu.memory_space<vmem>>, %arg1: memref<16x32xf32, #tpu.memory_space<vmem>>, %arg2: memref<32x32xf32, #tpu.memory_space<vmem>>, %arg3: memref<32x32xf32, #tpu.memory_space<vmem>>, %arg4: memref<3x4x32x8xf32, #tpu.memory_space<vmem>>, %arg5: memref<4x8x32xf32, #tpu.memory_space<vmem>>, %arg6: memref<3x4x1x8xf32, #tpu.memory_space<vmem>>, %arg7: memref<3x32xf32, #tpu.memory_space<vmem>>, %arg8: memref<2x8x32xf32, #tpu.memory_space<vmem>>) attributes {dimension_semantics = [], scalar_prefetch = 0 : i64, scratch_operands = 0 : i64, tpu.core_type = #tpu.core_type<tc>} {
    %c0 = arith.constant 0 : index
    %c0_0 = arith.constant 0 : index
    %0 = vector.load %arg7[%c0, %c0_0] : memref<3x32xf32, #tpu.memory_space<vmem>>, vector<1x32xf32>
    %c1 = arith.constant 1 : index
    %c0_1 = arith.constant 0 : index
    %1 = vector.load %arg7[%c1, %c0_1] : memref<3x32xf32, #tpu.memory_space<vmem>>, vector<1x32xf32>
    %c2 = arith.constant 2 : index
    %c0_2 = arith.constant 0 : index
    %2 = vector.load %arg7[%c2, %c0_2] : memref<3x32xf32, #tpu.memory_space<vmem>>, vector<1x32xf32>
    %c0_3 = arith.constant 0 : index
    %c0_4 = arith.constant 0 : index
    %3 = vector.load %arg0[%c0_3, %c0_4] : memref<16x32xf32, #tpu.memory_space<vmem>>, vector<16x32xf32>
    %c0_5 = arith.constant 0 : index
    %c0_6 = arith.constant 0 : index
    %4 = vector.load %arg2[%c0_5, %c0_6] : memref<32x32xf32, #tpu.memory_space<vmem>>, vector<32x32xf32>
    %c0_7 = arith.constant 0 : index
    %c0_8 = arith.constant 0 : index
    %5 = vector.load %arg1[%c0_7, %c0_8] : memref<16x32xf32, #tpu.memory_space<vmem>>, vector<16x32xf32>
    %6 = arith.addf %3, %5 : vector<16x32xf32>
    %c0_9 = arith.constant 0 : index
    %c0_10 = arith.constant 0 : index
    %7 = vector.load %arg3[%c0_9, %c0_10] : memref<32x32xf32, #tpu.memory_space<vmem>>, vector<32x32xf32>
    %8 = arith.addf %4, %7 : vector<32x32xf32>
    %9 = vector.extract_strided_slice %3 {offsets = [0, 0], sizes = [8, 32], strides = [1, 1]} : vector<16x32xf32> to vector<8x32xf32>
    %10 = vector.broadcast %0 : vector<1x32xf32> to vector<8x32xf32>
    %11 = arith.addf %9, %10 : vector<8x32xf32>
    %12 = vector.extract_strided_slice %3 {offsets = [8, 0], sizes = [8, 32], strides = [1, 1]} : vector<16x32xf32> to vector<8x32xf32>
    %13 = vector.broadcast %0 : vector<1x32xf32> to vector<8x32xf32>
    %14 = arith.addf %12, %13 : vector<8x32xf32>
    %c0_11 = arith.constant 0 : index
    %c0_12 = arith.constant 0 : index
    %c0_13 = arith.constant 0 : index
    %c0_14 = arith.constant 0 : index
    %15 = vector.load %arg4[%c0_11, %c0_12, %c0_13, %c0_14] : memref<3x4x32x8xf32, #tpu.memory_space<vmem>>, vector<1x1x32x8xf32>
    %16 = vector.shape_cast %15 : vector<1x1x32x8xf32> to vector<32x8xf32>
    %cst = arith.constant dense<0.000000e+00> : vector<16x8xf32>
    %17 = tpu.matmul %6, %16, %cst {dimension_numbers = #tpu.dot_dimension_numbers<[1], [0], [0], [1], [0, 0, 1, 1], [], []>} : vector<16x32xf32>, vector<32x8xf32>, vector<16x8xf32> -> vector<16x8xf32>
    %c0_15 = arith.constant 0 : index
    %c0_16 = arith.constant 0 : index
    %c0_17 = arith.constant 0 : index
    %c0_18 = arith.constant 0 : index
    %18 = vector.load %arg6[%c0_15, %c0_16, %c0_17, %c0_18] : memref<3x4x1x8xf32, #tpu.memory_space<vmem>>, vector<1x1x1x8xf32>
    %19 = vector.shape_cast %18 : vector<1x1x1x8xf32> to vector<1x8xf32>
    %20 = vector.broadcast %19 : vector<1x8xf32> to vector<16x8xf32>
    %21 = arith.addf %17, %20 : vector<16x8xf32>
    %c1_19 = arith.constant 1 : index
    %c0_20 = arith.constant 0 : index
    %c0_21 = arith.constant 0 : index
    %c0_22 = arith.constant 0 : index
    %22 = vector.load %arg4[%c1_19, %c0_20, %c0_21, %c0_22] : memref<3x4x32x8xf32, #tpu.memory_space<vmem>>, vector<1x1x32x8xf32>
    %23 = vector.shape_cast %22 : vector<1x1x32x8xf32> to vector<32x8xf32>
    %cst_23 = arith.constant dense<0.000000e+00> : vector<32x8xf32>
    %24 = tpu.matmul %8, %23, %cst_23 {dimension_numbers = #tpu.dot_dimension_numbers<[1], [0], [0], [1], [0, 0, 1, 1], [], []>} : vector<32x32xf32>, vector<32x8xf32>, vector<32x8xf32> -> vector<32x8xf32>
    %c1_24 = arith.constant 1 : index
    %c0_25 = arith.constant 0 : index
    %c0_26 = arith.constant 0 : index
    %c0_27 = arith.constant 0 : index
    %25 = vector.load %arg6[%c1_24, %c0_25, %c0_26, %c0_27] : memref<3x4x1x8xf32, #tpu.memory_space<vmem>>, vector<1x1x1x8xf32>
    %26 = vector.shape_cast %25 : vector<1x1x1x8xf32> to vector<1x8xf32>
    %27 = vector.broadcast %26 : vector<1x8xf32> to vector<32x8xf32>
    %28 = arith.addf %24, %27 : vector<32x8xf32>
    %c2_28 = arith.constant 2 : index
    %c0_29 = arith.constant 0 : index
    %c0_30 = arith.constant 0 : index
    %c0_31 = arith.constant 0 : index
    %29 = vector.load %arg4[%c2_28, %c0_29, %c0_30, %c0_31] : memref<3x4x32x8xf32, #tpu.memory_space<vmem>>, vector<1x1x32x8xf32>
    %30 = vector.shape_cast %29 : vector<1x1x32x8xf32> to vector<32x8xf32>
    %cst_32 = arith.constant dense<0.000000e+00> : vector<32x8xf32>
    %31 = tpu.matmul %4, %30, %cst_32 {dimension_numbers = #tpu.dot_dimension_numbers<[1], [0], [0], [1], [0, 0, 1, 1], [], []>} : vector<32x32xf32>, vector<32x8xf32>, vector<32x8xf32> -> vector<32x8xf32>
    %c2_33 = arith.constant 2 : index
    %c0_34 = arith.constant 0 : index
    %c0_35 = arith.constant 0 : index
    %c0_36 = arith.constant 0 : index
    %32 = vector.load %arg6[%c2_33, %c0_34, %c0_35, %c0_36] : memref<3x4x1x8xf32, #tpu.memory_space<vmem>>, vector<1x1x1x8xf32>
    %33 = vector.shape_cast %32 : vector<1x1x1x8xf32> to vector<1x8xf32>
    %34 = vector.broadcast %33 : vector<1x8xf32> to vector<32x8xf32>
    %35 = arith.addf %31, %34 : vector<32x8xf32>
    %c0_37 = arith.constant 0 : index
    %c0_38 = arith.constant 0 : index
    %c0_39 = arith.constant 0 : index
    %36 = vector.load %arg5[%c0_37, %c0_38, %c0_39] : memref<4x8x32xf32, #tpu.memory_space<vmem>>, vector<1x8x32xf32>
    %37 = vector.shape_cast %36 : vector<1x8x32xf32> to vector<8x32xf32>
    %38 = vector.extract_strided_slice %21 {offsets = [0, 0], sizes = [8, 8], strides = [1, 1]} : vector<16x8xf32> to vector<8x8xf32>
    %39 = vector.extract_strided_slice %28 {offsets = [0, 0], sizes = [16, 8], strides = [1, 1]} : vector<32x8xf32> to vector<16x8xf32>
    %40 = vector.extract_strided_slice %35 {offsets = [0, 0], sizes = [16, 8], strides = [1, 1]} : vector<32x8xf32> to vector<16x8xf32>
    %cst_40 = arith.constant dense<0.000000e+00> : vector<8x16xf32>
    %41 = tpu.matmul %38, %39, %cst_40 {dimension_numbers = #tpu.dot_dimension_numbers<[1], [1], [0], [0], [0, 0, 1, 0], [], []>} : vector<8x8xf32>, vector<16x8xf32>, vector<8x16xf32> -> vector<8x16xf32>
    %cst_41 = arith.constant dense<0xFF800000> : vector<8xf32>
    %42 = vector.multi_reduction <maximumf>, %41, %cst_41 [1] : vector<8x16xf32> to vector<8xf32>
    %43 = vector.shape_cast %42 : vector<8xf32> to vector<8x1xf32>
    %44 = vector.broadcast %43 : vector<8x1xf32> to vector<8x16xf32>
    %45 = arith.subf %41, %44 : vector<8x16xf32>
    %46 = math.exp %45 : vector<8x16xf32>
    %cst_42 = arith.constant dense<0.000000e+00> : vector<8xf32>
    %47 = vector.multi_reduction <add>, %46, %cst_42 [1] : vector<8x16xf32> to vector<8xf32>
    %48 = vector.shape_cast %47 : vector<8xf32> to vector<8x1xf32>
    %cst_43 = arith.constant 1.000000e+00 : f32
    %49 = vector.broadcast %cst_43 : f32 to vector<8x1xf32>
    %50 = arith.divf %49, %48 : vector<8x1xf32>
    %51 = vector.broadcast %50 : vector<8x1xf32> to vector<8x16xf32>
    %52 = arith.mulf %46, %51 : vector<8x16xf32>
    %cst_44 = arith.constant dense<0.000000e+00> : vector<8x8xf32>
    %53 = tpu.matmul %52, %40, %cst_44 {dimension_numbers = #tpu.dot_dimension_numbers<[1], [0], [0], [1], [0, 0, 1, 1], [], []>} : vector<8x16xf32>, vector<16x8xf32>, vector<8x8xf32> -> vector<8x8xf32>
    %cst_45 = arith.constant dense<0.000000e+00> : vector<8x32xf32>
    %54 = tpu.matmul %53, %37, %cst_45 {dimension_numbers = #tpu.dot_dimension_numbers<[1], [0], [0], [1], [0, 0, 1, 1], [], []>} : vector<8x8xf32>, vector<8x32xf32>, vector<8x32xf32> -> vector<8x32xf32>
    %55 = arith.addf %11, %54 : vector<8x32xf32>
    %56 = vector.extract_strided_slice %21 {offsets = [8, 0], sizes = [8, 8], strides = [1, 1]} : vector<16x8xf32> to vector<8x8xf32>
    %57 = vector.extract_strided_slice %28 {offsets = [16, 0], sizes = [16, 8], strides = [1, 1]} : vector<32x8xf32> to vector<16x8xf32>
    %58 = vector.extract_strided_slice %35 {offsets = [16, 0], sizes = [16, 8], strides = [1, 1]} : vector<32x8xf32> to vector<16x8xf32>
    %cst_46 = arith.constant dense<0.000000e+00> : vector<8x16xf32>
    %59 = tpu.matmul %56, %57, %cst_46 {dimension_numbers = #tpu.dot_dimension_numbers<[1], [1], [0], [0], [0, 0, 1, 0], [], []>} : vector<8x8xf32>, vector<16x8xf32>, vector<8x16xf32> -> vector<8x16xf32>
    %cst_47 = arith.constant dense<0xFF800000> : vector<8xf32>
    %60 = vector.multi_reduction <maximumf>, %59, %cst_47 [1] : vector<8x16xf32> to vector<8xf32>
    %61 = vector.shape_cast %60 : vector<8xf32> to vector<8x1xf32>
    %62 = vector.broadcast %61 : vector<8x1xf32> to vector<8x16xf32>
    %63 = arith.subf %59, %62 : vector<8x16xf32>
    %64 = math.exp %63 : vector<8x16xf32>
    %cst_48 = arith.constant dense<0.000000e+00> : vector<8xf32>
    %65 = vector.multi_reduction <add>, %64, %cst_48 [1] : vector<8x16xf32> to vector<8xf32>
    %66 = vector.shape_cast %65 : vector<8xf32> to vector<8x1xf32>
    %cst_49 = arith.constant 1.000000e+00 : f32
    %67 = vector.broadcast %cst_49 : f32 to vector<8x1xf32>
    %68 = arith.divf %67, %66 : vector<8x1xf32>
    %69 = vector.broadcast %68 : vector<8x1xf32> to vector<8x16xf32>
    %70 = arith.mulf %64, %69 : vector<8x16xf32>
    %cst_50 = arith.constant dense<0.000000e+00> : vector<8x8xf32>
    %71 = tpu.matmul %70, %58, %cst_50 {dimension_numbers = #tpu.dot_dimension_numbers<[1], [0], [0], [1], [0, 0, 1, 1], [], []>} : vector<8x16xf32>, vector<16x8xf32>, vector<8x8xf32> -> vector<8x8xf32>
    %cst_51 = arith.constant dense<0.000000e+00> : vector<8x32xf32>
    %72 = tpu.matmul %71, %37, %cst_51 {dimension_numbers = #tpu.dot_dimension_numbers<[1], [0], [0], [1], [0, 0, 1, 1], [], []>} : vector<8x8xf32>, vector<8x32xf32>, vector<8x32xf32> -> vector<8x32xf32>
    %73 = arith.addf %14, %72 : vector<8x32xf32>
    %c0_52 = arith.constant 0 : index
    %c1_53 = arith.constant 1 : index
    %c0_54 = arith.constant 0 : index
    %c0_55 = arith.constant 0 : index
    %74 = vector.load %arg4[%c0_52, %c1_53, %c0_54, %c0_55] : memref<3x4x32x8xf32, #tpu.memory_space<vmem>>, vector<1x1x32x8xf32>
    %75 = vector.shape_cast %74 : vector<1x1x32x8xf32> to vector<32x8xf32>
    %cst_56 = arith.constant dense<0.000000e+00> : vector<16x8xf32>
    %76 = tpu.matmul %6, %75, %cst_56 {dimension_numbers = #tpu.dot_dimension_numbers<[1], [0], [0], [1], [0, 0, 1, 1], [], []>} : vector<16x32xf32>, vector<32x8xf32>, vector<16x8xf32> -> vector<16x8xf32>
    %c0_57 = arith.constant 0 : index
    %c1_58 = arith.constant 1 : index
    %c0_59 = arith.constant 0 : index
    %c0_60 = arith.constant 0 : index
    %77 = vector.load %arg6[%c0_57, %c1_58, %c0_59, %c0_60] : memref<3x4x1x8xf32, #tpu.memory_space<vmem>>, vector<1x1x1x8xf32>
    %78 = vector.shape_cast %77 : vector<1x1x1x8xf32> to vector<1x8xf32>
    %79 = vector.broadcast %78 : vector<1x8xf32> to vector<16x8xf32>
    %80 = arith.addf %76, %79 : vector<16x8xf32>
    %c1_61 = arith.constant 1 : index
    %c1_62 = arith.constant 1 : index
    %c0_63 = arith.constant 0 : index
    %c0_64 = arith.constant 0 : index
    %81 = vector.load %arg4[%c1_61, %c1_62, %c0_63, %c0_64] : memref<3x4x32x8xf32, #tpu.memory_space<vmem>>, vector<1x1x32x8xf32>
    %82 = vector.shape_cast %81 : vector<1x1x32x8xf32> to vector<32x8xf32>
    %cst_65 = arith.constant dense<0.000000e+00> : vector<32x8xf32>
    %83 = tpu.matmul %8, %82, %cst_65 {dimension_numbers = #tpu.dot_dimension_numbers<[1], [0], [0], [1], [0, 0, 1, 1], [], []>} : vector<32x32xf32>, vector<32x8xf32>, vector<32x8xf32> -> vector<32x8xf32>
    %c1_66 = arith.constant 1 : index
    %c1_67 = arith.constant 1 : index
    %c0_68 = arith.constant 0 : index
    %c0_69 = arith.constant 0 : index
    %84 = vector.load %arg6[%c1_66, %c1_67, %c0_68, %c0_69] : memref<3x4x1x8xf32, #tpu.memory_space<vmem>>, vector<1x1x1x8xf32>
    %85 = vector.shape_cast %84 : vector<1x1x1x8xf32> to vector<1x8xf32>
    %86 = vector.broadcast %85 : vector<1x8xf32> to vector<32x8xf32>
    %87 = arith.addf %83, %86 : vector<32x8xf32>
    %c2_70 = arith.constant 2 : index
    %c1_71 = arith.constant 1 : index
    %c0_72 = arith.constant 0 : index
    %c0_73 = arith.constant 0 : index
    %88 = vector.load %arg4[%c2_70, %c1_71, %c0_72, %c0_73] : memref<3x4x32x8xf32, #tpu.memory_space<vmem>>, vector<1x1x32x8xf32>
    %89 = vector.shape_cast %88 : vector<1x1x32x8xf32> to vector<32x8xf32>
    %cst_74 = arith.constant dense<0.000000e+00> : vector<32x8xf32>
    %90 = tpu.matmul %4, %89, %cst_74 {dimension_numbers = #tpu.dot_dimension_numbers<[1], [0], [0], [1], [0, 0, 1, 1], [], []>} : vector<32x32xf32>, vector<32x8xf32>, vector<32x8xf32> -> vector<32x8xf32>
    %c2_75 = arith.constant 2 : index
    %c1_76 = arith.constant 1 : index
    %c0_77 = arith.constant 0 : index
    %c0_78 = arith.constant 0 : index
    %91 = vector.load %arg6[%c2_75, %c1_76, %c0_77, %c0_78] : memref<3x4x1x8xf32, #tpu.memory_space<vmem>>, vector<1x1x1x8xf32>
    %92 = vector.shape_cast %91 : vector<1x1x1x8xf32> to vector<1x8xf32>
    %93 = vector.broadcast %92 : vector<1x8xf32> to vector<32x8xf32>
    %94 = arith.addf %90, %93 : vector<32x8xf32>
    %c1_79 = arith.constant 1 : index
    %c0_80 = arith.constant 0 : index
    %c0_81 = arith.constant 0 : index
    %95 = vector.load %arg5[%c1_79, %c0_80, %c0_81] : memref<4x8x32xf32, #tpu.memory_space<vmem>>, vector<1x8x32xf32>
    %96 = vector.shape_cast %95 : vector<1x8x32xf32> to vector<8x32xf32>
    %97 = vector.extract_strided_slice %80 {offsets = [0, 0], sizes = [8, 8], strides = [1, 1]} : vector<16x8xf32> to vector<8x8xf32>
    %98 = vector.extract_strided_slice %87 {offsets = [0, 0], sizes = [16, 8], strides = [1, 1]} : vector<32x8xf32> to vector<16x8xf32>
    %99 = vector.extract_strided_slice %94 {offsets = [0, 0], sizes = [16, 8], strides = [1, 1]} : vector<32x8xf32> to vector<16x8xf32>
    %cst_82 = arith.constant dense<0.000000e+00> : vector<8x16xf32>
    %100 = tpu.matmul %97, %98, %cst_82 {dimension_numbers = #tpu.dot_dimension_numbers<[1], [1], [0], [0], [0, 0, 1, 0], [], []>} : vector<8x8xf32>, vector<16x8xf32>, vector<8x16xf32> -> vector<8x16xf32>
    %cst_83 = arith.constant dense<0xFF800000> : vector<8xf32>
    %101 = vector.multi_reduction <maximumf>, %100, %cst_83 [1] : vector<8x16xf32> to vector<8xf32>
    %102 = vector.shape_cast %101 : vector<8xf32> to vector<8x1xf32>
    %103 = vector.broadcast %102 : vector<8x1xf32> to vector<8x16xf32>
    %104 = arith.subf %100, %103 : vector<8x16xf32>
    %105 = math.exp %104 : vector<8x16xf32>
    %cst_84 = arith.constant dense<0.000000e+00> : vector<8xf32>
    %106 = vector.multi_reduction <add>, %105, %cst_84 [1] : vector<8x16xf32> to vector<8xf32>
    %107 = vector.shape_cast %106 : vector<8xf32> to vector<8x1xf32>
    %cst_85 = arith.constant 1.000000e+00 : f32
    %108 = vector.broadcast %cst_85 : f32 to vector<8x1xf32>
    %109 = arith.divf %108, %107 : vector<8x1xf32>
    %110 = vector.broadcast %109 : vector<8x1xf32> to vector<8x16xf32>
    %111 = arith.mulf %105, %110 : vector<8x16xf32>
    %cst_86 = arith.constant dense<0.000000e+00> : vector<8x8xf32>
    %112 = tpu.matmul %111, %99, %cst_86 {dimension_numbers = #tpu.dot_dimension_numbers<[1], [0], [0], [1], [0, 0, 1, 1], [], []>} : vector<8x16xf32>, vector<16x8xf32>, vector<8x8xf32> -> vector<8x8xf32>
    %cst_87 = arith.constant dense<0.000000e+00> : vector<8x32xf32>
    %113 = tpu.matmul %112, %96, %cst_87 {dimension_numbers = #tpu.dot_dimension_numbers<[1], [0], [0], [1], [0, 0, 1, 1], [], []>} : vector<8x8xf32>, vector<8x32xf32>, vector<8x32xf32> -> vector<8x32xf32>
    %114 = arith.addf %55, %113 : vector<8x32xf32>
    %115 = vector.extract_strided_slice %80 {offsets = [8, 0], sizes = [8, 8], strides = [1, 1]} : vector<16x8xf32> to vector<8x8xf32>
    %116 = vector.extract_strided_slice %87 {offsets = [16, 0], sizes = [16, 8], strides = [1, 1]} : vector<32x8xf32> to vector<16x8xf32>
    %117 = vector.extract_strided_slice %94 {offsets = [16, 0], sizes = [16, 8], strides = [1, 1]} : vector<32x8xf32> to vector<16x8xf32>
    %cst_88 = arith.constant dense<0.000000e+00> : vector<8x16xf32>
    %118 = tpu.matmul %115, %116, %cst_88 {dimension_numbers = #tpu.dot_dimension_numbers<[1], [1], [0], [0], [0, 0, 1, 0], [], []>} : vector<8x8xf32>, vector<16x8xf32>, vector<8x16xf32> -> vector<8x16xf32>
    %cst_89 = arith.constant dense<0xFF800000> : vector<8xf32>
    %119 = vector.multi_reduction <maximumf>, %118, %cst_89 [1] : vector<8x16xf32> to vector<8xf32>
    %120 = vector.shape_cast %119 : vector<8xf32> to vector<8x1xf32>
    %121 = vector.broadcast %120 : vector<8x1xf32> to vector<8x16xf32>
    %122 = arith.subf %118, %121 : vector<8x16xf32>
    %123 = math.exp %122 : vector<8x16xf32>
    %cst_90 = arith.constant dense<0.000000e+00> : vector<8xf32>
    %124 = vector.multi_reduction <add>, %123, %cst_90 [1] : vector<8x16xf32> to vector<8xf32>
    %125 = vector.shape_cast %124 : vector<8xf32> to vector<8x1xf32>
    %cst_91 = arith.constant 1.000000e+00 : f32
    %126 = vector.broadcast %cst_91 : f32 to vector<8x1xf32>
    %127 = arith.divf %126, %125 : vector<8x1xf32>
    %128 = vector.broadcast %127 : vector<8x1xf32> to vector<8x16xf32>
    %129 = arith.mulf %123, %128 : vector<8x16xf32>
    %cst_92 = arith.constant dense<0.000000e+00> : vector<8x8xf32>
    %130 = tpu.matmul %129, %117, %cst_92 {dimension_numbers = #tpu.dot_dimension_numbers<[1], [0], [0], [1], [0, 0, 1, 1], [], []>} : vector<8x16xf32>, vector<16x8xf32>, vector<8x8xf32> -> vector<8x8xf32>
    %cst_93 = arith.constant dense<0.000000e+00> : vector<8x32xf32>
    %131 = tpu.matmul %130, %96, %cst_93 {dimension_numbers = #tpu.dot_dimension_numbers<[1], [0], [0], [1], [0, 0, 1, 1], [], []>} : vector<8x8xf32>, vector<8x32xf32>, vector<8x32xf32> -> vector<8x32xf32>
    %132 = arith.addf %73, %131 : vector<8x32xf32>
    %c0_94 = arith.constant 0 : index
    %c2_95 = arith.constant 2 : index
    %c0_96 = arith.constant 0 : index
    %c0_97 = arith.constant 0 : index
    %133 = vector.load %arg4[%c0_94, %c2_95, %c0_96, %c0_97] : memref<3x4x32x8xf32, #tpu.memory_space<vmem>>, vector<1x1x32x8xf32>
    %134 = vector.shape_cast %133 : vector<1x1x32x8xf32> to vector<32x8xf32>
    %cst_98 = arith.constant dense<0.000000e+00> : vector<16x8xf32>
    %135 = tpu.matmul %6, %134, %cst_98 {dimension_numbers = #tpu.dot_dimension_numbers<[1], [0], [0], [1], [0, 0, 1, 1], [], []>} : vector<16x32xf32>, vector<32x8xf32>, vector<16x8xf32> -> vector<16x8xf32>
    %c0_99 = arith.constant 0 : index
    %c2_100 = arith.constant 2 : index
    %c0_101 = arith.constant 0 : index
    %c0_102 = arith.constant 0 : index
    %136 = vector.load %arg6[%c0_99, %c2_100, %c0_101, %c0_102] : memref<3x4x1x8xf32, #tpu.memory_space<vmem>>, vector<1x1x1x8xf32>
    %137 = vector.shape_cast %136 : vector<1x1x1x8xf32> to vector<1x8xf32>
    %138 = vector.broadcast %137 : vector<1x8xf32> to vector<16x8xf32>
    %139 = arith.addf %135, %138 : vector<16x8xf32>
    %c1_103 = arith.constant 1 : index
    %c2_104 = arith.constant 2 : index
    %c0_105 = arith.constant 0 : index
    %c0_106 = arith.constant 0 : index
    %140 = vector.load %arg4[%c1_103, %c2_104, %c0_105, %c0_106] : memref<3x4x32x8xf32, #tpu.memory_space<vmem>>, vector<1x1x32x8xf32>
    %141 = vector.shape_cast %140 : vector<1x1x32x8xf32> to vector<32x8xf32>
    %cst_107 = arith.constant dense<0.000000e+00> : vector<32x8xf32>
    %142 = tpu.matmul %8, %141, %cst_107 {dimension_numbers = #tpu.dot_dimension_numbers<[1], [0], [0], [1], [0, 0, 1, 1], [], []>} : vector<32x32xf32>, vector<32x8xf32>, vector<32x8xf32> -> vector<32x8xf32>
    %c1_108 = arith.constant 1 : index
    %c2_109 = arith.constant 2 : index
    %c0_110 = arith.constant 0 : index
    %c0_111 = arith.constant 0 : index
    %143 = vector.load %arg6[%c1_108, %c2_109, %c0_110, %c0_111] : memref<3x4x1x8xf32, #tpu.memory_space<vmem>>, vector<1x1x1x8xf32>
    %144 = vector.shape_cast %143 : vector<1x1x1x8xf32> to vector<1x8xf32>
    %145 = vector.broadcast %144 : vector<1x8xf32> to vector<32x8xf32>
    %146 = arith.addf %142, %145 : vector<32x8xf32>
    %c2_112 = arith.constant 2 : index
    %c2_113 = arith.constant 2 : index
    %c0_114 = arith.constant 0 : index
    %c0_115 = arith.constant 0 : index
    %147 = vector.load %arg4[%c2_112, %c2_113, %c0_114, %c0_115] : memref<3x4x32x8xf32, #tpu.memory_space<vmem>>, vector<1x1x32x8xf32>
    %148 = vector.shape_cast %147 : vector<1x1x32x8xf32> to vector<32x8xf32>
    %cst_116 = arith.constant dense<0.000000e+00> : vector<32x8xf32>
    %149 = tpu.matmul %4, %148, %cst_116 {dimension_numbers = #tpu.dot_dimension_numbers<[1], [0], [0], [1], [0, 0, 1, 1], [], []>} : vector<32x32xf32>, vector<32x8xf32>, vector<32x8xf32> -> vector<32x8xf32>
    %c2_117 = arith.constant 2 : index
    %c2_118 = arith.constant 2 : index
    %c0_119 = arith.constant 0 : index
    %c0_120 = arith.constant 0 : index
    %150 = vector.load %arg6[%c2_117, %c2_118, %c0_119, %c0_120] : memref<3x4x1x8xf32, #tpu.memory_space<vmem>>, vector<1x1x1x8xf32>
    %151 = vector.shape_cast %150 : vector<1x1x1x8xf32> to vector<1x8xf32>
    %152 = vector.broadcast %151 : vector<1x8xf32> to vector<32x8xf32>
    %153 = arith.addf %149, %152 : vector<32x8xf32>
    %c2_121 = arith.constant 2 : index
    %c0_122 = arith.constant 0 : index
    %c0_123 = arith.constant 0 : index
    %154 = vector.load %arg5[%c2_121, %c0_122, %c0_123] : memref<4x8x32xf32, #tpu.memory_space<vmem>>, vector<1x8x32xf32>
    %155 = vector.shape_cast %154 : vector<1x8x32xf32> to vector<8x32xf32>
    %156 = vector.extract_strided_slice %139 {offsets = [0, 0], sizes = [8, 8], strides = [1, 1]} : vector<16x8xf32> to vector<8x8xf32>
    %157 = vector.extract_strided_slice %146 {offsets = [0, 0], sizes = [16, 8], strides = [1, 1]} : vector<32x8xf32> to vector<16x8xf32>
    %158 = vector.extract_strided_slice %153 {offsets = [0, 0], sizes = [16, 8], strides = [1, 1]} : vector<32x8xf32> to vector<16x8xf32>
    %cst_124 = arith.constant dense<0.000000e+00> : vector<8x16xf32>
    %159 = tpu.matmul %156, %157, %cst_124 {dimension_numbers = #tpu.dot_dimension_numbers<[1], [1], [0], [0], [0, 0, 1, 0], [], []>} : vector<8x8xf32>, vector<16x8xf32>, vector<8x16xf32> -> vector<8x16xf32>
    %cst_125 = arith.constant dense<0xFF800000> : vector<8xf32>
    %160 = vector.multi_reduction <maximumf>, %159, %cst_125 [1] : vector<8x16xf32> to vector<8xf32>
    %161 = vector.shape_cast %160 : vector<8xf32> to vector<8x1xf32>
    %162 = vector.broadcast %161 : vector<8x1xf32> to vector<8x16xf32>
    %163 = arith.subf %159, %162 : vector<8x16xf32>
    %164 = math.exp %163 : vector<8x16xf32>
    %cst_126 = arith.constant dense<0.000000e+00> : vector<8xf32>
    %165 = vector.multi_reduction <add>, %164, %cst_126 [1] : vector<8x16xf32> to vector<8xf32>
    %166 = vector.shape_cast %165 : vector<8xf32> to vector<8x1xf32>
    %cst_127 = arith.constant 1.000000e+00 : f32
    %167 = vector.broadcast %cst_127 : f32 to vector<8x1xf32>
    %168 = arith.divf %167, %166 : vector<8x1xf32>
    %169 = vector.broadcast %168 : vector<8x1xf32> to vector<8x16xf32>
    %170 = arith.mulf %164, %169 : vector<8x16xf32>
    %cst_128 = arith.constant dense<0.000000e+00> : vector<8x8xf32>
    %171 = tpu.matmul %170, %158, %cst_128 {dimension_numbers = #tpu.dot_dimension_numbers<[1], [0], [0], [1], [0, 0, 1, 1], [], []>} : vector<8x16xf32>, vector<16x8xf32>, vector<8x8xf32> -> vector<8x8xf32>
    %cst_129 = arith.constant dense<0.000000e+00> : vector<8x32xf32>
    %172 = tpu.matmul %171, %155, %cst_129 {dimension_numbers = #tpu.dot_dimension_numbers<[1], [0], [0], [1], [0, 0, 1, 1], [], []>} : vector<8x8xf32>, vector<8x32xf32>, vector<8x32xf32> -> vector<8x32xf32>
    %173 = arith.addf %114, %172 : vector<8x32xf32>
    %174 = vector.extract_strided_slice %139 {offsets = [8, 0], sizes = [8, 8], strides = [1, 1]} : vector<16x8xf32> to vector<8x8xf32>
    %175 = vector.extract_strided_slice %146 {offsets = [16, 0], sizes = [16, 8], strides = [1, 1]} : vector<32x8xf32> to vector<16x8xf32>
    %176 = vector.extract_strided_slice %153 {offsets = [16, 0], sizes = [16, 8], strides = [1, 1]} : vector<32x8xf32> to vector<16x8xf32>
    %cst_130 = arith.constant dense<0.000000e+00> : vector<8x16xf32>
    %177 = tpu.matmul %174, %175, %cst_130 {dimension_numbers = #tpu.dot_dimension_numbers<[1], [1], [0], [0], [0, 0, 1, 0], [], []>} : vector<8x8xf32>, vector<16x8xf32>, vector<8x16xf32> -> vector<8x16xf32>
    %cst_131 = arith.constant dense<0xFF800000> : vector<8xf32>
    %178 = vector.multi_reduction <maximumf>, %177, %cst_131 [1] : vector<8x16xf32> to vector<8xf32>
    %179 = vector.shape_cast %178 : vector<8xf32> to vector<8x1xf32>
    %180 = vector.broadcast %179 : vector<8x1xf32> to vector<8x16xf32>
    %181 = arith.subf %177, %180 : vector<8x16xf32>
    %182 = math.exp %181 : vector<8x16xf32>
    %cst_132 = arith.constant dense<0.000000e+00> : vector<8xf32>
    %183 = vector.multi_reduction <add>, %182, %cst_132 [1] : vector<8x16xf32> to vector<8xf32>
    %184 = vector.shape_cast %183 : vector<8xf32> to vector<8x1xf32>
    %cst_133 = arith.constant 1.000000e+00 : f32
    %185 = vector.broadcast %cst_133 : f32 to vector<8x1xf32>
    %186 = arith.divf %185, %184 : vector<8x1xf32>
    %187 = vector.broadcast %186 : vector<8x1xf32> to vector<8x16xf32>
    %188 = arith.mulf %182, %187 : vector<8x16xf32>
    %cst_134 = arith.constant dense<0.000000e+00> : vector<8x8xf32>
    %189 = tpu.matmul %188, %176, %cst_134 {dimension_numbers = #tpu.dot_dimension_numbers<[1], [0], [0], [1], [0, 0, 1, 1], [], []>} : vector<8x16xf32>, vector<16x8xf32>, vector<8x8xf32> -> vector<8x8xf32>
    %cst_135 = arith.constant dense<0.000000e+00> : vector<8x32xf32>
    %190 = tpu.matmul %189, %155, %cst_135 {dimension_numbers = #tpu.dot_dimension_numbers<[1], [0], [0], [1], [0, 0, 1, 1], [], []>} : vector<8x8xf32>, vector<8x32xf32>, vector<8x32xf32> -> vector<8x32xf32>
    %191 = arith.addf %132, %190 : vector<8x32xf32>
    %c0_136 = arith.constant 0 : index
    %c3 = arith.constant 3 : index
    %c0_137 = arith.constant 0 : index
    %c0_138 = arith.constant 0 : index
    %192 = vector.load %arg4[%c0_136, %c3, %c0_137, %c0_138] : memref<3x4x32x8xf32, #tpu.memory_space<vmem>>, vector<1x1x32x8xf32>
    %193 = vector.shape_cast %192 : vector<1x1x32x8xf32> to vector<32x8xf32>
    %cst_139 = arith.constant dense<0.000000e+00> : vector<16x8xf32>
    %194 = tpu.matmul %6, %193, %cst_139 {dimension_numbers = #tpu.dot_dimension_numbers<[1], [0], [0], [1], [0, 0, 1, 1], [], []>} : vector<16x32xf32>, vector<32x8xf32>, vector<16x8xf32> -> vector<16x8xf32>
    %c0_140 = arith.constant 0 : index
    %c3_141 = arith.constant 3 : index
    %c0_142 = arith.constant 0 : index
    %c0_143 = arith.constant 0 : index
    %195 = vector.load %arg6[%c0_140, %c3_141, %c0_142, %c0_143] : memref<3x4x1x8xf32, #tpu.memory_space<vmem>>, vector<1x1x1x8xf32>
    %196 = vector.shape_cast %195 : vector<1x1x1x8xf32> to vector<1x8xf32>
    %197 = vector.broadcast %196 : vector<1x8xf32> to vector<16x8xf32>
    %198 = arith.addf %194, %197 : vector<16x8xf32>
    %c1_144 = arith.constant 1 : index
    %c3_145 = arith.constant 3 : index
    %c0_146 = arith.constant 0 : index
    %c0_147 = arith.constant 0 : index
    %199 = vector.load %arg4[%c1_144, %c3_145, %c0_146, %c0_147] : memref<3x4x32x8xf32, #tpu.memory_space<vmem>>, vector<1x1x32x8xf32>
    %200 = vector.shape_cast %199 : vector<1x1x32x8xf32> to vector<32x8xf32>
    %cst_148 = arith.constant dense<0.000000e+00> : vector<32x8xf32>
    %201 = tpu.matmul %8, %200, %cst_148 {dimension_numbers = #tpu.dot_dimension_numbers<[1], [0], [0], [1], [0, 0, 1, 1], [], []>} : vector<32x32xf32>, vector<32x8xf32>, vector<32x8xf32> -> vector<32x8xf32>
    %c1_149 = arith.constant 1 : index
    %c3_150 = arith.constant 3 : index
    %c0_151 = arith.constant 0 : index
    %c0_152 = arith.constant 0 : index
    %202 = vector.load %arg6[%c1_149, %c3_150, %c0_151, %c0_152] : memref<3x4x1x8xf32, #tpu.memory_space<vmem>>, vector<1x1x1x8xf32>
    %203 = vector.shape_cast %202 : vector<1x1x1x8xf32> to vector<1x8xf32>
    %204 = vector.broadcast %203 : vector<1x8xf32> to vector<32x8xf32>
    %205 = arith.addf %201, %204 : vector<32x8xf32>
    %c2_153 = arith.constant 2 : index
    %c3_154 = arith.constant 3 : index
    %c0_155 = arith.constant 0 : index
    %c0_156 = arith.constant 0 : index
    %206 = vector.load %arg4[%c2_153, %c3_154, %c0_155, %c0_156] : memref<3x4x32x8xf32, #tpu.memory_space<vmem>>, vector<1x1x32x8xf32>
    %207 = vector.shape_cast %206 : vector<1x1x32x8xf32> to vector<32x8xf32>
    %cst_157 = arith.constant dense<0.000000e+00> : vector<32x8xf32>
    %208 = tpu.matmul %4, %207, %cst_157 {dimension_numbers = #tpu.dot_dimension_numbers<[1], [0], [0], [1], [0, 0, 1, 1], [], []>} : vector<32x32xf32>, vector<32x8xf32>, vector<32x8xf32> -> vector<32x8xf32>
    %c2_158 = arith.constant 2 : index
    %c3_159 = arith.constant 3 : index
    %c0_160 = arith.constant 0 : index
    %c0_161 = arith.constant 0 : index
    %209 = vector.load %arg6[%c2_158, %c3_159, %c0_160, %c0_161] : memref<3x4x1x8xf32, #tpu.memory_space<vmem>>, vector<1x1x1x8xf32>
    %210 = vector.shape_cast %209 : vector<1x1x1x8xf32> to vector<1x8xf32>
    %211 = vector.broadcast %210 : vector<1x8xf32> to vector<32x8xf32>
    %212 = arith.addf %208, %211 : vector<32x8xf32>
    %c3_162 = arith.constant 3 : index
    %c0_163 = arith.constant 0 : index
    %c0_164 = arith.constant 0 : index
    %213 = vector.load %arg5[%c3_162, %c0_163, %c0_164] : memref<4x8x32xf32, #tpu.memory_space<vmem>>, vector<1x8x32xf32>
    %214 = vector.shape_cast %213 : vector<1x8x32xf32> to vector<8x32xf32>
    %215 = vector.extract_strided_slice %198 {offsets = [0, 0], sizes = [8, 8], strides = [1, 1]} : vector<16x8xf32> to vector<8x8xf32>
    %216 = vector.extract_strided_slice %205 {offsets = [0, 0], sizes = [16, 8], strides = [1, 1]} : vector<32x8xf32> to vector<16x8xf32>
    %217 = vector.extract_strided_slice %212 {offsets = [0, 0], sizes = [16, 8], strides = [1, 1]} : vector<32x8xf32> to vector<16x8xf32>
    %cst_165 = arith.constant dense<0.000000e+00> : vector<8x16xf32>
    %218 = tpu.matmul %215, %216, %cst_165 {dimension_numbers = #tpu.dot_dimension_numbers<[1], [1], [0], [0], [0, 0, 1, 0], [], []>} : vector<8x8xf32>, vector<16x8xf32>, vector<8x16xf32> -> vector<8x16xf32>
    %cst_166 = arith.constant dense<0xFF800000> : vector<8xf32>
    %219 = vector.multi_reduction <maximumf>, %218, %cst_166 [1] : vector<8x16xf32> to vector<8xf32>
    %220 = vector.shape_cast %219 : vector<8xf32> to vector<8x1xf32>
    %221 = vector.broadcast %220 : vector<8x1xf32> to vector<8x16xf32>
    %222 = arith.subf %218, %221 : vector<8x16xf32>
    %223 = math.exp %222 : vector<8x16xf32>
    %cst_167 = arith.constant dense<0.000000e+00> : vector<8xf32>
    %224 = vector.multi_reduction <add>, %223, %cst_167 [1] : vector<8x16xf32> to vector<8xf32>
    %225 = vector.shape_cast %224 : vector<8xf32> to vector<8x1xf32>
    %cst_168 = arith.constant 1.000000e+00 : f32
    %226 = vector.broadcast %cst_168 : f32 to vector<8x1xf32>
    %227 = arith.divf %226, %225 : vector<8x1xf32>
    %228 = vector.broadcast %227 : vector<8x1xf32> to vector<8x16xf32>
    %229 = arith.mulf %223, %228 : vector<8x16xf32>
    %cst_169 = arith.constant dense<0.000000e+00> : vector<8x8xf32>
    %230 = tpu.matmul %229, %217, %cst_169 {dimension_numbers = #tpu.dot_dimension_numbers<[1], [0], [0], [1], [0, 0, 1, 1], [], []>} : vector<8x16xf32>, vector<16x8xf32>, vector<8x8xf32> -> vector<8x8xf32>
    %cst_170 = arith.constant dense<0.000000e+00> : vector<8x32xf32>
    %231 = tpu.matmul %230, %214, %cst_170 {dimension_numbers = #tpu.dot_dimension_numbers<[1], [0], [0], [1], [0, 0, 1, 1], [], []>} : vector<8x8xf32>, vector<8x32xf32>, vector<8x32xf32> -> vector<8x32xf32>
    %232 = arith.addf %173, %231 : vector<8x32xf32>
    %233 = vector.extract_strided_slice %198 {offsets = [8, 0], sizes = [8, 8], strides = [1, 1]} : vector<16x8xf32> to vector<8x8xf32>
    %234 = vector.extract_strided_slice %205 {offsets = [16, 0], sizes = [16, 8], strides = [1, 1]} : vector<32x8xf32> to vector<16x8xf32>
    %235 = vector.extract_strided_slice %212 {offsets = [16, 0], sizes = [16, 8], strides = [1, 1]} : vector<32x8xf32> to vector<16x8xf32>
    %cst_171 = arith.constant dense<0.000000e+00> : vector<8x16xf32>
    %236 = tpu.matmul %233, %234, %cst_171 {dimension_numbers = #tpu.dot_dimension_numbers<[1], [1], [0], [0], [0, 0, 1, 0], [], []>} : vector<8x8xf32>, vector<16x8xf32>, vector<8x16xf32> -> vector<8x16xf32>
    %cst_172 = arith.constant dense<0xFF800000> : vector<8xf32>
    %237 = vector.multi_reduction <maximumf>, %236, %cst_172 [1] : vector<8x16xf32> to vector<8xf32>
    %238 = vector.shape_cast %237 : vector<8xf32> to vector<8x1xf32>
    %239 = vector.broadcast %238 : vector<8x1xf32> to vector<8x16xf32>
    %240 = arith.subf %236, %239 : vector<8x16xf32>
    %241 = math.exp %240 : vector<8x16xf32>
    %cst_173 = arith.constant dense<0.000000e+00> : vector<8xf32>
    %242 = vector.multi_reduction <add>, %241, %cst_173 [1] : vector<8x16xf32> to vector<8xf32>
    %243 = vector.shape_cast %242 : vector<8xf32> to vector<8x1xf32>
    %cst_174 = arith.constant 1.000000e+00 : f32
    %244 = vector.broadcast %cst_174 : f32 to vector<8x1xf32>
    %245 = arith.divf %244, %243 : vector<8x1xf32>
    %246 = vector.broadcast %245 : vector<8x1xf32> to vector<8x16xf32>
    %247 = arith.mulf %241, %246 : vector<8x16xf32>
    %cst_175 = arith.constant dense<0.000000e+00> : vector<8x8xf32>
    %248 = tpu.matmul %247, %235, %cst_175 {dimension_numbers = #tpu.dot_dimension_numbers<[1], [0], [0], [1], [0, 0, 1, 1], [], []>} : vector<8x16xf32>, vector<16x8xf32>, vector<8x8xf32> -> vector<8x8xf32>
    %cst_176 = arith.constant dense<0.000000e+00> : vector<8x32xf32>
    %249 = tpu.matmul %248, %214, %cst_176 {dimension_numbers = #tpu.dot_dimension_numbers<[1], [0], [0], [1], [0, 0, 1, 1], [], []>} : vector<8x8xf32>, vector<8x32xf32>, vector<8x32xf32> -> vector<8x32xf32>
    %250 = arith.addf %191, %249 : vector<8x32xf32>
    %cst_177 = arith.constant dense<0.000000e+00> : vector<8xf32>
    %251 = vector.multi_reduction <add>, %232, %cst_177 [1] : vector<8x32xf32> to vector<8xf32>
    %252 = vector.shape_cast %251 : vector<8xf32> to vector<8x1xf32>
    %cst_178 = arith.constant 3.200000e+01 : f32
    %253 = vector.broadcast %cst_178 : f32 to vector<8x1xf32>
    %254 = arith.divf %252, %253 : vector<8x1xf32>
    %255 = vector.broadcast %254 : vector<8x1xf32> to vector<8x32xf32>
    %256 = arith.subf %232, %255 : vector<8x32xf32>
    %257 = arith.mulf %256, %256 : vector<8x32xf32>
    %cst_179 = arith.constant dense<0.000000e+00> : vector<8xf32>
    %258 = vector.multi_reduction <add>, %257, %cst_179 [1] : vector<8x32xf32> to vector<8xf32>
    %259 = vector.shape_cast %258 : vector<8xf32> to vector<8x1xf32>
    %cst_180 = arith.constant 3.200000e+01 : f32
    %260 = vector.broadcast %cst_180 : f32 to vector<8x1xf32>
    %261 = arith.divf %259, %260 : vector<8x1xf32>
    %262 = vector.broadcast %254 : vector<8x1xf32> to vector<8x32xf32>
    %263 = arith.subf %232, %262 : vector<8x32xf32>
    %cst_181 = arith.constant 9.99999974E-6 : f32
    %264 = vector.broadcast %cst_181 : f32 to vector<8x1xf32>
    %265 = arith.addf %261, %264 : vector<8x1xf32>
    %266 = math.rsqrt %265 : vector<8x1xf32>
    %267 = vector.broadcast %266 : vector<8x1xf32> to vector<8x32xf32>
    %268 = arith.mulf %263, %267 : vector<8x32xf32>
    %269 = vector.broadcast %1 : vector<1x32xf32> to vector<8x32xf32>
    %270 = arith.mulf %268, %269 : vector<8x32xf32>
    %271 = vector.broadcast %2 : vector<1x32xf32> to vector<8x32xf32>
    %272 = arith.addf %270, %271 : vector<8x32xf32>
    %c0_182 = arith.constant 0 : index
    %c0_183 = arith.constant 0 : index
    %c0_184 = arith.constant 0 : index
    %273 = vector.load %arg8[%c0_182, %c0_183, %c0_184] : memref<2x8x32xf32, #tpu.memory_space<vmem>>, vector<1x8x32xf32>
    %274 = vector.shape_cast %273 : vector<1x8x32xf32> to vector<8x32xf32>
    %275 = vector.shape_cast %272 : vector<8x32xf32> to vector<1x8x32xf32>
    tpu.vector_store %arg8[%c0_182, %c0_183, %c0_184], %275 {strides = array<i32>} : memref<2x8x32xf32, #tpu.memory_space<vmem>>, vector<1x8x32xf32>,
    %cst_185 = arith.constant dense<0.000000e+00> : vector<8xf32>
    %276 = vector.multi_reduction <add>, %250, %cst_185 [1] : vector<8x32xf32> to vector<8xf32>
    %277 = vector.shape_cast %276 : vector<8xf32> to vector<8x1xf32>
    %cst_186 = arith.constant 3.200000e+01 : f32
    %278 = vector.broadcast %cst_186 : f32 to vector<8x1xf32>
    %279 = arith.divf %277, %278 : vector<8x1xf32>
    %280 = vector.broadcast %279 : vector<8x1xf32> to vector<8x32xf32>
    %281 = arith.subf %250, %280 : vector<8x32xf32>
    %282 = arith.mulf %281, %281 : vector<8x32xf32>
    %cst_187 = arith.constant dense<0.000000e+00> : vector<8xf32>
    %283 = vector.multi_reduction <add>, %282, %cst_187 [1] : vector<8x32xf32> to vector<8xf32>
    %284 = vector.shape_cast %283 : vector<8xf32> to vector<8x1xf32>
    %cst_188 = arith.constant 3.200000e+01 : f32
    %285 = vector.broadcast %cst_188 : f32 to vector<8x1xf32>
    %286 = arith.divf %284, %285 : vector<8x1xf32>
    %287 = vector.broadcast %279 : vector<8x1xf32> to vector<8x32xf32>
    %288 = arith.subf %250, %287 : vector<8x32xf32>
    %cst_189 = arith.constant 9.99999974E-6 : f32
    %289 = vector.broadcast %cst_189 : f32 to vector<8x1xf32>
    %290 = arith.addf %286, %289 : vector<8x1xf32>
    %291 = math.rsqrt %290 : vector<8x1xf32>
    %292 = vector.broadcast %291 : vector<8x1xf32> to vector<8x32xf32>
    %293 = arith.mulf %288, %292 : vector<8x32xf32>
    %294 = vector.broadcast %1 : vector<1x32xf32> to vector<8x32xf32>
    %295 = arith.mulf %293, %294 : vector<8x32xf32>
    %296 = vector.broadcast %2 : vector<1x32xf32> to vector<8x32xf32>
    %297 = arith.addf %295, %296 : vector<8x32xf32>
    %c1_190 = arith.constant 1 : index
    %c0_191 = arith.constant 0 : index
    %c0_192 = arith.constant 0 : index
    %298 = vector.load %arg8[%c1_190, %c0_191, %c0_192] : memref<2x8x32xf32, #tpu.memory_space<vmem>>, vector<1x8x32xf32>
    %299 = vector.shape_cast %298 : vector<1x8x32xf32> to vector<8x32xf32>
    %300 = vector.shape_cast %297 : vector<8x32xf32> to vector<1x8x32xf32>
    tpu.vector_store %arg8[%c1_190, %c0_191, %c0_192], %300 {strides = array<i32>} : memref<2x8x32xf32, #tpu.memory_space<vmem>>, vector<1x8x32xf32>,
    return
  }
}

</mosaic_0001>

<llo_original>
// kernel: tpu_custom_call.1
$region0: #{tpu_custom_call.1}
  #allocation0 [shape = 'u32[]', space=smem, size = 0x4, offset = 0x4, fixed_abs, tag = 'smem constant byte address 0x4 - core index']
  #allocation1 [shape = 'u32[144,128]{1,0:T(1,128)}', space=vmem, size = 0x12000, scoped, tag = 'internal scratch']
  %s0 = inlined_call_operand.vmem [shape: f32[16,32], index: 0, kind: input, shape index: {}]
  %s1 = inlined_call_operand.vmem [shape: f32[16,32], index: 1, kind: input, shape index: {}]
  %s2 = inlined_call_operand.vmem [shape: f32[32,32], index: 2, kind: input, shape index: {}]
  %s3 = inlined_call_operand.vmem [shape: f32[32,32], index: 3, kind: input, shape index: {}]
  %s4 = inlined_call_operand.vmem [shape: f32[3,4,32,8], index: 4, kind: input, shape index: {}]
  %s5 = inlined_call_operand.vmem [shape: f32[4,8,32], index: 5, kind: input, shape index: {}]
  %s6 = inlined_call_operand.vmem [shape: f32[3,4,1,8], index: 6, kind: input, shape index: {}]
  %s7 = inlined_call_operand.vmem [shape: f32[3,32], index: 7, kind: input, shape index: {}]
  %s8 = inlined_call_operand.hbm [shape: f32[2,8,32], index: 8, kind: output, shape index: {}]
  %s9 = sld [smem:[#allocation0]]
  $region42: #{tpu_custom_call.1} parent=0
    _
  %s11 = ssub.s32 1, %s9
  %s12 = scalar_select 0, %s11, %s9
  $region1: #{tpu_custom_call.1} parent=0
    #allocation2 [shape = 'u8[8192]{0}', space=vmem, size = 0x2000, scoped, tag = 'output window, operand 0, single buffered']
    #allocation3 [shape = 's32[1]{0}', space=sflag, size = 0x4, scoped, tag = 'scoped memory for tpu_custom_call.1']
    %13 = vsyncpa [#allocation3], 0
    // Predicated region
    $region2: #{tpu_custom_call.1} parent=1 // pred_check
      _
    $region3: #{tpu_custom_call.1} parent=1 // pred_check_branch
      %15 = sbr.rel (0) target = $region5
    $region4: #{tpu_custom_call.1} parent=1 // pred_region
      _
    $region5: #{tpu_custom_call.1} parent=1 // pred_fallthru
      _
    // Predicated region
    $region6: #{tpu_custom_call.1} parent=1 // pred_check
      _
    $region7: #{tpu_custom_call.1} parent=1 // pred_check_branch
      %17 = sbr.rel (0) target = $region9
    $region8: #{tpu_custom_call.1} parent=1 // pred_region
      _
    $region9: #{tpu_custom_call.1} parent=1 // pred_fallthru
      _
    // Predicated region
    $region10: #{tpu_custom_call.1} parent=1 // pred_check
      _
    $region11: #{tpu_custom_call.1} parent=1 // pred_check_branch
      %19 = sbr.rel (0) target = $region13
    $region12: #{tpu_custom_call.1} parent=1 // pred_region
      _
    $region13: #{tpu_custom_call.1} parent=1 // pred_fallthru
      _
    // Predicated region
    $region14: #{tpu_custom_call.1} parent=1 // pred_check
      _
    $region15: #{tpu_custom_call.1} parent=1 // pred_check_branch
      %21 = sbr.rel (0) target = $region17
    $region16: #{tpu_custom_call.1} parent=1 // pred_region
      _
    $region17: #{tpu_custom_call.1} parent=1 // pred_fallthru
      _
    // Predicated region
    $region18: #{tpu_custom_call.1} parent=1 // pred_check
      _
    $region19: #{tpu_custom_call.1} parent=1 // pred_check_branch
      %23 = sbr.rel (0) target = $region21
    $region20: #{tpu_custom_call.1} parent=1 // pred_region
      _
    $region21: #{tpu_custom_call.1} parent=1 // pred_fallthru
      _
    // Predicated region
    $region22: #{tpu_custom_call.1} parent=1 // pred_check
      _
    $region23: #{tpu_custom_call.1} parent=1 // pred_check_branch
      %25 = sbr.rel (0) target = $region25
    $region24: #{tpu_custom_call.1} parent=1 // pred_region
      _
    $region25: #{tpu_custom_call.1} parent=1 // pred_fallthru
      _
    // Predicated region
    $region26: #{tpu_custom_call.1} parent=1 // pred_check
      _
    $region27: #{tpu_custom_call.1} parent=1 // pred_check_branch
      %27 = sbr.rel (0) target = $region29
    $region28: #{tpu_custom_call.1} parent=1 // pred_region
      _
    $region29: #{tpu_custom_call.1} parent=1 // pred_fallthru
      _
    // Predicated region
    $region30: #{tpu_custom_call.1} parent=1 // pred_check
      _
    $region31: #{tpu_custom_call.1} parent=1 // pred_check_branch
      %29 = sbr.rel (0) target = $region33
    $region32: #{tpu_custom_call.1} parent=1 // pred_region
      _
    $region33: #{tpu_custom_call.1} parent=1 // pred_fallthru
      _
    %v30 = vld [vmem:[%s7] sm:$0x1]
    %v31 = vld [vmem:[%s7 + $0x1] sm:$0x1]
    %v32 = vld [vmem:[%s7 + $0x2] sm:$0x1]
    %v33 = vld [vmem:[%s0] sm:$0xff]
    %v34 = vld [vmem:[%s0 + $0x8] sm:$0xff]
    %v35 = vld [vmem:[%s2] sm:$0xff]
    %v36 = vld [vmem:[%s2 + $0x8] sm:$0xff]
    %v37 = vld [vmem:[%s2 + $0x10] sm:$0xff]
    %v38 = vld [vmem:[%s2 + $0x18] sm:$0xff]
    %v39 = vld [vmem:[%s1] sm:$0xff]
    %v40 = vld [vmem:[%s1 + $0x8] sm:$0xff]
    %v41 = vadd.f32 %v33, %v39
    %v42 = vadd.f32 %v34, %v40
    %v43 = vld [vmem:[%s3] sm:$0xff]
    %v44 = vld [vmem:[%s3 + $0x8] sm:$0xff]
    %v45 = vld [vmem:[%s3 + $0x10] sm:$0xff]
    %v46 = vld [vmem:[%s3 + $0x18] sm:$0xff]
    %v47 = vadd.f32 %v35, %v43
    %v48 = vadd.f32 %v36, %v44
    %v49 = vadd.f32 %v37, %v45
    %v50 = vadd.f32 %v38, %v46
    %v51 = vlaneseq
    %v52 = vshrl.u32 %v51, 7
    %v53 = vsub.s32 0, %v52
    %v54 = vrot.slane %v30, %v53
    %v55 = vadd.f32 %v33, %v54
    %v56 = vadd.f32 %v34, %v54
    %v57 = vld [vmem:[%s4] sm:$0xff]
    %v58 = vld [vmem:[%s4 + $0x8] sm:$0xff]
    %v59 = vld [vmem:[%s4 + $0x10] sm:$0xff]
    %v60 = vld [vmem:[%s4 + $0x18] sm:$0xff]
    %v61 = vld [vmem:[%s6] sm:$0x1]
    %v63 = vlaneseq
    %v64 = vshrl.u32 %v63, 7
    %v65 = vsub.s32 0, %v64
    %v66 = vrot.slane %v61, %v65
    %vm68 = vcmask 261120
    %v70 = vsel %vm68, %v41, 0
    %v73 = vsel %vm68, %v42, 0
    %75 = vmatprep.subr.mxu0 0.0
    %76 = vmatpush1.msra.mxu0 %v57
    %77 = vmatprep.subr.mxu0 0.0
    %78 = vmatpush1.msra.mxu0 %v58
    %79 = vmatprep.subr.mxu0 0.0
    %80 = vmatpush1.msra.mxu0 %v59
    %81 = vmatprep.subr.mxu0 0.0
    %82 = vmatpush1.msra.mxu0 %v60
    %83 = vmatprep.subr.mxu0 0.0
    %84 = vmatpush1.msra.mxu0 0.0
    %85 = vmatprep.subr.mxu0 0.0
    %86 = vmatpush1.msra.mxu0 0.0
    %87 = vmatprep.subr.mxu0 0.0
    %88 = vmatpush1.msra.mxu0 0.0
    %89 = vmatprep.subr.mxu0 0.0
    %90 = vmatpush1.msra.mxu0 0.0
    %91 = vmatprep.subr.mxu0 0.0
    %92 = vmatpush1.msra.mxu0 0.0
    %93 = vmatprep.subr.mxu0 0.0
    %94 = vmatpush1.msra.mxu0 0.0
    %95 = vmatprep.subr.mxu0 0.0
    %96 = vmatpush1.msra.mxu0 0.0
    %97 = vmatprep.subr.mxu0 0.0
    %98 = vmatpush1.msra.mxu0 0.0
    %99 = vmatprep.subr.mxu0 0.0
    %100 = vmatpush1.msra.mxu0 0.0
    %101 = vmatprep.subr.mxu0 0.0
    %102 = vmatpush1.msra.mxu0 0.0
    %103 = vmatprep.subr.mxu0 0.0
    %104 = vmatpush1.msra.mxu0 0.0
    %105 = vmatprep.subr.mxu0 0.0
    %106 = vmatpush1.msra.mxu0 0.0
    %107 = vmatprep.subr.mxu0 0.0
    %108 = vmatpush1.msra.mxu0 0.0
    %109 = vmatprep.subr.mxu0 0.0
    %110 = vmatpush1.msra.mxu0 0.0
    %111 = vmatprep.subr.mxu0 0.0
    %112 = vmatpush1.msra.mxu0 0.0
    %113 = vmatprep.subr.mxu0 0.0
    %114 = vmatpush1.msra.mxu0 0.0
    %115 = vmatprep.subr.mxu0 0.0
    %116 = vmatpush1.msra.mxu0 0.0
    %117 = vmatprep.subr.mxu0 0.0
    %118 = vmatpush1.msra.mxu0 0.0
    %119 = vmatprep.subr.mxu0 0.0
    %120 = vmatpush1.msra.mxu0 0.0
    %121 = vmatprep.subr.mxu0 0.0
    %122 = vmatpush1.msra.mxu0 0.0
    %123 = vmatprep.subr.mxu0 0.0
    %124 = vmatpush1.msra.mxu0 0.0
    %125 = vmatprep.subr.mxu0 0.0
    %126 = vmatpush1.msra.mxu0 0.0
    %127 = vmatprep.subr.mxu0 0.0
    %128 = vmatpush1.msra.mxu0 0.0
    %129 = vmatprep.subr.mxu0 0.0
    %130 = vmatpush1.msra.mxu0 0.0
    %131 = vmatprep.subr.mxu0 0.0
    %132 = vmatpush1.msra.mxu0 0.0
    %133 = vmatprep.subr.mxu0 0.0
    %134 = vmatpush1.msra.mxu0 0.0
    %135 = vmatprep.subr.mxu0 0.0
    %136 = vmatpush1.msra.mxu0 0.0
    %137 = vmatprep.subr.mxu0 0.0
    %138 = vmatpush1.msra.mxu0 0.0
    %139 = vmatprep.mubr.f32.mxu0 0.0
    %140 = vmatmul.mubr.f32.gmra.mrb[0].mxu0 %v70
    %v141 = vpop.f32.mrb[0].mxu0
    %v142 = vadd.f32 %v66, %v141
    %v143 = vpop.f32.mrb[0].mxu0
    %144 = vmatprep.mubr.f32.mxu0 0.0
    %145 = vmatmul.mubr.f32.gmra.mrb[0].mxu0 %v73
    %v146 = vpop.f32.mrb[0].mxu0
    %v147 = vadd.f32 %v66, %v146
    %v148 = vpop.f32.mrb[0].mxu0
    %149 = vdwg.mxu0
    %s150 = scalar_lea.vmem %s4, 128
    %v151 = vld [vmem:[%s150] sm:$0xff]
    %v152 = vld [vmem:[%s150 + $0x8] sm:$0xff]
    %v153 = vld [vmem:[%s150 + $0x10] sm:$0xff]
    %v154 = vld [vmem:[%s150 + $0x18] sm:$0xff]
    %s155 = scalar_lea.vmem %s6, 4
    %v156 = vld [vmem:[%s155] sm:$0x1]
    %v158 = vlaneseq
    %v159 = vshrl.u32 %v158, 7
    %v160 = vsub.s32 0, %v159
    %v161 = vrot.slane %v156, %v160
    %v164 = vsel %vm68, %v47, 0
    %v167 = vsel %vm68, %v48, 0
    %v170 = vsel %vm68, %v49, 0
    %v173 = vsel %vm68, %v50, 0
    %175 = vmatprep.subr.mxu0 0.0
    %176 = vmatpush1.msra.mxu0 %v151
    %177 = vmatprep.subr.mxu0 0.0
    %178 = vmatpush1.msra.mxu0 %v152
    %179 = vmatprep.subr.mxu0 0.0
    %180 = vmatpush1.msra.mxu0 %v153
    %181 = vmatprep.subr.mxu0 0.0
    %182 = vmatpush1.msra.mxu0 %v154
    %183 = vmatprep.subr.mxu0 0.0
    %184 = vmatpush1.msra.mxu0 0.0
    %185 = vmatprep.subr.mxu0 0.0
    %186 = vmatpush1.msra.mxu0 0.0
    %187 = vmatprep.subr.mxu0 0.0
    %188 = vmatpush1.msra.mxu0 0.0
    %189 = vmatprep.subr.mxu0 0.0
    %190 = vmatpush1.msra.mxu0 0.0
    %191 = vmatprep.subr.mxu0 0.0
    %192 = vmatpush1.msra.mxu0 0.0
    %193 = vmatprep.subr.mxu0 0.0
    %194 = vmatpush1.msra.mxu0 0.0
    %195 = vmatprep.subr.mxu0 0.0
    %196 = vmatpush1.msra.mxu0 0.0
    %197 = vmatprep.subr.mxu0 0.0
    %198 = vmatpush1.msra.mxu0 0.0
    %199 = vmatprep.subr.mxu0 0.0
    %200 = vmatpush1.msra.mxu0 0.0
    %201 = vmatprep.subr.mxu0 0.0
    %202 = vmatpush1.msra.mxu0 0.0
    %203 = vmatprep.subr.mxu0 0.0
    %204 = vmatpush1.msra.mxu0 0.0
    %205 = vmatprep.subr.mxu0 0.0
    %206 = vmatpush1.msra.mxu0 0.0
    %207 = vmatprep.subr.mxu0 0.0
    %208 = vmatpush1.msra.mxu0 0.0
    %209 = vmatprep.subr.mxu0 0.0
    %210 = vmatpush1.msra.mxu0 0.0
    %211 = vmatprep.subr.mxu0 0.0
    %212 = vmatpush1.msra.mxu0 0.0
    %213 = vmatprep.subr.mxu0 0.0
    %214 = vmatpush1.msra.mxu0 0.0
    %215 = vmatprep.subr.mxu0 0.0
    %216 = vmatpush1.msra.mxu0 0.0
    %217 = vmatprep.subr.mxu0 0.0
    %218 = vmatpush1.msra.mxu0 0.0
    %219 = vmatprep.subr.mxu0 0.0
    %220 = vmatpush1.msra.mxu0 0.0
    %221 = vmatprep.subr.mxu0 0.0
    %222 = vmatpush1.msra.mxu0 0.0
    %223 = vmatprep.subr.mxu0 0.0
    %224 = vmatpush1.msra.mxu0 0.0
    %225 = vmatprep.subr.mxu0 0.0
    %226 = vmatpush1.msra.mxu0 0.0
    %227 = vmatprep.subr.mxu0 0.0
    %228 = vmatpush1.msra.mxu0 0.0
    %229 = vmatprep.subr.mxu0 0.0
    %230 = vmatpush1.msra.mxu0 0.0
    %231 = vmatprep.subr.mxu0 0.0
    %232 = vmatpush1.msra.mxu0 0.0
    %233 = vmatprep.subr.mxu0 0.0
    %234 = vmatpush1.msra.mxu0 0.0
    %235 = vmatprep.subr.mxu0 0.0
    %236 = vmatpush1.msra.mxu0 0.0
    %237 = vmatprep.subr.mxu0 0.0
    %238 = vmatpush1.msra.mxu0 0.0
    %239 = vmatprep.mubr.f32.mxu0 0.0
    %240 = vmatmul.mubr.f32.gmra.mrb[0].mxu0 %v164
    %v241 = vpop.f32.mrb[0].mxu0
    %v242 = vadd.f32 %v161, %v241
    %v243 = vpop.f32.mrb[0].mxu0
    %244 = vmatprep.mubr.f32.mxu0 0.0
    %245 = vmatmul.mubr.f32.gmra.mrb[0].mxu0 %v167
    %v246 = vpop.f32.mrb[0].mxu0
    %v247 = vadd.f32 %v161, %v246
    %v248 = vpop.f32.mrb[0].mxu0
    %249 = vmatprep.mubr.f32.mxu0 0.0
    %250 = vmatmul.mubr.f32.gmra.mrb[0].mxu0 %v170
    %v251 = vpop.f32.mrb[0].mxu0
    %v252 = vadd.f32 %v161, %v251
    %v253 = vpop.f32.mrb[0].mxu0
    %254 = vmatprep.mubr.f32.mxu0 0.0
    %255 = vmatmul.mubr.f32.gmra.mrb[0].mxu0 %v173
    %v256 = vpop.f32.mrb[0].mxu0
    %v257 = vadd.f32 %v161, %v256
    %v258 = vpop.f32.mrb[0].mxu0
    %259 = vdwg.mxu0
    %s260 = scalar_lea.vmem %s4, 256
    %v261 = vld [vmem:[%s260] sm:$0xff]
    %v262 = vld [vmem:[%s260 + $0x8] sm:$0xff]
    %v263 = vld [vmem:[%s260 + $0x10] sm:$0xff]
    %v264 = vld [vmem:[%s260 + $0x18] sm:$0xff]
    %s265 = scalar_lea.vmem %s6, 8
    %v266 = vld [vmem:[%s265] sm:$0x1]
    %v268 = vlaneseq
    %v269 = vshrl.u32 %v268, 7
    %v270 = vsub.s32 0, %v269
    %v271 = vrot.slane %v266, %v270
    %v274 = vsel %vm68, %v35, 0
    %v277 = vsel %vm68, %v36, 0
    %v280 = vsel %vm68, %v37, 0
    %v283 = vsel %vm68, %v38, 0
    %285 = vmatprep.subr.mxu0 0.0
    %286 = vmatpush1.msra.mxu0 %v261
    %287 = vmatprep.subr.mxu0 0.0
    %288 = vmatpush1.msra.mxu0 %v262
    %289 = vmatprep.subr.mxu0 0.0
    %290 = vmatpush1.msra.mxu0 %v263
    %291 = vmatprep.subr.mxu0 0.0
    %292 = vmatpush1.msra.mxu0 %v264
    %293 = vmatprep.subr.mxu0 0.0
    %294 = vmatpush1.msra.mxu0 0.0
    %295 = vmatprep.subr.mxu0 0.0
    %296 = vmatpush1.msra.mxu0 0.0
    %297 = vmatprep.subr.mxu0 0.0
    %298 = vmatpush1.msra.mxu0 0.0
    %299 = vmatprep.subr.mxu0 0.0
    %300 = vmatpush1.msra.mxu0 0.0
    %301 = vmatprep.subr.mxu0 0.0
    %302 = vmatpush1.msra.mxu0 0.0
    %303 = vmatprep.subr.mxu0 0.0
    %304 = vmatpush1.msra.mxu0 0.0
    %305 = vmatprep.subr.mxu0 0.0
    %306 = vmatpush1.msra.mxu0 0.0
    %307 = vmatprep.subr.mxu0 0.0
    %308 = vmatpush1.msra.mxu0 0.0
    %309 = vmatprep.subr.mxu0 0.0
    %310 = vmatpush1.msra.mxu0 0.0
    %311 = vmatprep.subr.mxu0 0.0
    %312 = vmatpush1.msra.mxu0 0.0
    %313 = vmatprep.subr.mxu0 0.0
    %314 = vmatpush1.msra.mxu0 0.0
    %315 = vmatprep.subr.mxu0 0.0
    %316 = vmatpush1.msra.mxu0 0.0
    %317 = vmatprep.subr.mxu0 0.0
    %318 = vmatpush1.msra.mxu0 0.0
    %319 = vmatprep.subr.mxu0 0.0
    %320 = vmatpush1.msra.mxu0 0.0
    %321 = vmatprep.subr.mxu0 0.0
    %322 = vmatpush1.msra.mxu0 0.0
    %323 = vmatprep.subr.mxu0 0.0
    %324 = vmatpush1.msra.mxu0 0.0
    %325 = vmatprep.subr.mxu0 0.0
    %326 = vmatpush1.msra.mxu0 0.0
    %327 = vmatprep.subr.mxu0 0.0
    %328 = vmatpush1.msra.mxu0 0.0
    %329 = vmatprep.subr.mxu0 0.0
    %330 = vmatpush1.msra.mxu0 0.0
    %331 = vmatprep.subr.mxu0 0.0
    %332 = vmatpush1.msra.mxu0 0.0
    %333 = vmatprep.subr.mxu0 0.0
    %334 = vmatpush1.msra.mxu0 0.0
    %335 = vmatprep.subr.mxu0 0.0
    %336 = vmatpush1.msra.mxu0 0.0
    %337 = vmatprep.subr.mxu0 0.0
    %338 = vmatpush1.msra.mxu0 0.0
    %339 = vmatprep.subr.mxu0 0.0
    %340 = vmatpush1.msra.mxu0 0.0
    %341 = vmatprep.subr.mxu0 0.0
    %342 = vmatpush1.msra.mxu0 0.0
    %343 = vmatprep.subr.mxu0 0.0
    %344 = vmatpush1.msra.mxu0 0.0
    %345 = vmatprep.subr.mxu0 0.0
    %346 = vmatpush1.msra.mxu0 0.0
    %347 = vmatprep.subr.mxu0 0.0
    %348 = vmatpush1.msra.mxu0 0.0
    %349 = vmatprep.mubr.f32.mxu0 0.0
    %350 = vmatmul.mubr.f32.gmra.mrb[0].mxu0 %v274
    %v351 = vpop.f32.mrb[0].mxu0
    %v352 = vadd.f32 %v271, %v351
    %v353 = vpop.f32.mrb[0].mxu0
    %354 = vmatprep.mubr.f32.mxu0 0.0
    %355 = vmatmul.mubr.f32.gmra.mrb[0].mxu0 %v277
    %v356 = vpop.f32.mrb[0].mxu0
    %v357 = vadd.f32 %v271, %v356
    %v358 = vpop.f32.mrb[0].mxu0
    %359 = vmatprep.mubr.f32.mxu0 0.0
    %360 = vmatmul.mubr.f32.gmra.mrb[0].mxu0 %v280
    %v361 = vpop.f32.mrb[0].mxu0
    %v362 = vadd.f32 %v271, %v361
    %v363 = vpop.f32.mrb[0].mxu0
    %364 = vmatprep.mubr.f32.mxu0 0.0
    %365 = vmatmul.mubr.f32.gmra.mrb[0].mxu0 %v283
    %v366 = vpop.f32.mrb[0].mxu0
    %v367 = vadd.f32 %v271, %v366
    %v368 = vpop.f32.mrb[0].mxu0
    %369 = vdwg.mxu0
    %v370 = vld [vmem:[%s5] sm:$0xff]
    %vm371 = vcmask 64512
    %v373 = vsel %vm371, %v142, 0
    %v376 = vsel %vm371, %v242, 0
    %v379 = vsel %vm371, %v247, 0
    %381 = vmatprep.subr.mxu0 0.0
    %382 = vmatpush1.xpose.msra.mxu0 %v376
    %383 = vmatprep.subr.mxu0 0.0
    %384 = vmatpush1.xpose.msra.mxu0 %v379
    %385 = vmatprep.subr.mxu0 0.0
    %386 = vmatpush1.xpose.msra.mxu0 0.0
    %387 = vmatprep.subr.mxu0 0.0
    %388 = vmatpush1.xpose.msra.mxu0 0.0
    %389 = vmatprep.subr.mxu0 0.0
    %390 = vmatpush1.xpose.msra.mxu0 0.0
    %391 = vmatprep.subr.mxu0 0.0
    %392 = vmatpush1.xpose.msra.mxu0 0.0
    %393 = vmatprep.subr.mxu0 0.0
    %394 = vmatpush1.xpose.msra.mxu0 0.0
    %395 = vmatprep.subr.mxu0 0.0
    %396 = vmatpush1.xpose.msra.mxu0 0.0
    %397 = vmatprep.subr.mxu0 0.0
    %398 = vmatpush1.xpose.msra.mxu0 0.0
    %399 = vmatprep.subr.mxu0 0.0
    %400 = vmatpush1.xpose.msra.mxu0 0.0
    %401 = vmatprep.subr.mxu0 0.0
    %402 = vmatpush1.xpose.msra.mxu0 0.0
    %403 = vmatprep.subr.mxu0 0.0
    %404 = vmatpush1.xpose.msra.mxu0 0.0
    %405 = vmatprep.subr.mxu0 0.0
    %406 = vmatpush1.xpose.msra.mxu0 0.0
    %407 = vmatprep.subr.mxu0 0.0
    %408 = vmatpush1.xpose.msra.mxu0 0.0
    %409 = vmatprep.subr.mxu0 0.0
    %410 = vmatpush1.xpose.msra.mxu0 0.0
    %411 = vmatprep.subr.mxu0 0.0
    %412 = vmatpush1.xpose.msra.mxu0 0.0
    %413 = vmatprep.subr.mxu0 0.0
    %414 = vmatpush1.xpose.msra.mxu0 0.0
    %415 = vmatprep.subr.mxu0 0.0
    %416 = vmatpush1.xpose.msra.mxu0 0.0
    %417 = vmatprep.subr.mxu0 0.0
    %418 = vmatpush1.xpose.msra.mxu0 0.0
    %419 = vmatprep.subr.mxu0 0.0
    %420 = vmatpush1.xpose.msra.mxu0 0.0
    %421 = vmatprep.subr.mxu0 0.0
    %422 = vmatpush1.xpose.msra.mxu0 0.0
    %423 = vmatprep.subr.mxu0 0.0
    %424 = vmatpush1.xpose.msra.mxu0 0.0
    %425 = vmatprep.subr.mxu0 0.0
    %426 = vmatpush1.xpose.msra.mxu0 0.0
    %427 = vmatprep.subr.mxu0 0.0
    %428 = vmatpush1.xpose.msra.mxu0 0.0
    %429 = vmatprep.subr.mxu0 0.0
    %430 = vmatpush1.xpose.msra.mxu0 0.0
    %431 = vmatprep.subr.mxu0 0.0
    %432 = vmatpush1.xpose.msra.mxu0 0.0
    %433 = vmatprep.subr.mxu0 0.0
    %434 = vmatpush1.xpose.msra.mxu0 0.0
    %435 = vmatprep.subr.mxu0 0.0
    %436 = vmatpush1.xpose.msra.mxu0 0.0
    %437 = vmatprep.subr.mxu0 0.0
    %438 = vmatpush1.xpose.msra.mxu0 0.0
    %439 = vmatprep.subr.mxu0 0.0
    %440 = vmatpush1.xpose.msra.mxu0 0.0
    %441 = vmatprep.subr.mxu0 0.0
    %442 = vmatpush1.xpose.msra.mxu0 0.0
    %443 = vmatprep.subr.mxu0 0.0
    %444 = vmatpush1.xpose.msra.mxu0 0.0
    %445 = vmatprep.mubr.f32.mxu0 0.0
    %446 = vmatmul.mubr.f32.gmra.mrb[0].mxu0 %v373
    %v447 = vpop.f32.mrb[0].mxu0
    %v448 = vadd.f32 0.0, %v447
    %v449 = vpop.f32.mrb[0].mxu0
    %450 = vdwg.mxu0
    %vm451 = vcmask 130048
    %v452 = vsel %vm451, %v448, -inf
    %453 = vmax.xlane.f32.xlu0 %v452
    %v454 = vpop.xlane.xlu0 %453
    %v455 = vsub.f32 %v448, %v454
    %v456 = vmul.f32 %v455, 1.442695
    %v457 = vpow.pop %v456
    %v458 = vsel %vm451, %v457, 0.0
    %459 = vadd.xlane.f32.xlu0 %v458
    %v460 = vpop.xlane.xlu0 %459
    %v461 = vrcp.pop %v460
    %v462 = vmul.f32 1.0, %v461
    %v463 = vmul.f32 %v457, %v462
    %v465 = vsel %vm451, %v463, 0
    %467 = vmatprep.subr.mxu0 0.0
    %468 = vmatpush1.msra.mxu0 %v352
    %469 = vmatprep.subr.mxu0 0.0
    %470 = vmatpush1.msra.mxu0 %v357
    %471 = vmatprep.subr.mxu0 0.0
    %472 = vmatpush1.msra.mxu0 0.0
    %473 = vmatprep.subr.mxu0 0.0
    %474 = vmatpush1.msra.mxu0 0.0
    %475 = vmatprep.subr.mxu0 0.0
    %476 = vmatpush1.msra.mxu0 0.0
    %477 = vmatprep.subr.mxu0 0.0
    %478 = vmatpush1.msra.mxu0 0.0
    %479 = vmatprep.subr.mxu0 0.0
    %480 = vmatpush1.msra.mxu0 0.0
    %481 = vmatprep.subr.mxu0 0.0
    %482 = vmatpush1.msra.mxu0 0.0
    %483 = vmatprep.subr.mxu0 0.0
    %484 = vmatpush1.msra.mxu0 0.0
    %485 = vmatprep.subr.mxu0 0.0
    %486 = vmatpush1.msra.mxu0 0.0
    %487 = vmatprep.subr.mxu0 0.0
    %488 = vmatpush1.msra.mxu0 0.0
    %489 = vmatprep.subr.mxu0 0.0
    %490 = vmatpush1.msra.mxu0 0.0
    %491 = vmatprep.subr.mxu0 0.0
    %492 = vmatpush1.msra.mxu0 0.0
    %493 = vmatprep.subr.mxu0 0.0
    %494 = vmatpush1.msra.mxu0 0.0
    %495 = vmatprep.subr.mxu0 0.0
    %496 = vmatpush1.msra.mxu0 0.0
    %497 = vmatprep.subr.mxu0 0.0
    %498 = vmatpush1.msra.mxu0 0.0
    %499 = vmatprep.subr.mxu0 0.0
    %500 = vmatpush1.msra.mxu0 0.0
    %501 = vmatprep.subr.mxu0 0.0
    %502 = vmatpush1.msra.mxu0 0.0
    %503 = vmatprep.subr.mxu0 0.0
    %504 = vmatpush1.msra.mxu0 0.0
    %505 = vmatprep.subr.mxu0 0.0
    %506 = vmatpush1.msra.mxu0 0.0
    %507 = vmatprep.subr.mxu0 0.0
    %508 = vmatpush1.msra.mxu0 0.0
    %509 = vmatprep.subr.mxu0 0.0
    %510 = vmatpush1.msra.mxu0 0.0
    %511 = vmatprep.subr.mxu0 0.0
    %512 = vmatpush1.msra.mxu0 0.0
    %513 = vmatprep.subr.mxu0 0.0
    %514 = vmatpush1.msra.mxu0 0.0
    %515 = vmatprep.subr.mxu0 0.0
    %516 = vmatpush1.msra.mxu0 0.0
    %517 = vmatprep.subr.mxu0 0.0
    %518 = vmatpush1.msra.mxu0 0.0
    %519 = vmatprep.subr.mxu0 0.0
    %520 = vmatpush1.msra.mxu0 0.0
    %521 = vmatprep.subr.mxu0 0.0
    %522 = vmatpush1.msra.mxu0 0.0
    %523 = vmatprep.subr.mxu0 0.0
    %524 = vmatpush1.msra.mxu0 0.0
    %525 = vmatprep.subr.mxu0 0.0
    %526 = vmatpush1.msra.mxu0 0.0
    %527 = vmatprep.subr.mxu0 0.0
    %528 = vmatpush1.msra.mxu0 0.0
    %529 = vmatprep.subr.mxu0 0.0
    %530 = vmatpush1.msra.mxu0 0.0
    %531 = vmatprep.mubr.f32.mxu0 0.0
    %532 = vmatmul.mubr.f32.gmra.mrb[0].mxu0 %v465
    %v533 = vpop.f32.mrb[0].mxu0
    %v534 = vadd.f32 0.0, %v533
    %v535 = vpop.f32.mrb[0].mxu0
    %536 = vdwg.mxu0
    %v538 = vsel %vm371, %v534, 0
    %540 = vmatprep.subr.mxu0 0.0
    %541 = vmatpush1.msra.mxu0 %v370
    %542 = vmatprep.subr.mxu0 0.0
    %543 = vmatpush1.msra.mxu0 0.0
    %544 = vmatprep.subr.mxu0 0.0
    %545 = vmatpush1.msra.mxu0 0.0
    %546 = vmatprep.subr.mxu0 0.0
    %547 = vmatpush1.msra.mxu0 0.0
    %548 = vmatprep.subr.mxu0 0.0
    %549 = vmatpush1.msra.mxu0 0.0
    %550 = vmatprep.subr.mxu0 0.0
    %551 = vmatpush1.msra.mxu0 0.0
    %552 = vmatprep.subr.mxu0 0.0
    %553 = vmatpush1.msra.mxu0 0.0
    %554 = vmatprep.subr.mxu0 0.0
    %555 = vmatpush1.msra.mxu0 0.0
    %556 = vmatprep.subr.mxu0 0.0
    %557 = vmatpush1.msra.mxu0 0.0
    %558 = vmatprep.subr.mxu0 0.0
    %559 = vmatpush1.msra.mxu0 0.0
    %560 = vmatprep.subr.mxu0 0.0
    %561 = vmatpush1.msra.mxu0 0.0
    %562 = vmatprep.subr.mxu0 0.0
    %563 = vmatpush1.msra.mxu0 0.0
    %564 = vmatprep.subr.mxu0 0.0
    %565 = vmatpush1.msra.mxu0 0.0
    %566 = vmatprep.subr.mxu0 0.0
    %567 = vmatpush1.msra.mxu0 0.0
    %568 = vmatprep.subr.mxu0 0.0
    %569 = vmatpush1.msra.mxu0 0.0
    %570 = vmatprep.subr.mxu0 0.0
    %571 = vmatpush1.msra.mxu0 0.0
    %572 = vmatprep.subr.mxu0 0.0
    %573 = vmatpush1.msra.mxu0 0.0
    %574 = vmatprep.subr.mxu0 0.0
    %575 = vmatpush1.msra.mxu0 0.0
    %576 = vmatprep.subr.mxu0 0.0
    %577 = vmatpush1.msra.mxu0 0.0
    %578 = vmatprep.subr.mxu0 0.0
    %579 = vmatpush1.msra.mxu0 0.0
    %580 = vmatprep.subr.mxu0 0.0
    %581 = vmatpush1.msra.mxu0 0.0
    %582 = vmatprep.subr.mxu0 0.0
    %583 = vmatpush1.msra.mxu0 0.0
    %584 = vmatprep.subr.mxu0 0.0
    %585 = vmatpush1.msra.mxu0 0.0
    %586 = vmatprep.subr.mxu0 0.0
    %587 = vmatpush1.msra.mxu0 0.0
    %588 = vmatprep.subr.mxu0 0.0
    %589 = vmatpush1.msra.mxu0 0.0
    %590 = vmatprep.subr.mxu0 0.0
    %591 = vmatpush1.msra.mxu0 0.0
    %592 = vmatprep.subr.mxu0 0.0
    %593 = vmatpush1.msra.mxu0 0.0
    %594 = vmatprep.subr.mxu0 0.0
    %595 = vmatpush1.msra.mxu0 0.0
    %596 = vmatprep.subr.mxu0 0.0
    %597 = vmatpush1.msra.mxu0 0.0
    %598 = vmatprep.subr.mxu0 0.0
    %599 = vmatpush1.msra.mxu0 0.0
    %600 = vmatprep.subr.mxu0 0.0
    %601 = vmatpush1.msra.mxu0 0.0
    %602 = vmatprep.subr.mxu0 0.0
    %603 = vmatpush1.msra.mxu0 0.0
    %604 = vmatprep.mubr.f32.mxu0 0.0
    %605 = vmatmul.mubr.f32.gmra.mrb[0].mxu0 %v538
    %v606 = vpop.f32.mrb[0].mxu0
    %v607 = vadd.f32 0.0, %v606
    %v608 = vpop.f32.mrb[0].mxu0
    %609 = vdwg.mxu0
    %v610 = vadd.f32 %v55, %v607
    %v612 = vsel %vm371, %v147, 0
    %v615 = vsel %vm371, %v252, 0
    %v618 = vsel %vm371, %v257, 0
    %620 = vmatprep.subr.mxu0 0.0
    %621 = vmatpush1.xpose.msra.mxu0 %v615
    %622 = vmatprep.subr.mxu0 0.0
    %623 = vmatpush1.xpose.msra.mxu0 %v618
    %624 = vmatprep.subr.mxu0 0.0
    %625 = vmatpush1.xpose.msra.mxu0 0.0
    %626 = vmatprep.subr.mxu0 0.0
    %627 = vmatpush1.xpose.msra.mxu0 0.0
    %628 = vmatprep.subr.mxu0 0.0
    %629 = vmatpush1.xpose.msra.mxu0 0.0
    %630 = vmatprep.subr.mxu0 0.0
    %631 = vmatpush1.xpose.msra.mxu0 0.0
    %632 = vmatprep.subr.mxu0 0.0
    %633 = vmatpush1.xpose.msra.mxu0 0.0
    %634 = vmatprep.subr.mxu0 0.0
    %635 = vmatpush1.xpose.msra.mxu0 0.0
    %636 = vmatprep.subr.mxu0 0.0
    %637 = vmatpush1.xpose.msra.mxu0 0.0
    %638 = vmatprep.subr.mxu0 0.0
    %639 = vmatpush1.xpose.msra.mxu0 0.0
    %640 = vmatprep.subr.mxu0 0.0
    %641 = vmatpush1.xpose.msra.mxu0 0.0
    %642 = vmatprep.subr.mxu0 0.0
    %643 = vmatpush1.xpose.msra.mxu0 0.0
    %644 = vmatprep.subr.mxu0 0.0
    %645 = vmatpush1.xpose.msra.mxu0 0.0
    %646 = vmatprep.subr.mxu0 0.0
    %647 = vmatpush1.xpose.msra.mxu0 0.0
    %648 = vmatprep.subr.mxu0 0.0
    %649 = vmatpush1.xpose.msra.mxu0 0.0
    %650 = vmatprep.subr.mxu0 0.0
    %651 = vmatpush1.xpose.msra.mxu0 0.0
    %652 = vmatprep.subr.mxu0 0.0
    %653 = vmatpush1.xpose.msra.mxu0 0.0
    %654 = vmatprep.subr.mxu0 0.0
    %655 = vmatpush1.xpose.msra.mxu0 0.0
    %656 = vmatprep.subr.mxu0 0.0
    %657 = vmatpush1.xpose.msra.mxu0 0.0
    %658 = vmatprep.subr.mxu0 0.0
    %659 = vmatpush1.xpose.msra.mxu0 0.0
    %660 = vmatprep.subr.mxu0 0.0
    %661 = vmatpush1.xpose.msra.mxu0 0.0
    %662 = vmatprep.subr.mxu0 0.0
    %663 = vmatpush1.xpose.msra.mxu0 0.0
    %664 = vmatprep.subr.mxu0 0.0
    %665 = vmatpush1.xpose.msra.mxu0 0.0
    %666 = vmatprep.subr.mxu0 0.0
    %667 = vmatpush1.xpose.msra.mxu0 0.0
    %668 = vmatprep.subr.mxu0 0.0
    %669 = vmatpush1.xpose.msra.mxu0 0.0
    %670 = vmatprep.subr.mxu0 0.0
    %671 = vmatpush1.xpose.msra.mxu0 0.0
    %672 = vmatprep.subr.mxu0 0.0
    %673 = vmatpush1.xpose.msra.mxu0 0.0
    %674 = vmatprep.subr.mxu0 0.0
    %675 = vmatpush1.xpose.msra.mxu0 0.0
    %676 = vmatprep.subr.mxu0 0.0
    %677 = vmatpush1.xpose.msra.mxu0 0.0
    %678 = vmatprep.subr.mxu0 0.0
    %679 = vmatpush1.xpose.msra.mxu0 0.0
    %680 = vmatprep.subr.mxu0 0.0
    %681 = vmatpush1.xpose.msra.mxu0 0.0
    %682 = vmatprep.subr.mxu0 0.0
    %683 = vmatpush1.xpose.msra.mxu0 0.0
    %684 = vmatprep.mubr.f32.mxu0 0.0
    %685 = vmatmul.mubr.f32.gmra.mrb[0].mxu0 %v612
    %v686 = vpop.f32.mrb[0].mxu0
    %v687 = vadd.f32 0.0, %v686
    %v688 = vpop.f32.mrb[0].mxu0
    %689 = vdwg.mxu0
    %v690 = vsel %vm451, %v687, -inf
    %691 = vmax.xlane.f32.xlu0 %v690
    %v692 = vpop.xlane.xlu0 %691
    %v693 = vsub.f32 %v687, %v692
    %v694 = vmul.f32 %v693, 1.442695
    %v695 = vpow.pop %v694
    %v696 = vsel %vm451, %v695, 0.0
    %697 = vadd.xlane.f32.xlu0 %v696
    %v698 = vpop.xlane.xlu0 %697
    %v699 = vrcp.pop %v698
    %v700 = vmul.f32 1.0, %v699
    %v701 = vmul.f32 %v695, %v700
    %v703 = vsel %vm451, %v701, 0
    %705 = vmatprep.subr.mxu0 0.0
    %706 = vmatpush1.msra.mxu0 %v362
    %707 = vmatprep.subr.mxu0 0.0
    %708 = vmatpush1.msra.mxu0 %v367
    %709 = vmatprep.subr.mxu0 0.0
    %710 = vmatpush1.msra.mxu0 0.0
    %711 = vmatprep.subr.mxu0 0.0
    %712 = vmatpush1.msra.mxu0 0.0
    %713 = vmatprep.subr.mxu0 0.0
    %714 = vmatpush1.msra.mxu0 0.0
    %715 = vmatprep.subr.mxu0 0.0
    %716 = vmatpush1.msra.mxu0 0.0
    %717 = vmatprep.subr.mxu0 0.0
    %718 = vmatpush1.msra.mxu0 0.0
    %719 = vmatprep.subr.mxu0 0.0
    %720 = vmatpush1.msra.mxu0 0.0
    %721 = vmatprep.subr.mxu0 0.0
    %722 = vmatpush1.msra.mxu0 0.0
    %723 = vmatprep.subr.mxu0 0.0
    %724 = vmatpush1.msra.mxu0 0.0
    %725 = vmatprep.subr.mxu0 0.0
    %726 = vmatpush1.msra.mxu0 0.0
    %727 = vmatprep.subr.mxu0 0.0
    %728 = vmatpush1.msra.mxu0 0.0
    %729 = vmatprep.subr.mxu0 0.0
    %730 = vmatpush1.msra.mxu0 0.0
    %731 = vmatprep.subr.mxu0 0.0
    %732 = vmatpush1.msra.mxu0 0.0
    %733 = vmatprep.subr.mxu0 0.0
    %734 = vmatpush1.msra.mxu0 0.0
    %735 = vmatprep.subr.mxu0 0.0
    %736 = vmatpush1.msra.mxu0 0.0
    %737 = vmatprep.subr.mxu0 0.0
    %738 = vmatpush1.msra.mxu0 0.0
    %739 = vmatprep.subr.mxu0 0.0
    %740 = vmatpush1.msra.mxu0 0.0
    %741 = vmatprep.subr.mxu0 0.0
    %742 = vmatpush1.msra.mxu0 0.0
    %743 = vmatprep.subr.mxu0 0.0
    %744 = vmatpush1.msra.mxu0 0.0
    %745 = vmatprep.subr.mxu0 0.0
    %746 = vmatpush1.msra.mxu0 0.0
    %747 = vmatprep.subr.mxu0 0.0
    %748 = vmatpush1.msra.mxu0 0.0
    %749 = vmatprep.subr.mxu0 0.0
    %750 = vmatpush1.msra.mxu0 0.0
    %751 = vmatprep.subr.mxu0 0.0
    %752 = vmatpush1.msra.mxu0 0.0
    %753 = vmatprep.subr.mxu0 0.0
    %754 = vmatpush1.msra.mxu0 0.0
    %755 = vmatprep.subr.mxu0 0.0
    %756 = vmatpush1.msra.mxu0 0.0
    %757 = vmatprep.subr.mxu0 0.0
    %758 = vmatpush1.msra.mxu0 0.0
    %759 = vmatprep.subr.mxu0 0.0
    %760 = vmatpush1.msra.mxu0 0.0
    %761 = vmatprep.subr.mxu0 0.0
    %762 = vmatpush1.msra.mxu0 0.0
    %763 = vmatprep.subr.mxu0 0.0
    %764 = vmatpush1.msra.mxu0 0.0
    %765 = vmatprep.subr.mxu0 0.0
    %766 = vmatpush1.msra.mxu0 0.0
    %767 = vmatprep.subr.mxu0 0.0
    %768 = vmatpush1.msra.mxu0 0.0
    %769 = vmatprep.mubr.f32.mxu0 0.0
    %770 = vmatmul.mubr.f32.gmra.mrb[0].mxu0 %v703
    %v771 = vpop.f32.mrb[0].mxu0
    %v772 = vadd.f32 0.0, %v771
    %v773 = vpop.f32.mrb[0].mxu0
    %774 = vdwg.mxu0
    %v776 = vsel %vm371, %v772, 0
    %778 = vmatprep.subr.mxu0 0.0
    %779 = vmatpush1.msra.mxu0 %v370
    %780 = vmatprep.subr.mxu0 0.0
    %781 = vmatpush1.msra.mxu0 0.0
    %782 = vmatprep.subr.mxu0 0.0
    %783 = vmatpush1.msra.mxu0 0.0
    %784 = vmatprep.subr.mxu0 0.0
    %785 = vmatpush1.msra.mxu0 0.0
    %786 = vmatprep.subr.mxu0 0.0
    %787 = vmatpush1.msra.mxu0 0.0
    %788 = vmatprep.subr.mxu0 0.0
    %789 = vmatpush1.msra.mxu0 0.0
    %790 = vmatprep.subr.mxu0 0.0
    %791 = vmatpush1.msra.mxu0 0.0
    %792 = vmatprep.subr.mxu0 0.0
    %793 = vmatpush1.msra.mxu0 0.0
    %794 = vmatprep.subr.mxu0 0.0
    %795 = vmatpush1.msra.mxu0 0.0
    %796 = vmatprep.subr.mxu0 0.0
    %797 = vmatpush1.msra.mxu0 0.0
    %798 = vmatprep.subr.mxu0 0.0
    %799 = vmatpush1.msra.mxu0 0.0
    %800 = vmatprep.subr.mxu0 0.0
    %801 = vmatpush1.msra.mxu0 0.0
    %802 = vmatprep.subr.mxu0 0.0
    %803 = vmatpush1.msra.mxu0 0.0
    %804 = vmatprep.subr.mxu0 0.0
    %805 = vmatpush1.msra.mxu0 0.0
    %806 = vmatprep.subr.mxu0 0.0
    %807 = vmatpush1.msra.mxu0 0.0
    %808 = vmatprep.subr.mxu0 0.0
    %809 = vmatpush1.msra.mxu0 0.0
    %810 = vmatprep.subr.mxu0 0.0
    %811 = vmatpush1.msra.mxu0 0.0
    %812 = vmatprep.subr.mxu0 0.0
    %813 = vmatpush1.msra.mxu0 0.0
    %814 = vmatprep.subr.mxu0 0.0
    %815 = vmatpush1.msra.mxu0 0.0
    %816 = vmatprep.subr.mxu0 0.0
    %817 = vmatpush1.msra.mxu0 0.0
    %818 = vmatprep.subr.mxu0 0.0
    %819 = vmatpush1.msra.mxu0 0.0
    %820 = vmatprep.subr.mxu0 0.0
    %821 = vmatpush1.msra.mxu0 0.0
    %822 = vmatprep.subr.mxu0 0.0
    %823 = vmatpush1.msra.mxu0 0.0
    %824 = vmatprep.subr.mxu0 0.0
    %825 = vmatpush1.msra.mxu0 0.0
    %826 = vmatprep.subr.mxu0 0.0
    %827 = vmatpush1.msra.mxu0 0.0
    %828 = vmatprep.subr.mxu0 0.0
    %829 = vmatpush1.msra.mxu0 0.0
    %830 = vmatprep.subr.mxu0 0.0
    %831 = vmatpush1.msra.mxu0 0.0
    %832 = vmatprep.subr.mxu0 0.0
    %833 = vmatpush1.msra.mxu0 0.0
    %834 = vmatprep.subr.mxu0 0.0
    %835 = vmatpush1.msra.mxu0 0.0
    %836 = vmatprep.subr.mxu0 0.0
    %837 = vmatpush1.msra.mxu0 0.0
    %838 = vmatprep.subr.mxu0 0.0
    %839 = vmatpush1.msra.mxu0 0.0
    %840 = vmatprep.subr.mxu0 0.0
    %841 = vmatpush1.msra.mxu0 0.0
    %842 = vmatprep.mubr.f32.mxu0 0.0
    %843 = vmatmul.mubr.f32.gmra.mrb[0].mxu0 %v776
    %v844 = vpop.f32.mrb[0].mxu0
    %v845 = vadd.f32 0.0, %v844
    %v846 = vpop.f32.mrb[0].mxu0
    %847 = vdwg.mxu0
    %v848 = vadd.f32 %v56, %v845
    %s849 = scalar_lea.vmem %s4, 32
    %v850 = vld [vmem:[%s849] sm:$0xff]
    %v851 = vld [vmem:[%s849 + $0x8] sm:$0xff]
    %v852 = vld [vmem:[%s849 + $0x10] sm:$0xff]
    %v853 = vld [vmem:[%s849 + $0x18] sm:$0xff]
    %s854 = scalar_lea.vmem %s6, 1
    %v855 = vld [vmem:[%s854] sm:$0x1]
    %v857 = vlaneseq
    %v858 = vshrl.u32 %v857, 7
    %v859 = vsub.s32 0, %v858
    %v860 = vrot.slane %v855, %v859
    %862 = vmatprep.subr.mxu0 0.0
    %863 = vmatpush1.msra.mxu0 %v850
    %864 = vmatprep.subr.mxu0 0.0
    %865 = vmatpush1.msra.mxu0 %v851
    %866 = vmatprep.subr.mxu0 0.0
    %867 = vmatpush1.msra.mxu0 %v852
    %868 = vmatprep.subr.mxu0 0.0
    %869 = vmatpush1.msra.mxu0 %v853
    %870 = vmatprep.subr.mxu0 0.0
    %871 = vmatpush1.msra.mxu0 0.0
    %872 = vmatprep.subr.mxu0 0.0
    %873 = vmatpush1.msra.mxu0 0.0
    %874 = vmatprep.subr.mxu0 0.0
    %875 = vmatpush1.msra.mxu0 0.0
    %876 = vmatprep.subr.mxu0 0.0
    %877 = vmatpush1.msra.mxu0 0.0
    %878 = vmatprep.subr.mxu0 0.0
    %879 = vmatpush1.msra.mxu0 0.0
    %880 = vmatprep.subr.mxu0 0.0
    %881 = vmatpush1.msra.mxu0 0.0
    %882 = vmatprep.subr.mxu0 0.0
    %883 = vmatpush1.msra.mxu0 0.0
    %884 = vmatprep.subr.mxu0 0.0
    %885 = vmatpush1.msra.mxu0 0.0
    %886 = vmatprep.subr.mxu0 0.0
    %887 = vmatpush1.msra.mxu0 0.0
    %888 = vmatprep.subr.mxu0 0.0
    %889 = vmatpush1.msra.mxu0 0.0
    %890 = vmatprep.subr.mxu0 0.0
    %891 = vmatpush1.msra.mxu0 0.0
    %892 = vmatprep.subr.mxu0 0.0
    %893 = vmatpush1.msra.mxu0 0.0
    %894 = vmatprep.subr.mxu0 0.0
    %895 = vmatpush1.msra.mxu0 0.0
    %896 = vmatprep.subr.mxu0 0.0
    %897 = vmatpush1.msra.mxu0 0.0
    %898 = vmatprep.subr.mxu0 0.0
    %899 = vmatpush1.msra.mxu0 0.0
    %900 = vmatprep.subr.mxu0 0.0
    %901 = vmatpush1.msra.mxu0 0.0
    %902 = vmatprep.subr.mxu0 0.0
    %903 = vmatpush1.msra.mxu0 0.0
    %904 = vmatprep.subr.mxu0 0.0
    %905 = vmatpush1.msra.mxu0 0.0
    %906 = vmatprep.subr.mxu0 0.0
    %907 = vmatpush1.msra.mxu0 0.0
    %908 = vmatprep.subr.mxu0 0.0
    %909 = vmatpush1.msra.mxu0 0.0
    %910 = vmatprep.subr.mxu0 0.0
    %911 = vmatpush1.msra.mxu0 0.0
    %912 = vmatprep.subr.mxu0 0.0
    %913 = vmatpush1.msra.mxu0 0.0
    %914 = vmatprep.subr.mxu0 0.0
    %915 = vmatpush1.msra.mxu0 0.0
    %916 = vmatprep.subr.mxu0 0.0
    %917 = vmatpush1.msra.mxu0 0.0
    %918 = vmatprep.subr.mxu0 0.0
    %919 = vmatpush1.msra.mxu0 0.0
    %920 = vmatprep.subr.mxu0 0.0
    %921 = vmatpush1.msra.mxu0 0.0
    %922 = vmatprep.subr.mxu0 0.0
    %923 = vmatpush1.msra.mxu0 0.0
    %924 = vmatprep.subr.mxu0 0.0
    %925 = vmatpush1.msra.mxu0 0.0
    %926 = vmatprep.mubr.f32.mxu0 0.0
    %927 = vmatmul.mubr.f32.gmra.mrb[0].mxu0 %v70
    %v928 = vpop.f32.mrb[0].mxu0
    %v929 = vadd.f32 %v860, %v928
    %v930 = vpop.f32.mrb[0].mxu0
    %931 = vmatprep.mubr.f32.mxu0 0.0
    %932 = vmatmul.mubr.f32.gmra.mrb[0].mxu0 %v73
    %v933 = vpop.f32.mrb[0].mxu0
    %v934 = vadd.f32 %v860, %v933
    %v935 = vpop.f32.mrb[0].mxu0
    %936 = vdwg.mxu0
    %s937 = scalar_lea.vmem %s4, 160
    %v938 = vld [vmem:[%s937] sm:$0xff]
    %v939 = vld [vmem:[%s937 + $0x8] sm:$0xff]
    %v940 = vld [vmem:[%s937 + $0x10] sm:$0xff]
    %v941 = vld [vmem:[%s937 + $0x18] sm:$0xff]
    %s942 = scalar_lea.vmem %s6, 5
    %v943 = vld [vmem:[%s942] sm:$0x1]
    %v945 = vlaneseq
    %v946 = vshrl.u32 %v945, 7
    %v947 = vsub.s32 0, %v946
    %v948 = vrot.slane %v943, %v947
    %950 = vmatprep.subr.mxu0 0.0
    %951 = vmatpush1.msra.mxu0 %v938
    %952 = vmatprep.subr.mxu0 0.0
    %953 = vmatpush1.msra.mxu0 %v939
    %954 = vmatprep.subr.mxu0 0.0
    %955 = vmatpush1.msra.mxu0 %v940
    %956 = vmatprep.subr.mxu0 0.0
    %957 = vmatpush1.msra.mxu0 %v941
    %958 = vmatprep.subr.mxu0 0.0
    %959 = vmatpush1.msra.mxu0 0.0
    %960 = vmatprep.subr.mxu0 0.0
    %961 = vmatpush1.msra.mxu0 0.0
    %962 = vmatprep.subr.mxu0 0.0
    %963 = vmatpush1.msra.mxu0 0.0
    %964 = vmatprep.subr.mxu0 0.0
    %965 = vmatpush1.msra.mxu0 0.0
    %966 = vmatprep.subr.mxu0 0.0
    %967 = vmatpush1.msra.mxu0 0.0
    %968 = vmatprep.subr.mxu0 0.0
    %969 = vmatpush1.msra.mxu0 0.0
    %970 = vmatprep.subr.mxu0 0.0
    %971 = vmatpush1.msra.mxu0 0.0
    %972 = vmatprep.subr.mxu0 0.0
    %973 = vmatpush1.msra.mxu0 0.0
    %974 = vmatprep.subr.mxu0 0.0
    %975 = vmatpush1.msra.mxu0 0.0
    %976 = vmatprep.subr.mxu0 0.0
    %977 = vmatpush1.msra.mxu0 0.0
    %978 = vmatprep.subr.mxu0 0.0
    %979 = vmatpush1.msra.mxu0 0.0
    %980 = vmatprep.subr.mxu0 0.0
    %981 = vmatpush1.msra.mxu0 0.0
    %982 = vmatprep.subr.mxu0 0.0
    %983 = vmatpush1.msra.mxu0 0.0
    %984 = vmatprep.subr.mxu0 0.0
    %985 = vmatpush1.msra.mxu0 0.0
    %986 = vmatprep.subr.mxu0 0.0
    %987 = vmatpush1.msra.mxu0 0.0
    %988 = vmatprep.subr.mxu0 0.0
    %989 = vmatpush1.msra.mxu0 0.0
    %990 = vmatprep.subr.mxu0 0.0
    %991 = vmatpush1.msra.mxu0 0.0
    %992 = vmatprep.subr.mxu0 0.0
    %993 = vmatpush1.msra.mxu0 0.0
    %994 = vmatprep.subr.mxu0 0.0
    %995 = vmatpush1.msra.mxu0 0.0
    %996 = vmatprep.subr.mxu0 0.0
    %997 = vmatpush1.msra.mxu0 0.0
    %998 = vmatprep.subr.mxu0 0.0
    %999 = vmatpush1.msra.mxu0 0.0
    %1000 = vmatprep.subr.mxu0 0.0
    %1001 = vmatpush1.msra.mxu0 0.0
    %1002 = vmatprep.subr.mxu0 0.0
    %1003 = vmatpush1.msra.mxu0 0.0
    %1004 = vmatprep.subr.mxu0 0.0
    %1005 = vmatpush1.msra.mxu0 0.0
    %1006 = vmatprep.subr.mxu0 0.0
    %1007 = vmatpush1.msra.mxu0 0.0
    %1008 = vmatprep.subr.mxu0 0.0
    %1009 = vmatpush1.msra.mxu0 0.0
    %1010 = vmatprep.subr.mxu0 0.0
    %1011 = vmatpush1.msra.mxu0 0.0
    %1012 = vmatprep.subr.mxu0 0.0
    %1013 = vmatpush1.msra.mxu0 0.0
    %1014 = vmatprep.mubr.f32.mxu0 0.0
    %1015 = vmatmul.mubr.f32.gmra.mrb[0].mxu0 %v164
    %v1016 = vpop.f32.mrb[0].mxu0
    %v1017 = vadd.f32 %v948, %v1016
    %v1018 = vpop.f32.mrb[0].mxu0
    %1019 = vmatprep.mubr.f32.mxu0 0.0
    %1020 = vmatmul.mubr.f32.gmra.mrb[0].mxu0 %v167
    %v1021 = vpop.f32.mrb[0].mxu0
    %v1022 = vadd.f32 %v948, %v1021
    %v1023 = vpop.f32.mrb[0].mxu0
    %1024 = vmatprep.mubr.f32.mxu0 0.0
    %1025 = vmatmul.mubr.f32.gmra.mrb[0].mxu0 %v170
    %v1026 = vpop.f32.mrb[0].mxu0
    %v1027 = vadd.f32 %v948, %v1026
    %v1028 = vpop.f32.mrb[0].mxu0
    %1029 = vmatprep.mubr.f32.mxu0 0.0
    %1030 = vmatmul.mubr.f32.gmra.mrb[0].mxu0 %v173
    %v1031 = vpop.f32.mrb[0].mxu0
    %v1032 = vadd.f32 %v948, %v1031
    %v1033 = vpop.f32.mrb[0].mxu0
    %1034 = vdwg.mxu0
    %s1035 = scalar_lea.vmem %s4, 288
    %v1036 = vld [vmem:[%s1035] sm:$0xff]
    %v1037 = vld [vmem:[%s1035 + $0x8] sm:$0xff]
    %v1038 = vld [vmem:[%s1035 + $0x10] sm:$0xff]
    %v1039 = vld [vmem:[%s1035 + $0x18] sm:$0xff]
    %s1040 = scalar_lea.vmem %s6, 9
    %v1041 = vld [vmem:[%s1040] sm:$0x1]
    %v1043 = vlaneseq
    %v1044 = vshrl.u32 %v1043, 7
    %v1045 = vsub.s32 0, %v1044
    %v1046 = vrot.slane %v1041, %v1045
    %1048 = vmatprep.subr.mxu0 0.0
    %1049 = vmatpush1.msra.mxu0 %v1036
    %1050 = vmatprep.subr.mxu0 0.0
    %1051 = vmatpush1.msra.mxu0 %v1037
    %1052 = vmatprep.subr.mxu0 0.0
    %1053 = vmatpush1.msra.mxu0 %v1038
    %1054 = vmatprep.subr.mxu0 0.0
    %1055 = vmatpush1.msra.mxu0 %v1039
    %1056 = vmatprep.subr.mxu0 0.0
    %1057 = vmatpush1.msra.mxu0 0.0
    %1058 = vmatprep.subr.mxu0 0.0
    %1059 = vmatpush1.msra.mxu0 0.0
    %1060 = vmatprep.subr.mxu0 0.0
    %1061 = vmatpush1.msra.mxu0 0.0
    %1062 = vmatprep.subr.mxu0 0.0
    %1063 = vmatpush1.msra.mxu0 0.0
    %1064 = vmatprep.subr.mxu0 0.0
    %1065 = vmatpush1.msra.mxu0 0.0
    %1066 = vmatprep.subr.mxu0 0.0
    %1067 = vmatpush1.msra.mxu0 0.0
    %1068 = vmatprep.subr.mxu0 0.0
    %1069 = vmatpush1.msra.mxu0 0.0
    %1070 = vmatprep.subr.mxu0 0.0
    %1071 = vmatpush1.msra.mxu0 0.0
    %1072 = vmatprep.subr.mxu0 0.0
    %1073 = vmatpush1.msra.mxu0 0.0
    %1074 = vmatprep.subr.mxu0 0.0
    %1075 = vmatpush1.msra.mxu0 0.0
    %1076 = vmatprep.subr.mxu0 0.0
    %1077 = vmatpush1.msra.mxu0 0.0
    %1078 = vmatprep.subr.mxu0 0.0
    %1079 = vmatpush1.msra.mxu0 0.0
    %1080 = vmatprep.subr.mxu0 0.0
    %1081 = vmatpush1.msra.mxu0 0.0
    %1082 = vmatprep.subr.mxu0 0.0
    %1083 = vmatpush1.msra.mxu0 0.0
    %1084 = vmatprep.subr.mxu0 0.0
    %1085 = vmatpush1.msra.mxu0 0.0
    %1086 = vmatprep.subr.mxu0 0.0
    %1087 = vmatpush1.msra.mxu0 0.0
    %1088 = vmatprep.subr.mxu0 0.0
    %1089 = vmatpush1.msra.mxu0 0.0
    %1090 = vmatprep.subr.mxu0 0.0
    %1091 = vmatpush1.msra.mxu0 0.0
    %1092 = vmatprep.subr.mxu0 0.0
    %1093 = vmatpush1.msra.mxu0 0.0
    %1094 = vmatprep.subr.mxu0 0.0
    %1095 = vmatpush1.msra.mxu0 0.0
    %1096 = vmatprep.subr.mxu0 0.0
    %1097 = vmatpush1.msra.mxu0 0.0
    %1098 = vmatprep.subr.mxu0 0.0
    %1099 = vmatpush1.msra.mxu0 0.0
    %1100 = vmatprep.subr.mxu0 0.0
    %1101 = vmatpush1.msra.mxu0 0.0
    %1102 = vmatprep.subr.mxu0 0.0
    %1103 = vmatpush1.msra.mxu0 0.0
    %1104 = vmatprep.subr.mxu0 0.0
    %1105 = vmatpush1.msra.mxu0 0.0
    %1106 = vmatprep.subr.mxu0 0.0
    %1107 = vmatpush1.msra.mxu0 0.0
    %1108 = vmatprep.subr.mxu0 0.0
    %1109 = vmatpush1.msra.mxu0 0.0
    %1110 = vmatprep.subr.mxu0 0.0
    %1111 = vmatpush1.msra.mxu0 0.0
    %1112 = vmatprep.mubr.f32.mxu0 0.0
    %1113 = vmatmul.mubr.f32.gmra.mrb[0].mxu0 %v274
    %v1114 = vpop.f32.mrb[0].mxu0
    %v1115 = vadd.f32 %v1046, %v1114
    %v1116 = vpop.f32.mrb[0].mxu0
    %1117 = vmatprep.mubr.f32.mxu0 0.0
    %1118 = vmatmul.mubr.f32.gmra.mrb[0].mxu0 %v277
    %v1119 = vpop.f32.mrb[0].mxu0
    %v1120 = vadd.f32 %v1046, %v1119
    %v1121 = vpop.f32.mrb[0].mxu0
    %1122 = vmatprep.mubr.f32.mxu0 0.0
    %1123 = vmatmul.mubr.f32.gmra.mrb[0].mxu0 %v280
    %v1124 = vpop.f32.mrb[0].mxu0
    %v1125 = vadd.f32 %v1046, %v1124
    %v1126 = vpop.f32.mrb[0].mxu0
    %1127 = vmatprep.mubr.f32.mxu0 0.0
    %1128 = vmatmul.mubr.f32.gmra.mrb[0].mxu0 %v283
    %v1129 = vpop.f32.mrb[0].mxu0
    %v1130 = vadd.f32 %v1046, %v1129
    %v1131 = vpop.f32.mrb[0].mxu0
    %1132 = vdwg.mxu0
    %s1133 = scalar_lea.vmem %s5, 8
    %v1134 = vld [vmem:[%s1133] sm:$0xff]
    %v1136 = vsel %vm371, %v929, 0
    %v1139 = vsel %vm371, %v1017, 0
    %v1142 = vsel %vm371, %v1022, 0
    %1144 = vmatprep.subr.mxu0 0.0
    %1145 = vmatpush1.xpose.msra.mxu0 %v1139
    %1146 = vmatprep.subr.mxu0 0.0
    %1147 = vmatpush1.xpose.msra.mxu0 %v1142
    %1148 = vmatprep.subr.mxu0 0.0
    %1149 = vmatpush1.xpose.msra.mxu0 0.0
    %1150 = vmatprep.subr.mxu0 0.0
    %1151 = vmatpush1.xpose.msra.mxu0 0.0
    %1152 = vmatprep.subr.mxu0 0.0
    %1153 = vmatpush1.xpose.msra.mxu0 0.0
    %1154 = vmatprep.subr.mxu0 0.0
    %1155 = vmatpush1.xpose.msra.mxu0 0.0
    %1156 = vmatprep.subr.mxu0 0.0
    %1157 = vmatpush1.xpose.msra.mxu0 0.0
    %1158 = vmatprep.subr.mxu0 0.0
    %1159 = vmatpush1.xpose.msra.mxu0 0.0
    %1160 = vmatprep.subr.mxu0 0.0
    %1161 = vmatpush1.xpose.msra.mxu0 0.0
    %1162 = vmatprep.subr.mxu0 0.0
    %1163 = vmatpush1.xpose.msra.mxu0 0.0
    %1164 = vmatprep.subr.mxu0 0.0
    %1165 = vmatpush1.xpose.msra.mxu0 0.0
    %1166 = vmatprep.subr.mxu0 0.0
    %1167 = vmatpush1.xpose.msra.mxu0 0.0
    %1168 = vmatprep.subr.mxu0 0.0
    %1169 = vmatpush1.xpose.msra.mxu0 0.0
    %1170 = vmatprep.subr.mxu0 0.0
    %1171 = vmatpush1.xpose.msra.mxu0 0.0
    %1172 = vmatprep.subr.mxu0 0.0
    %1173 = vmatpush1.xpose.msra.mxu0 0.0
    %1174 = vmatprep.subr.mxu0 0.0
    %1175 = vmatpush1.xpose.msra.mxu0 0.0
    %1176 = vmatprep.subr.mxu0 0.0
    %1177 = vmatpush1.xpose.msra.mxu0 0.0
    %1178 = vmatprep.subr.mxu0 0.0
    %1179 = vmatpush1.xpose.msra.mxu0 0.0
    %1180 = vmatprep.subr.mxu0 0.0
    %1181 = vmatpush1.xpose.msra.mxu0 0.0
    %1182 = vmatprep.subr.mxu0 0.0
    %1183 = vmatpush1.xpose.msra.mxu0 0.0
    %1184 = vmatprep.subr.mxu0 0.0
    %1185 = vmatpush1.xpose.msra.mxu0 0.0
    %1186 = vmatprep.subr.mxu0 0.0
    %1187 = vmatpush1.xpose.msra.mxu0 0.0
    %1188 = vmatprep.subr.mxu0 0.0
    %1189 = vmatpush1.xpose.msra.mxu0 0.0
    %1190 = vmatprep.subr.mxu0 0.0
    %1191 = vmatpush1.xpose.msra.mxu0 0.0
    %1192 = vmatprep.subr.mxu0 0.0
    %1193 = vmatpush1.xpose.msra.mxu0 0.0
    %1194 = vmatprep.subr.mxu0 0.0
    %1195 = vmatpush1.xpose.msra.mxu0 0.0
    %1196 = vmatprep.subr.mxu0 0.0
    %1197 = vmatpush1.xpose.msra.mxu0 0.0
    %1198 = vmatprep.subr.mxu0 0.0
    %1199 = vmatpush1.xpose.msra.mxu0 0.0
    %1200 = vmatprep.subr.mxu0 0.0
    %1201 = vmatpush1.xpose.msra.mxu0 0.0
    %1202 = vmatprep.subr.mxu0 0.0
    %1203 = vmatpush1.xpose.msra.mxu0 0.0
    %1204 = vmatprep.subr.mxu0 0.0
    %1205 = vmatpush1.xpose.msra.mxu0 0.0
    %1206 = vmatprep.subr.mxu0 0.0
    %1207 = vmatpush1.xpose.msra.mxu0 0.0
    %1208 = vmatprep.mubr.f32.mxu0 0.0
    %1209 = vmatmul.mubr.f32.gmra.mrb[0].mxu0 %v1136
    %v1210 = vpop.f32.mrb[0].mxu0
    %v1211 = vadd.f32 0.0, %v1210
    %v1212 = vpop.f32.mrb[0].mxu0
    %1213 = vdwg.mxu0
    %v1214 = vsel %vm451, %v1211, -inf
    %1215 = vmax.xlane.f32.xlu0 %v1214
    %v1216 = vpop.xlane.xlu0 %1215
    %v1217 = vsub.f32 %v1211, %v1216
    %v1218 = vmul.f32 %v1217, 1.442695
    %v1219 = vpow.pop %v1218
    %v1220 = vsel %vm451, %v1219, 0.0
    %1221 = vadd.xlane.f32.xlu0 %v1220
    %v1222 = vpop.xlane.xlu0 %1221
    %v1223 = vrcp.pop %v1222
    %v1224 = vmul.f32 1.0, %v1223
    %v1225 = vmul.f32 %v1219, %v1224
    %v1227 = vsel %vm451, %v1225, 0
    %1229 = vmatprep.subr.mxu0 0.0
    %1230 = vmatpush1.msra.mxu0 %v1115
    %1231 = vmatprep.subr.mxu0 0.0
    %1232 = vmatpush1.msra.mxu0 %v1120
    %1233 = vmatprep.subr.mxu0 0.0
    %1234 = vmatpush1.msra.mxu0 0.0
    %1235 = vmatprep.subr.mxu0 0.0
    %1236 = vmatpush1.msra.mxu0 0.0
    %1237 = vmatprep.subr.mxu0 0.0
    %1238 = vmatpush1.msra.mxu0 0.0
    %1239 = vmatprep.subr.mxu0 0.0
    %1240 = vmatpush1.msra.mxu0 0.0
    %1241 = vmatprep.subr.mxu0 0.0
    %1242 = vmatpush1.msra.mxu0 0.0
    %1243 = vmatprep.subr.mxu0 0.0
    %1244 = vmatpush1.msra.mxu0 0.0
    %1245 = vmatprep.subr.mxu0 0.0
    %1246 = vmatpush1.msra.mxu0 0.0
    %1247 = vmatprep.subr.mxu0 0.0
    %1248 = vmatpush1.msra.mxu0 0.0
    %1249 = vmatprep.subr.mxu0 0.0
    %1250 = vmatpush1.msra.mxu0 0.0
    %1251 = vmatprep.subr.mxu0 0.0
    %1252 = vmatpush1.msra.mxu0 0.0
    %1253 = vmatprep.subr.mxu0 0.0
    %1254 = vmatpush1.msra.mxu0 0.0
    %1255 = vmatprep.subr.mxu0 0.0
    %1256 = vmatpush1.msra.mxu0 0.0
    %1257 = vmatprep.subr.mxu0 0.0
    %1258 = vmatpush1.msra.mxu0 0.0
    %1259 = vmatprep.subr.mxu0 0.0
    %1260 = vmatpush1.msra.mxu0 0.0
    %1261 = vmatprep.subr.mxu0 0.0
    %1262 = vmatpush1.msra.mxu0 0.0
    %1263 = vmatprep.subr.mxu0 0.0
    %1264 = vmatpush1.msra.mxu0 0.0
    %1265 = vmatprep.subr.mxu0 0.0
    %1266 = vmatpush1.msra.mxu0 0.0
    %1267 = vmatprep.subr.mxu0 0.0
    %1268 = vmatpush1.msra.mxu0 0.0
    %1269 = vmatprep.subr.mxu0 0.0
    %1270 = vmatpush1.msra.mxu0 0.0
    %1271 = vmatprep.subr.mxu0 0.0
    %1272 = vmatpush1.msra.mxu0 0.0
    %1273 = vmatprep.subr.mxu0 0.0
    %1274 = vmatpush1.msra.mxu0 0.0
    %1275 = vmatprep.subr.mxu0 0.0
    %1276 = vmatpush1.msra.mxu0 0.0
    %1277 = vmatprep.subr.mxu0 0.0
    %1278 = vmatpush1.msra.mxu0 0.0
    %1279 = vmatprep.subr.mxu0 0.0
    %1280 = vmatpush1.msra.mxu0 0.0
    %1281 = vmatprep.subr.mxu0 0.0
    %1282 = vmatpush1.msra.mxu0 0.0
    %1283 = vmatprep.subr.mxu0 0.0
    %1284 = vmatpush1.msra.mxu0 0.0
    %1285 = vmatprep.subr.mxu0 0.0
    %1286 = vmatpush1.msra.mxu0 0.0
    %1287 = vmatprep.subr.mxu0 0.0
    %1288 = vmatpush1.msra.mxu0 0.0
    %1289 = vmatprep.subr.mxu0 0.0
    %1290 = vmatpush1.msra.mxu0 0.0
    %1291 = vmatprep.subr.mxu0 0.0
    %1292 = vmatpush1.msra.mxu0 0.0
    %1293 = vmatprep.mubr.f32.mxu0 0.0
    %1294 = vmatmul.mubr.f32.gmra.mrb[0].mxu0 %v1227
    %v1295 = vpop.f32.mrb[0].mxu0
    %v1296 = vadd.f32 0.0, %v1295
    %v1297 = vpop.f32.mrb[0].mxu0
    %1298 = vdwg.mxu0
    %v1300 = vsel %vm371, %v1296, 0
    %1302 = vmatprep.subr.mxu0 0.0
    %1303 = vmatpush1.msra.mxu0 %v1134
    %1304 = vmatprep.subr.mxu0 0.0
    %1305 = vmatpush1.msra.mxu0 0.0
    %1306 = vmatprep.subr.mxu0 0.0
    %1307 = vmatpush1.msra.mxu0 0.0
    %1308 = vmatprep.subr.mxu0 0.0
    %1309 = vmatpush1.msra.mxu0 0.0
    %1310 = vmatprep.subr.mxu0 0.0
    %1311 = vmatpush1.msra.mxu0 0.0
    %1312 = vmatprep.subr.mxu0 0.0
    %1313 = vmatpush1.msra.mxu0 0.0
    %1314 = vmatprep.subr.mxu0 0.0
    %1315 = vmatpush1.msra.mxu0 0.0
    %1316 = vmatprep.subr.mxu0 0.0
    %1317 = vmatpush1.msra.mxu0 0.0
    %1318 = vmatprep.subr.mxu0 0.0
    %1319 = vmatpush1.msra.mxu0 0.0
    %1320 = vmatprep.subr.mxu0 0.0
    %1321 = vmatpush1.msra.mxu0 0.0
    %1322 = vmatprep.subr.mxu0 0.0
    %1323 = vmatpush1.msra.mxu0 0.0
    %1324 = vmatprep.subr.mxu0 0.0
    %1325 = vmatpush1.msra.mxu0 0.0
    %1326 = vmatprep.subr.mxu0 0.0
    %1327 = vmatpush1.msra.mxu0 0.0
    %1328 = vmatprep.subr.mxu0 0.0
    %1329 = vmatpush1.msra.mxu0 0.0
    %1330 = vmatprep.subr.mxu0 0.0
    %1331 = vmatpush1.msra.mxu0 0.0
    %1332 = vmatprep.subr.mxu0 0.0
    %1333 = vmatpush1.msra.mxu0 0.0
    %1334 = vmatprep.subr.mxu0 0.0
    %1335 = vmatpush1.msra.mxu0 0.0
    %1336 = vmatprep.subr.mxu0 0.0
    %1337 = vmatpush1.msra.mxu0 0.0
    %1338 = vmatprep.subr.mxu0 0.0
    %1339 = vmatpush1.msra.mxu0 0.0
    %1340 = vmatprep.subr.mxu0 0.0
    %1341 = vmatpush1.msra.mxu0 0.0
    %1342 = vmatprep.subr.mxu0 0.0
    %1343 = vmatpush1.msra.mxu0 0.0
    %1344 = vmatprep.subr.mxu0 0.0
    %1345 = vmatpush1.msra.mxu0 0.0
    %1346 = vmatprep.subr.mxu0 0.0
    %1347 = vmatpush1.msra.mxu0 0.0
    %1348 = vmatprep.subr.mxu0 0.0
    %1349 = vmatpush1.msra.mxu0 0.0
    %1350 = vmatprep.subr.mxu0 0.0
    %1351 = vmatpush1.msra.mxu0 0.0
    %1352 = vmatprep.subr.mxu0 0.0
    %1353 = vmatpush1.msra.mxu0 0.0
    %1354 = vmatprep.subr.mxu0 0.0
    %1355 = vmatpush1.msra.mxu0 0.0
    %1356 = vmatprep.subr.mxu0 0.0
    %1357 = vmatpush1.msra.mxu0 0.0
    %1358 = vmatprep.subr.mxu0 0.0
    %1359 = vmatpush1.msra.mxu0 0.0
    %1360 = vmatprep.subr.mxu0 0.0
    %1361 = vmatpush1.msra.mxu0 0.0
    %1362 = vmatprep.subr.mxu0 0.0
    %1363 = vmatpush1.msra.mxu0 0.0
    %1364 = vmatprep.subr.mxu0 0.0
    %1365 = vmatpush1.msra.mxu0 0.0
    %1366 = vmatprep.mubr.f32.mxu0 0.0
    %1367 = vmatmul.mubr.f32.gmra.mrb[0].mxu0 %v1300
    %v1368 = vpop.f32.mrb[0].mxu0
    %v1369 = vadd.f32 0.0, %v1368
    %v1370 = vpop.f32.mrb[0].mxu0
    %1371 = vdwg.mxu0
    %v1372 = vadd.f32 %v610, %v1369
    %v1374 = vsel %vm371, %v934, 0
    %v1377 = vsel %vm371, %v1027, 0
    %v1380 = vsel %vm371, %v1032, 0
    %1382 = vmatprep.subr.mxu0 0.0
    %1383 = vmatpush1.xpose.msra.mxu0 %v1377
    %1384 = vmatprep.subr.mxu0 0.0
    %1385 = vmatpush1.xpose.msra.mxu0 %v1380
    %1386 = vmatprep.subr.mxu0 0.0
    %1387 = vmatpush1.xpose.msra.mxu0 0.0
    %1388 = vmatprep.subr.mxu0 0.0
    %1389 = vmatpush1.xpose.msra.mxu0 0.0
    %1390 = vmatprep.subr.mxu0 0.0
    %1391 = vmatpush1.xpose.msra.mxu0 0.0
    %1392 = vmatprep.subr.mxu0 0.0
    %1393 = vmatpush1.xpose.msra.mxu0 0.0
    %1394 = vmatprep.subr.mxu0 0.0
    %1395 = vmatpush1.xpose.msra.mxu0 0.0
    %1396 = vmatprep.subr.mxu0 0.0
    %1397 = vmatpush1.xpose.msra.mxu0 0.0
    %1398 = vmatprep.subr.mxu0 0.0
    %1399 = vmatpush1.xpose.msra.mxu0 0.0
    %1400 = vmatprep.subr.mxu0 0.0
    %1401 = vmatpush1.xpose.msra.mxu0 0.0
    %1402 = vmatprep.subr.mxu0 0.0
    %1403 = vmatpush1.xpose.msra.mxu0 0.0
    %1404 = vmatprep.subr.mxu0 0.0
    %1405 = vmatpush1.xpose.msra.mxu0 0.0
    %1406 = vmatprep.subr.mxu0 0.0
    %1407 = vmatpush1.xpose.msra.mxu0 0.0
    %1408 = vmatprep.subr.mxu0 0.0
    %1409 = vmatpush1.xpose.msra.mxu0 0.0
    %1410 = vmatprep.subr.mxu0 0.0
    %1411 = vmatpush1.xpose.msra.mxu0 0.0
    %1412 = vmatprep.subr.mxu0 0.0
    %1413 = vmatpush1.xpose.msra.mxu0 0.0
    %1414 = vmatprep.subr.mxu0 0.0
    %1415 = vmatpush1.xpose.msra.mxu0 0.0
    %1416 = vmatprep.subr.mxu0 0.0
    %1417 = vmatpush1.xpose.msra.mxu0 0.0
    %1418 = vmatprep.subr.mxu0 0.0
    %1419 = vmatpush1.xpose.msra.mxu0 0.0
    %1420 = vmatprep.subr.mxu0 0.0
    %1421 = vmatpush1.xpose.msra.mxu0 0.0
    %1422 = vmatprep.subr.mxu0 0.0
    %1423 = vmatpush1.xpose.msra.mxu0 0.0
    %1424 = vmatprep.subr.mxu0 0.0
    %1425 = vmatpush1.xpose.msra.mxu0 0.0
    %1426 = vmatprep.subr.mxu0 0.0
    %1427 = vmatpush1.xpose.msra.mxu0 0.0
    %1428 = vmatprep.subr.mxu0 0.0
    %1429 = vmatpush1.xpose.msra.mxu0 0.0
    %1430 = vmatprep.subr.mxu0 0.0
    %1431 = vmatpush1.xpose.msra.mxu0 0.0
    %1432 = vmatprep.subr.mxu0 0.0
    %1433 = vmatpush1.xpose.msra.mxu0 0.0
    %1434 = vmatprep.subr.mxu0 0.0
    %1435 = vmatpush1.xpose.msra.mxu0 0.0
    %1436 = vmatprep.subr.mxu0 0.0
    %1437 = vmatpush1.xpose.msra.mxu0 0.0
    %1438 = vmatprep.subr.mxu0 0.0
    %1439 = vmatpush1.xpose.msra.mxu0 0.0
    %1440 = vmatprep.subr.mxu0 0.0
    %1441 = vmatpush1.xpose.msra.mxu0 0.0
    %1442 = vmatprep.subr.mxu0 0.0
    %1443 = vmatpush1.xpose.msra.mxu0 0.0
    %1444 = vmatprep.subr.mxu0 0.0
    %1445 = vmatpush1.xpose.msra.mxu0 0.0
    %1446 = vmatprep.mubr.f32.mxu0 0.0
    %1447 = vmatmul.mubr.f32.gmra.mrb[0].mxu0 %v1374
    %v1448 = vpop.f32.mrb[0].mxu0
    %v1449 = vadd.f32 0.0, %v1448
    %v1450 = vpop.f32.mrb[0].mxu0
    %1451 = vdwg.mxu0
    %v1452 = vsel %vm451, %v1449, -inf
    %1453 = vmax.xlane.f32.xlu0 %v1452
    %v1454 = vpop.xlane.xlu0 %1453
    %v1455 = vsub.f32 %v1449, %v1454
    %v1456 = vmul.f32 %v1455, 1.442695
    %v1457 = vpow.pop %v1456
    %v1458 = vsel %vm451, %v1457, 0.0
    %1459 = vadd.xlane.f32.xlu0 %v1458
    %v1460 = vpop.xlane.xlu0 %1459
    %v1461 = vrcp.pop %v1460
    %v1462 = vmul.f32 1.0, %v1461
    %v1463 = vmul.f32 %v1457, %v1462
    %v1465 = vsel %vm451, %v1463, 0
    %1467 = vmatprep.subr.mxu0 0.0
    %1468 = vmatpush1.msra.mxu0 %v1125
    %1469 = vmatprep.subr.mxu0 0.0
    %1470 = vmatpush1.msra.mxu0 %v1130
    %1471 = vmatprep.subr.mxu0 0.0
    %1472 = vmatpush1.msra.mxu0 0.0
    %1473 = vmatprep.subr.mxu0 0.0
    %1474 = vmatpush1.msra.mxu0 0.0
    %1475 = vmatprep.subr.mxu0 0.0
    %1476 = vmatpush1.msra.mxu0 0.0
    %1477 = vmatprep.subr.mxu0 0.0
    %1478 = vmatpush1.msra.mxu0 0.0
    %1479 = vmatprep.subr.mxu0 0.0
    %1480 = vmatpush1.msra.mxu0 0.0
    %1481 = vmatprep.subr.mxu0 0.0
    %1482 = vmatpush1.msra.mxu0 0.0
    %1483 = vmatprep.subr.mxu0 0.0
    %1484 = vmatpush1.msra.mxu0 0.0
    %1485 = vmatprep.subr.mxu0 0.0
    %1486 = vmatpush1.msra.mxu0 0.0
    %1487 = vmatprep.subr.mxu0 0.0
    %1488 = vmatpush1.msra.mxu0 0.0
    %1489 = vmatprep.subr.mxu0 0.0
    %1490 = vmatpush1.msra.mxu0 0.0
    %1491 = vmatprep.subr.mxu0 0.0
    %1492 = vmatpush1.msra.mxu0 0.0
    %1493 = vmatprep.subr.mxu0 0.0
    %1494 = vmatpush1.msra.mxu0 0.0
    %1495 = vmatprep.subr.mxu0 0.0
    %1496 = vmatpush1.msra.mxu0 0.0
    %1497 = vmatprep.subr.mxu0 0.0
    %1498 = vmatpush1.msra.mxu0 0.0
    %1499 = vmatprep.subr.mxu0 0.0
    %1500 = vmatpush1.msra.mxu0 0.0
    %1501 = vmatprep.subr.mxu0 0.0
    %1502 = vmatpush1.msra.mxu0 0.0
    %1503 = vmatprep.subr.mxu0 0.0
    %1504 = vmatpush1.msra.mxu0 0.0
    %1505 = vmatprep.subr.mxu0 0.0
    %1506 = vmatpush1.msra.mxu0 0.0
    %1507 = vmatprep.subr.mxu0 0.0
    %1508 = vmatpush1.msra.mxu0 0.0
    %1509 = vmatprep.subr.mxu0 0.0
    %1510 = vmatpush1.msra.mxu0 0.0
    %1511 = vmatprep.subr.mxu0 0.0
    %1512 = vmatpush1.msra.mxu0 0.0
    %1513 = vmatprep.subr.mxu0 0.0
    %1514 = vmatpush1.msra.mxu0 0.0
    %1515 = vmatprep.subr.mxu0 0.0
    %1516 = vmatpush1.msra.mxu0 0.0
    %1517 = vmatprep.subr.mxu0 0.0
    %1518 = vmatpush1.msra.mxu0 0.0
    %1519 = vmatprep.subr.mxu0 0.0
    %1520 = vmatpush1.msra.mxu0 0.0
    %1521 = vmatprep.subr.mxu0 0.0
    %1522 = vmatpush1.msra.mxu0 0.0
    %1523 = vmatprep.subr.mxu0 0.0
    %1524 = vmatpush1.msra.mxu0 0.0
    %1525 = vmatprep.subr.mxu0 0.0
    %1526 = vmatpush1.msra.mxu0 0.0
    %1527 = vmatprep.subr.mxu0 0.0
    %1528 = vmatpush1.msra.mxu0 0.0
    %1529 = vmatprep.subr.mxu0 0.0
    %1530 = vmatpush1.msra.mxu0 0.0
    %1531 = vmatprep.mubr.f32.mxu0 0.0
    %1532 = vmatmul.mubr.f32.gmra.mrb[0].mxu0 %v1465
    %v1533 = vpop.f32.mrb[0].mxu0
    %v1534 = vadd.f32 0.0, %v1533
    %v1535 = vpop.f32.mrb[0].mxu0
    %1536 = vdwg.mxu0
    %v1538 = vsel %vm371, %v1534, 0
    %1540 = vmatprep.subr.mxu0 0.0
    %1541 = vmatpush1.msra.mxu0 %v1134
    %1542 = vmatprep.subr.mxu0 0.0
    %1543 = vmatpush1.msra.mxu0 0.0
    %1544 = vmatprep.subr.mxu0 0.0
    %1545 = vmatpush1.msra.mxu0 0.0
    %1546 = vmatprep.subr.mxu0 0.0
    %1547 = vmatpush1.msra.mxu0 0.0
    %1548 = vmatprep.subr.mxu0 0.0
    %1549 = vmatpush1.msra.mxu0 0.0
    %1550 = vmatprep.subr.mxu0 0.0
    %1551 = vmatpush1.msra.mxu0 0.0
    %1552 = vmatprep.subr.mxu0 0.0
    %1553 = vmatpush1.msra.mxu0 0.0
    %1554 = vmatprep.subr.mxu0 0.0
    %1555 = vmatpush1.msra.mxu0 0.0
    %1556 = vmatprep.subr.mxu0 0.0
    %1557 = vmatpush1.msra.mxu0 0.0
    %1558 = vmatprep.subr.mxu0 0.0
    %1559 = vmatpush1.msra.mxu0 0.0
    %1560 = vmatprep.subr.mxu0 0.0
    %1561 = vmatpush1.msra.mxu0 0.0
    %1562 = vmatprep.subr.mxu0 0.0
    %1563 = vmatpush1.msra.mxu0 0.0
    %1564 = vmatprep.subr.mxu0 0.0
    %1565 = vmatpush1.msra.mxu0 0.0
    %1566 = vmatprep.subr.mxu0 0.0
    %1567 = vmatpush1.msra.mxu0 0.0
    %1568 = vmatprep.subr.mxu0 0.0
    %1569 = vmatpush1.msra.mxu0 0.0
    %1570 = vmatprep.subr.mxu0 0.0
    %1571 = vmatpush1.msra.mxu0 0.0
    %1572 = vmatprep.subr.mxu0 0.0
    %1573 = vmatpush1.msra.mxu0 0.0
    %1574 = vmatprep.subr.mxu0 0.0
    %1575 = vmatpush1.msra.mxu0 0.0
    %1576 = vmatprep.subr.mxu0 0.0
    %1577 = vmatpush1.msra.mxu0 0.0
    %1578 = vmatprep.subr.mxu0 0.0
    %1579 = vmatpush1.msra.mxu0 0.0
    %1580 = vmatprep.subr.mxu0 0.0
    %1581 = vmatpush1.msra.mxu0 0.0
    %1582 = vmatprep.subr.mxu0 0.0
    %1583 = vmatpush1.msra.mxu0 0.0
    %1584 = vmatprep.subr.mxu0 0.0
    %1585 = vmatpush1.msra.mxu0 0.0
    %1586 = vmatprep.subr.mxu0 0.0
    %1587 = vmatpush1.msra.mxu0 0.0
    %1588 = vmatprep.subr.mxu0 0.0
    %1589 = vmatpush1.msra.mxu0 0.0
    %1590 = vmatprep.subr.mxu0 0.0
    %1591 = vmatpush1.msra.mxu0 0.0
    %1592 = vmatprep.subr.mxu0 0.0
    %1593 = vmatpush1.msra.mxu0 0.0
    %1594 = vmatprep.subr.mxu0 0.0
    %1595 = vmatpush1.msra.mxu0 0.0
    %1596 = vmatprep.subr.mxu0 0.0
    %1597 = vmatpush1.msra.mxu0 0.0
    %1598 = vmatprep.subr.mxu0 0.0
    %1599 = vmatpush1.msra.mxu0 0.0
    %1600 = vmatprep.subr.mxu0 0.0
    %1601 = vmatpush1.msra.mxu0 0.0
    %1602 = vmatprep.subr.mxu0 0.0
    %1603 = vmatpush1.msra.mxu0 0.0
    %1604 = vmatprep.mubr.f32.mxu0 0.0
    %1605 = vmatmul.mubr.f32.gmra.mrb[0].mxu0 %v1538
    %v1606 = vpop.f32.mrb[0].mxu0
    %v1607 = vadd.f32 0.0, %v1606
    %v1608 = vpop.f32.mrb[0].mxu0
    %1609 = vdwg.mxu0
    %v1610 = vadd.f32 %v848, %v1607
    %s1611 = scalar_lea.vmem %s4, 64
    %v1612 = vld [vmem:[%s1611] sm:$0xff]
    %v1613 = vld [vmem:[%s1611 + $0x8] sm:$0xff]
    %v1614 = vld [vmem:[%s1611 + $0x10] sm:$0xff]
    %v1615 = vld [vmem:[%s1611 + $0x18] sm:$0xff]
    %s1616 = scalar_lea.vmem %s6, 2
    %v1617 = vld [vmem:[%s1616] sm:$0x1]
    %v1619 = vlaneseq
    %v1620 = vshrl.u32 %v1619, 7
    %v1621 = vsub.s32 0, %v1620
    %v1622 = vrot.slane %v1617, %v1621
    %1624 = vmatprep.subr.mxu0 0.0
    %1625 = vmatpush1.msra.mxu0 %v1612
    %1626 = vmatprep.subr.mxu0 0.0
    %1627 = vmatpush1.msra.mxu0 %v1613
    %1628 = vmatprep.subr.mxu0 0.0
    %1629 = vmatpush1.msra.mxu0 %v1614
    %1630 = vmatprep.subr.mxu0 0.0
    %1631 = vmatpush1.msra.mxu0 %v1615
    %1632 = vmatprep.subr.mxu0 0.0
    %1633 = vmatpush1.msra.mxu0 0.0
    %1634 = vmatprep.subr.mxu0 0.0
    %1635 = vmatpush1.msra.mxu0 0.0
    %1636 = vmatprep.subr.mxu0 0.0
    %1637 = vmatpush1.msra.mxu0 0.0
    %1638 = vmatprep.subr.mxu0 0.0
    %1639 = vmatpush1.msra.mxu0 0.0
    %1640 = vmatprep.subr.mxu0 0.0
    %1641 = vmatpush1.msra.mxu0 0.0
    %1642 = vmatprep.subr.mxu0 0.0
    %1643 = vmatpush1.msra.mxu0 0.0
    %1644 = vmatprep.subr.mxu0 0.0
    %1645 = vmatpush1.msra.mxu0 0.0
    %1646 = vmatprep.subr.mxu0 0.0
    %1647 = vmatpush1.msra.mxu0 0.0
    %1648 = vmatprep.subr.mxu0 0.0
    %1649 = vmatpush1.msra.mxu0 0.0
    %1650 = vmatprep.subr.mxu0 0.0
    %1651 = vmatpush1.msra.mxu0 0.0
    %1652 = vmatprep.subr.mxu0 0.0
    %1653 = vmatpush1.msra.mxu0 0.0
    %1654 = vmatprep.subr.mxu0 0.0
    %1655 = vmatpush1.msra.mxu0 0.0
    %1656 = vmatprep.subr.mxu0 0.0
    %1657 = vmatpush1.msra.mxu0 0.0
    %1658 = vmatprep.subr.mxu0 0.0
    %1659 = vmatpush1.msra.mxu0 0.0
    %1660 = vmatprep.subr.mxu0 0.0
    %1661 = vmatpush1.msra.mxu0 0.0
    %1662 = vmatprep.subr.mxu0 0.0
    %1663 = vmatpush1.msra.mxu0 0.0
    %1664 = vmatprep.subr.mxu0 0.0
    %1665 = vmatpush1.msra.mxu0 0.0
    %1666 = vmatprep.subr.mxu0 0.0
    %1667 = vmatpush1.msra.mxu0 0.0
    %1668 = vmatprep.subr.mxu0 0.0
    %1669 = vmatpush1.msra.mxu0 0.0
    %1670 = vmatprep.subr.mxu0 0.0
    %1671 = vmatpush1.msra.mxu0 0.0
    %1672 = vmatprep.subr.mxu0 0.0
    %1673 = vmatpush1.msra.mxu0 0.0
    %1674 = vmatprep.subr.mxu0 0.0
    %1675 = vmatpush1.msra.mxu0 0.0
    %1676 = vmatprep.subr.mxu0 0.0
    %1677 = vmatpush1.msra.mxu0 0.0
    %1678 = vmatprep.subr.mxu0 0.0
    %1679 = vmatpush1.msra.mxu0 0.0
    %1680 = vmatprep.subr.mxu0 0.0
    %1681 = vmatpush1.msra.mxu0 0.0
    %1682 = vmatprep.subr.mxu0 0.0
    %1683 = vmatpush1.msra.mxu0 0.0
    %1684 = vmatprep.subr.mxu0 0.0
    %1685 = vmatpush1.msra.mxu0 0.0
    %1686 = vmatprep.subr.mxu0 0.0
    %1687 = vmatpush1.msra.mxu0 0.0
    %1688 = vmatprep.mubr.f32.mxu0 0.0
    %1689 = vmatmul.mubr.f32.gmra.mrb[0].mxu0 %v70
    %v1690 = vpop.f32.mrb[0].mxu0
    %v1691 = vadd.f32 %v1622, %v1690
    %v1692 = vpop.f32.mrb[0].mxu0
    %1693 = vmatprep.mubr.f32.mxu0 0.0
    %1694 = vmatmul.mubr.f32.gmra.mrb[0].mxu0 %v73
    %v1695 = vpop.f32.mrb[0].mxu0
    %v1696 = vadd.f32 %v1622, %v1695
    %v1697 = vpop.f32.mrb[0].mxu0
    %1698 = vdwg.mxu0
    %s1699 = scalar_lea.vmem %s4, 192
    %v1700 = vld [vmem:[%s1699] sm:$0xff]
    %v1701 = vld [vmem:[%s1699 + $0x8] sm:$0xff]
    %v1702 = vld [vmem:[%s1699 + $0x10] sm:$0xff]
    %v1703 = vld [vmem:[%s1699 + $0x18] sm:$0xff]
    %s1704 = scalar_lea.vmem %s6, 6
    %v1705 = vld [vmem:[%s1704] sm:$0x1]
    %v1707 = vlaneseq
    %v1708 = vshrl.u32 %v1707, 7
    %v1709 = vsub.s32 0, %v1708
    %v1710 = vrot.slane %v1705, %v1709
    %1712 = vmatprep.subr.mxu0 0.0
    %1713 = vmatpush1.msra.mxu0 %v1700
    %1714 = vmatprep.subr.mxu0 0.0
    %1715 = vmatpush1.msra.mxu0 %v1701
    %1716 = vmatprep.subr.mxu0 0.0
    %1717 = vmatpush1.msra.mxu0 %v1702
    %1718 = vmatprep.subr.mxu0 0.0
    %1719 = vmatpush1.msra.mxu0 %v1703
    %1720 = vmatprep.subr.mxu0 0.0
    %1721 = vmatpush1.msra.mxu0 0.0
    %1722 = vmatprep.subr.mxu0 0.0
    %1723 = vmatpush1.msra.mxu0 0.0
    %1724 = vmatprep.subr.mxu0 0.0
    %1725 = vmatpush1.msra.mxu0 0.0
    %1726 = vmatprep.subr.mxu0 0.0
    %1727 = vmatpush1.msra.mxu0 0.0
    %1728 = vmatprep.subr.mxu0 0.0
    %1729 = vmatpush1.msra.mxu0 0.0
    %1730 = vmatprep.subr.mxu0 0.0
    %1731 = vmatpush1.msra.mxu0 0.0
    %1732 = vmatprep.subr.mxu0 0.0
    %1733 = vmatpush1.msra.mxu0 0.0
    %1734 = vmatprep.subr.mxu0 0.0
    %1735 = vmatpush1.msra.mxu0 0.0
    %1736 = vmatprep.subr.mxu0 0.0
    %1737 = vmatpush1.msra.mxu0 0.0
    %1738 = vmatprep.subr.mxu0 0.0
    %1739 = vmatpush1.msra.mxu0 0.0
    %1740 = vmatprep.subr.mxu0 0.0
    %1741 = vmatpush1.msra.mxu0 0.0
    %1742 = vmatprep.subr.mxu0 0.0
    %1743 = vmatpush1.msra.mxu0 0.0
    %1744 = vmatprep.subr.mxu0 0.0
    %1745 = vmatpush1.msra.mxu0 0.0
    %1746 = vmatprep.subr.mxu0 0.0
    %1747 = vmatpush1.msra.mxu0 0.0
    %1748 = vmatprep.subr.mxu0 0.0
    %1749 = vmatpush1.msra.mxu0 0.0
    %1750 = vmatprep.subr.mxu0 0.0
    %1751 = vmatpush1.msra.mxu0 0.0
    %1752 = vmatprep.subr.mxu0 0.0
    %1753 = vmatpush1.msra.mxu0 0.0
    %1754 = vmatprep.subr.mxu0 0.0
    %1755 = vmatpush1.msra.mxu0 0.0
    %1756 = vmatprep.subr.mxu0 0.0
    %1757 = vmatpush1.msra.mxu0 0.0
    %1758 = vmatprep.subr.mxu0 0.0
    %1759 = vmatpush1.msra.mxu0 0.0
    %1760 = vmatprep.subr.mxu0 0.0
    %1761 = vmatpush1.msra.mxu0 0.0
    %1762 = vmatprep.subr.mxu0 0.0
    %1763 = vmatpush1.msra.mxu0 0.0
    %1764 = vmatprep.subr.mxu0 0.0
    %1765 = vmatpush1.msra.mxu0 0.0
    %1766 = vmatprep.subr.mxu0 0.0
    %1767 = vmatpush1.msra.mxu0 0.0
    %1768 = vmatprep.subr.mxu0 0.0
    %1769 = vmatpush1.msra.mxu0 0.0
    %1770 = vmatprep.subr.mxu0 0.0
    %1771 = vmatpush1.msra.mxu0 0.0
    %1772 = vmatprep.subr.mxu0 0.0
    %1773 = vmatpush1.msra.mxu0 0.0
    %1774 = vmatprep.subr.mxu0 0.0
    %1775 = vmatpush1.msra.mxu0 0.0
    %1776 = vmatprep.mubr.f32.mxu0 0.0
    %1777 = vmatmul.mubr.f32.gmra.mrb[0].mxu0 %v164
    %v1778 = vpop.f32.mrb[0].mxu0
    %v1779 = vadd.f32 %v1710, %v1778
    %v1780 = vpop.f32.mrb[0].mxu0
    %1781 = vmatprep.mubr.f32.mxu0 0.0
    %1782 = vmatmul.mubr.f32.gmra.mrb[0].mxu0 %v167
    %v1783 = vpop.f32.mrb[0].mxu0
    %v1784 = vadd.f32 %v1710, %v1783
    %v1785 = vpop.f32.mrb[0].mxu0
    %1786 = vmatprep.mubr.f32.mxu0 0.0
    %1787 = vmatmul.mubr.f32.gmra.mrb[0].mxu0 %v170
    %v1788 = vpop.f32.mrb[0].mxu0
    %v1789 = vadd.f32 %v1710, %v1788
    %v1790 = vpop.f32.mrb[0].mxu0
    %1791 = vmatprep.mubr.f32.mxu0 0.0
    %1792 = vmatmul.mubr.f32.gmra.mrb[0].mxu0 %v173
    %v1793 = vpop.f32.mrb[0].mxu0
    %v1794 = vadd.f32 %v1710, %v1793
    %v1795 = vpop.f32.mrb[0].mxu0
    %1796 = vdwg.mxu0
    %s1797 = scalar_lea.vmem %s4, 320
    %v1798 = vld [vmem:[%s1797] sm:$0xff]
    %v1799 = vld [vmem:[%s1797 + $0x8] sm:$0xff]
    %v1800 = vld [vmem:[%s1797 + $0x10] sm:$0xff]
    %v1801 = vld [vmem:[%s1797 + $0x18] sm:$0xff]
    %s1802 = scalar_lea.vmem %s6, 10
    %v1803 = vld [vmem:[%s1802] sm:$0x1]
    %v1805 = vlaneseq
    %v1806 = vshrl.u32 %v1805, 7
    %v1807 = vsub.s32 0, %v1806
    %v1808 = vrot.slane %v1803, %v1807
    %1810 = vmatprep.subr.mxu0 0.0
    %1811 = vmatpush1.msra.mxu0 %v1798
    %1812 = vmatprep.subr.mxu0 0.0
    %1813 = vmatpush1.msra.mxu0 %v1799
    %1814 = vmatprep.subr.mxu0 0.0
    %1815 = vmatpush1.msra.mxu0 %v1800
    %1816 = vmatprep.subr.mxu0 0.0
    %1817 = vmatpush1.msra.mxu0 %v1801
    %1818 = vmatprep.subr.mxu0 0.0
    %1819 = vmatpush1.msra.mxu0 0.0
    %1820 = vmatprep.subr.mxu0 0.0
    %1821 = vmatpush1.msra.mxu0 0.0
    %1822 = vmatprep.subr.mxu0 0.0
    %1823 = vmatpush1.msra.mxu0 0.0
    %1824 = vmatprep.subr.mxu0 0.0
    %1825 = vmatpush1.msra.mxu0 0.0
    %1826 = vmatprep.subr.mxu0 0.0
    %1827 = vmatpush1.msra.mxu0 0.0
    %1828 = vmatprep.subr.mxu0 0.0
    %1829 = vmatpush1.msra.mxu0 0.0
    %1830 = vmatprep.subr.mxu0 0.0
    %1831 = vmatpush1.msra.mxu0 0.0
    %1832 = vmatprep.subr.mxu0 0.0
    %1833 = vmatpush1.msra.mxu0 0.0
    %1834 = vmatprep.subr.mxu0 0.0
    %1835 = vmatpush1.msra.mxu0 0.0
    %1836 = vmatprep.subr.mxu0 0.0
    %1837 = vmatpush1.msra.mxu0 0.0
    %1838 = vmatprep.subr.mxu0 0.0
    %1839 = vmatpush1.msra.mxu0 0.0
    %1840 = vmatprep.subr.mxu0 0.0
    %1841 = vmatpush1.msra.mxu0 0.0
    %1842 = vmatprep.subr.mxu0 0.0
    %1843 = vmatpush1.msra.mxu0 0.0
    %1844 = vmatprep.subr.mxu0 0.0
    %1845 = vmatpush1.msra.mxu0 0.0
    %1846 = vmatprep.subr.mxu0 0.0
    %1847 = vmatpush1.msra.mxu0 0.0
    %1848 = vmatprep.subr.mxu0 0.0
    %1849 = vmatpush1.msra.mxu0 0.0
    %1850 = vmatprep.subr.mxu0 0.0
    %1851 = vmatpush1.msra.mxu0 0.0
    %1852 = vmatprep.subr.mxu0 0.0
    %1853 = vmatpush1.msra.mxu0 0.0
    %1854 = vmatprep.subr.mxu0 0.0
    %1855 = vmatpush1.msra.mxu0 0.0
    %1856 = vmatprep.subr.mxu0 0.0
    %1857 = vmatpush1.msra.mxu0 0.0
    %1858 = vmatprep.subr.mxu0 0.0
    %1859 = vmatpush1.msra.mxu0 0.0
    %1860 = vmatprep.subr.mxu0 0.0
    %1861 = vmatpush1.msra.mxu0 0.0
    %1862 = vmatprep.subr.mxu0 0.0
    %1863 = vmatpush1.msra.mxu0 0.0
    %1864 = vmatprep.subr.mxu0 0.0
    %1865 = vmatpush1.msra.mxu0 0.0
    %1866 = vmatprep.subr.mxu0 0.0
    %1867 = vmatpush1.msra.mxu0 0.0
    %1868 = vmatprep.subr.mxu0 0.0
    %1869 = vmatpush1.msra.mxu0 0.0
    %1870 = vmatprep.subr.mxu0 0.0
    %1871 = vmatpush1.msra.mxu0 0.0
    %1872 = vmatprep.subr.mxu0 0.0
    %1873 = vmatpush1.msra.mxu0 0.0
    %1874 = vmatprep.mubr.f32.mxu0 0.0
    %1875 = vmatmul.mubr.f32.gmra.mrb[0].mxu0 %v274
    %v1876 = vpop.f32.mrb[0].mxu0
    %v1877 = vadd.f32 %v1808, %v1876
    %v1878 = vpop.f32.mrb[0].mxu0
    %1879 = vmatprep.mubr.f32.mxu0 0.0
    %1880 = vmatmul.mubr.f32.gmra.mrb[0].mxu0 %v277
    %v1881 = vpop.f32.mrb[0].mxu0
    %v1882 = vadd.f32 %v1808, %v1881
    %v1883 = vpop.f32.mrb[0].mxu0
    %1884 = vmatprep.mubr.f32.mxu0 0.0
    %1885 = vmatmul.mubr.f32.gmra.mrb[0].mxu0 %v280
    %v1886 = vpop.f32.mrb[0].mxu0
    %v1887 = vadd.f32 %v1808, %v1886
    %v1888 = vpop.f32.mrb[0].mxu0
    %1889 = vmatprep.mubr.f32.mxu0 0.0
    %1890 = vmatmul.mubr.f32.gmra.mrb[0].mxu0 %v283
    %v1891 = vpop.f32.mrb[0].mxu0
    %v1892 = vadd.f32 %v1808, %v1891
    %v1893 = vpop.f32.mrb[0].mxu0
    %1894 = vdwg.mxu0
    %s1895 = scalar_lea.vmem %s5, 16
    %v1896 = vld [vmem:[%s1895] sm:$0xff]
    %v1898 = vsel %vm371, %v1691, 0
    %v1901 = vsel %vm371, %v1779, 0
    %v1904 = vsel %vm371, %v1784, 0
    %1906 = vmatprep.subr.mxu0 0.0
    %1907 = vmatpush1.xpose.msra.mxu0 %v1901
    %1908 = vmatprep.subr.mxu0 0.0
    %1909 = vmatpush1.xpose.msra.mxu0 %v1904
    %1910 = vmatprep.subr.mxu0 0.0
    %1911 = vmatpush1.xpose.msra.mxu0 0.0
    %1912 = vmatprep.subr.mxu0 0.0
    %1913 = vmatpush1.xpose.msra.mxu0 0.0
    %1914 = vmatprep.subr.mxu0 0.0
    %1915 = vmatpush1.xpose.msra.mxu0 0.0
    %1916 = vmatprep.subr.mxu0 0.0
    %1917 = vmatpush1.xpose.msra.mxu0 0.0
    %1918 = vmatprep.subr.mxu0 0.0
    %1919 = vmatpush1.xpose.msra.mxu0 0.0
    %1920 = vmatprep.subr.mxu0 0.0
    %1921 = vmatpush1.xpose.msra.mxu0 0.0
    %1922 = vmatprep.subr.mxu0 0.0
    %1923 = vmatpush1.xpose.msra.mxu0 0.0
    %1924 = vmatprep.subr.mxu0 0.0
    %1925 = vmatpush1.xpose.msra.mxu0 0.0
    %1926 = vmatprep.subr.mxu0 0.0
    %1927 = vmatpush1.xpose.msra.mxu0 0.0
    %1928 = vmatprep.subr.mxu0 0.0
    %1929 = vmatpush1.xpose.msra.mxu0 0.0
    %1930 = vmatprep.subr.mxu0 0.0
    %1931 = vmatpush1.xpose.msra.mxu0 0.0
    %1932 = vmatprep.subr.mxu0 0.0
    %1933 = vmatpush1.xpose.msra.mxu0 0.0
    %1934 = vmatprep.subr.mxu0 0.0
    %1935 = vmatpush1.xpose.msra.mxu0 0.0
    %1936 = vmatprep.subr.mxu0 0.0
    %1937 = vmatpush1.xpose.msra.mxu0 0.0
    %1938 = vmatprep.subr.mxu0 0.0
    %1939 = vmatpush1.xpose.msra.mxu0 0.0
    %1940 = vmatprep.subr.mxu0 0.0
    %1941 = vmatpush1.xpose.msra.mxu0 0.0
    %1942 = vmatprep.subr.mxu0 0.0
    %1943 = vmatpush1.xpose.msra.mxu0 0.0
    %1944 = vmatprep.subr.mxu0 0.0
    %1945 = vmatpush1.xpose.msra.mxu0 0.0
    %1946 = vmatprep.subr.mxu0 0.0
    %1947 = vmatpush1.xpose.msra.mxu0 0.0
    %1948 = vmatprep.subr.mxu0 0.0
    %1949 = vmatpush1.xpose.msra.mxu0 0.0
    %1950 = vmatprep.subr.mxu0 0.0
    %1951 = vmatpush1.xpose.msra.mxu0 0.0
    %1952 = vmatprep.subr.mxu0 0.0
    %1953 = vmatpush1.xpose.msra.mxu0 0.0
    %1954 = vmatprep.subr.mxu0 0.0
    %1955 = vmatpush1.xpose.msra.mxu0 0.0
    %1956 = vmatprep.subr.mxu0 0.0
    %1957 = vmatpush1.xpose.msra.mxu0 0.0
    %1958 = vmatprep.subr.mxu0 0.0
    %1959 = vmatpush1.xpose.msra.mxu0 0.0
    %1960 = vmatprep.subr.mxu0 0.0
    %1961 = vmatpush1.xpose.msra.mxu0 0.0
    %1962 = vmatprep.subr.mxu0 0.0
    %1963 = vmatpush1.xpose.msra.mxu0 0.0
    %1964 = vmatprep.subr.mxu0 0.0
    %1965 = vmatpush1.xpose.msra.mxu0 0.0
    %1966 = vmatprep.subr.mxu0 0.0
    %1967 = vmatpush1.xpose.msra.mxu0 0.0
    %1968 = vmatprep.subr.mxu0 0.0
    %1969 = vmatpush1.xpose.msra.mxu0 0.0
    %1970 = vmatprep.mubr.f32.mxu0 0.0
    %1971 = vmatmul.mubr.f32.gmra.mrb[0].mxu0 %v1898
    %v1972 = vpop.f32.mrb[0].mxu0
    %v1973 = vadd.f32 0.0, %v1972
    %v1974 = vpop.f32.mrb[0].mxu0
    %1975 = vdwg.mxu0
    %v1976 = vsel %vm451, %v1973, -inf
    %1977 = vmax.xlane.f32.xlu0 %v1976
    %v1978 = vpop.xlane.xlu0 %1977
    %v1979 = vsub.f32 %v1973, %v1978
    %v1980 = vmul.f32 %v1979, 1.442695
    %v1981 = vpow.pop %v1980
    %v1982 = vsel %vm451, %v1981, 0.0
    %1983 = vadd.xlane.f32.xlu0 %v1982
    %v1984 = vpop.xlane.xlu0 %1983
    %v1985 = vrcp.pop %v1984
    %v1986 = vmul.f32 1.0, %v1985
    %v1987 = vmul.f32 %v1981, %v1986
    %v1989 = vsel %vm451, %v1987, 0
    %1991 = vmatprep.subr.mxu0 0.0
    %1992 = vmatpush1.msra.mxu0 %v1877
    %1993 = vmatprep.subr.mxu0 0.0
    %1994 = vmatpush1.msra.mxu0 %v1882
    %1995 = vmatprep.subr.mxu0 0.0
    %1996 = vmatpush1.msra.mxu0 0.0
    %1997 = vmatprep.subr.mxu0 0.0
    %1998 = vmatpush1.msra.mxu0 0.0
    %1999 = vmatprep.subr.mxu0 0.0
    %2000 = vmatpush1.msra.mxu0 0.0
    %2001 = vmatprep.subr.mxu0 0.0
    %2002 = vmatpush1.msra.mxu0 0.0
    %2003 = vmatprep.subr.mxu0 0.0
    %2004 = vmatpush1.msra.mxu0 0.0
    %2005 = vmatprep.subr.mxu0 0.0
    %2006 = vmatpush1.msra.mxu0 0.0
    %2007 = vmatprep.subr.mxu0 0.0
    %2008 = vmatpush1.msra.mxu0 0.0
    %2009 = vmatprep.subr.mxu0 0.0
    %2010 = vmatpush1.msra.mxu0 0.0
    %2011 = vmatprep.subr.mxu0 0.0
    %2012 = vmatpush1.msra.mxu0 0.0
    %2013 = vmatprep.subr.mxu0 0.0
    %2014 = vmatpush1.msra.mxu0 0.0
    %2015 = vmatprep.subr.mxu0 0.0
    %2016 = vmatpush1.msra.mxu0 0.0
    %2017 = vmatprep.subr.mxu0 0.0
    %2018 = vmatpush1.msra.mxu0 0.0
    %2019 = vmatprep.subr.mxu0 0.0
    %2020 = vmatpush1.msra.mxu0 0.0
    %2021 = vmatprep.subr.mxu0 0.0
    %2022 = vmatpush1.msra.mxu0 0.0
    %2023 = vmatprep.subr.mxu0 0.0
    %2024 = vmatpush1.msra.mxu0 0.0
    %2025 = vmatprep.subr.mxu0 0.0
    %2026 = vmatpush1.msra.mxu0 0.0
    %2027 = vmatprep.subr.mxu0 0.0
    %2028 = vmatpush1.msra.mxu0 0.0
    %2029 = vmatprep.subr.mxu0 0.0
    %2030 = vmatpush1.msra.mxu0 0.0
    %2031 = vmatprep.subr.mxu0 0.0
    %2032 = vmatpush1.msra.mxu0 0.0
    %2033 = vmatprep.subr.mxu0 0.0
    %2034 = vmatpush1.msra.mxu0 0.0
    %2035 = vmatprep.subr.mxu0 0.0
    %2036 = vmatpush1.msra.mxu0 0.0
    %2037 = vmatprep.subr.mxu0 0.0
    %2038 = vmatpush1.msra.mxu0 0.0
    %2039 = vmatprep.subr.mxu0 0.0
    %2040 = vmatpush1.msra.mxu0 0.0
    %2041 = vmatprep.subr.mxu0 0.0
    %2042 = vmatpush1.msra.mxu0 0.0
    %2043 = vmatprep.subr.mxu0 0.0
    %2044 = vmatpush1.msra.mxu0 0.0
    %2045 = vmatprep.subr.mxu0 0.0
    %2046 = vmatpush1.msra.mxu0 0.0
    %2047 = vmatprep.subr.mxu0 0.0
    %2048 = vmatpush1.msra.mxu0 0.0
    %2049 = vmatprep.subr.mxu0 0.0
    %2050 = vmatpush1.msra.mxu0 0.0
    %2051 = vmatprep.subr.mxu0 0.0
    %2052 = vmatpush1.msra.mxu0 0.0
    %2053 = vmatprep.subr.mxu0 0.0
    %2054 = vmatpush1.msra.mxu0 0.0
    %2055 = vmatprep.mubr.f32.mxu0 0.0
    %2056 = vmatmul.mubr.f32.gmra.mrb[0].mxu0 %v1989
    %v2057 = vpop.f32.mrb[0].mxu0
    %v2058 = vadd.f32 0.0, %v2057
    %v2059 = vpop.f32.mrb[0].mxu0
    %2060 = vdwg.mxu0
    %v2062 = vsel %vm371, %v2058, 0
    %2064 = vmatprep.subr.mxu0 0.0
    %2065 = vmatpush1.msra.mxu0 %v1896
    %2066 = vmatprep.subr.mxu0 0.0
    %2067 = vmatpush1.msra.mxu0 0.0
    %2068 = vmatprep.subr.mxu0 0.0
    %2069 = vmatpush1.msra.mxu0 0.0
    %2070 = vmatprep.subr.mxu0 0.0
    %2071 = vmatpush1.msra.mxu0 0.0
    %2072 = vmatprep.subr.mxu0 0.0
    %2073 = vmatpush1.msra.mxu0 0.0
    %2074 = vmatprep.subr.mxu0 0.0
    %2075 = vmatpush1.msra.mxu0 0.0
    %2076 = vmatprep.subr.mxu0 0.0
    %2077 = vmatpush1.msra.mxu0 0.0
    %2078 = vmatprep.subr.mxu0 0.0
    %2079 = vmatpush1.msra.mxu0 0.0
    %2080 = vmatprep.subr.mxu0 0.0
    %2081 = vmatpush1.msra.mxu0 0.0
    %2082 = vmatprep.subr.mxu0 0.0
    %2083 = vmatpush1.msra.mxu0 0.0
    %2084 = vmatprep.subr.mxu0 0.0
    %2085 = vmatpush1.msra.mxu0 0.0
    %2086 = vmatprep.subr.mxu0 0.0
    %2087 = vmatpush1.msra.mxu0 0.0
    %2088 = vmatprep.subr.mxu0 0.0
    %2089 = vmatpush1.msra.mxu0 0.0
    %2090 = vmatprep.subr.mxu0 0.0
    %2091 = vmatpush1.msra.mxu0 0.0
    %2092 = vmatprep.subr.mxu0 0.0
    %2093 = vmatpush1.msra.mxu0 0.0
    %2094 = vmatprep.subr.mxu0 0.0
    %2095 = vmatpush1.msra.mxu0 0.0
    %2096 = vmatprep.subr.mxu0 0.0
    %2097 = vmatpush1.msra.mxu0 0.0
    %2098 = vmatprep.subr.mxu0 0.0
    %2099 = vmatpush1.msra.mxu0 0.0
    %2100 = vmatprep.subr.mxu0 0.0
    %2101 = vmatpush1.msra.mxu0 0.0
    %2102 = vmatprep.subr.mxu0 0.0
    %2103 = vmatpush1.msra.mxu0 0.0
    %2104 = vmatprep.subr.mxu0 0.0
    %2105 = vmatpush1.msra.mxu0 0.0
    %2106 = vmatprep.subr.mxu0 0.0
    %2107 = vmatpush1.msra.mxu0 0.0
    %2108 = vmatprep.subr.mxu0 0.0
    %2109 = vmatpush1.msra.mxu0 0.0
    %2110 = vmatprep.subr.mxu0 0.0
    %2111 = vmatpush1.msra.mxu0 0.0
    %2112 = vmatprep.subr.mxu0 0.0
    %2113 = vmatpush1.msra.mxu0 0.0
    %2114 = vmatprep.subr.mxu0 0.0
    %2115 = vmatpush1.msra.mxu0 0.0
    %2116 = vmatprep.subr.mxu0 0.0
    %2117 = vmatpush1.msra.mxu0 0.0
    %2118 = vmatprep.subr.mxu0 0.0
    %2119 = vmatpush1.msra.mxu0 0.0
    %2120 = vmatprep.subr.mxu0 0.0
    %2121 = vmatpush1.msra.mxu0 0.0
    %2122 = vmatprep.subr.mxu0 0.0
    %2123 = vmatpush1.msra.mxu0 0.0
    %2124 = vmatprep.subr.mxu0 0.0
    %2125 = vmatpush1.msra.mxu0 0.0
    %2126 = vmatprep.subr.mxu0 0.0
    %2127 = vmatpush1.msra.mxu0 0.0
    %2128 = vmatprep.mubr.f32.mxu0 0.0
    %2129 = vmatmul.mubr.f32.gmra.mrb[0].mxu0 %v2062
    %v2130 = vpop.f32.mrb[0].mxu0
    %v2131 = vadd.f32 0.0, %v2130
    %v2132 = vpop.f32.mrb[0].mxu0
    %2133 = vdwg.mxu0
    %v2134 = vadd.f32 %v1372, %v2131
    %v2136 = vsel %vm371, %v1696, 0
    %v2139 = vsel %vm371, %v1789, 0
    %v2142 = vsel %vm371, %v1794, 0
    %2144 = vmatprep.subr.mxu0 0.0
    %2145 = vmatpush1.xpose.msra.mxu0 %v2139
    %2146 = vmatprep.subr.mxu0 0.0
    %2147 = vmatpush1.xpose.msra.mxu0 %v2142
    %2148 = vmatprep.subr.mxu0 0.0
    %2149 = vmatpush1.xpose.msra.mxu0 0.0
    %2150 = vmatprep.subr.mxu0 0.0
    %2151 = vmatpush1.xpose.msra.mxu0 0.0
    %2152 = vmatprep.subr.mxu0 0.0
    %2153 = vmatpush1.xpose.msra.mxu0 0.0
    %2154 = vmatprep.subr.mxu0 0.0
    %2155 = vmatpush1.xpose.msra.mxu0 0.0
    %2156 = vmatprep.subr.mxu0 0.0
    %2157 = vmatpush1.xpose.msra.mxu0 0.0
    %2158 = vmatprep.subr.mxu0 0.0
    %2159 = vmatpush1.xpose.msra.mxu0 0.0
    %2160 = vmatprep.subr.mxu0 0.0
    %2161 = vmatpush1.xpose.msra.mxu0 0.0
    %2162 = vmatprep.subr.mxu0 0.0
    %2163 = vmatpush1.xpose.msra.mxu0 0.0
    %2164 = vmatprep.subr.mxu0 0.0
    %2165 = vmatpush1.xpose.msra.mxu0 0.0
    %2166 = vmatprep.subr.mxu0 0.0
    %2167 = vmatpush1.xpose.msra.mxu0 0.0
    %2168 = vmatprep.subr.mxu0 0.0
    %2169 = vmatpush1.xpose.msra.mxu0 0.0
    %2170 = vmatprep.subr.mxu0 0.0
    %2171 = vmatpush1.xpose.msra.mxu0 0.0
    %2172 = vmatprep.subr.mxu0 0.0
    %2173 = vmatpush1.xpose.msra.mxu0 0.0
    %2174 = vmatprep.subr.mxu0 0.0
    %2175 = vmatpush1.xpose.msra.mxu0 0.0
    %2176 = vmatprep.subr.mxu0 0.0
    %2177 = vmatpush1.xpose.msra.mxu0 0.0
    %2178 = vmatprep.subr.mxu0 0.0
    %2179 = vmatpush1.xpose.msra.mxu0 0.0
    %2180 = vmatprep.subr.mxu0 0.0
    %2181 = vmatpush1.xpose.msra.mxu0 0.0
    %2182 = vmatprep.subr.mxu0 0.0
    %2183 = vmatpush1.xpose.msra.mxu0 0.0
    %2184 = vmatprep.subr.mxu0 0.0
    %2185 = vmatpush1.xpose.msra.mxu0 0.0
    %2186 = vmatprep.subr.mxu0 0.0
    %2187 = vmatpush1.xpose.msra.mxu0 0.0
    %2188 = vmatprep.subr.mxu0 0.0
    %2189 = vmatpush1.xpose.msra.mxu0 0.0
    %2190 = vmatprep.subr.mxu0 0.0
    %2191 = vmatpush1.xpose.msra.mxu0 0.0
    %2192 = vmatprep.subr.mxu0 0.0
    %2193 = vmatpush1.xpose.msra.mxu0 0.0
    %2194 = vmatprep.subr.mxu0 0.0
    %2195 = vmatpush1.xpose.msra.mxu0 0.0
    %2196 = vmatprep.subr.mxu0 0.0
    %2197 = vmatpush1.xpose.msra.mxu0 0.0
    %2198 = vmatprep.subr.mxu0 0.0
    %2199 = vmatpush1.xpose.msra.mxu0 0.0
    %2200 = vmatprep.subr.mxu0 0.0
    %2201 = vmatpush1.xpose.msra.mxu0 0.0
    %2202 = vmatprep.subr.mxu0 0.0
    %2203 = vmatpush1.xpose.msra.mxu0 0.0
    %2204 = vmatprep.subr.mxu0 0.0
    %2205 = vmatpush1.xpose.msra.mxu0 0.0
    %2206 = vmatprep.subr.mxu0 0.0
    %2207 = vmatpush1.xpose.msra.mxu0 0.0
    %2208 = vmatprep.mubr.f32.mxu0 0.0
    %2209 = vmatmul.mubr.f32.gmra.mrb[0].mxu0 %v2136
    %v2210 = vpop.f32.mrb[0].mxu0
    %v2211 = vadd.f32 0.0, %v2210
    %v2212 = vpop.f32.mrb[0].mxu0
    %2213 = vdwg.mxu0
    %v2214 = vsel %vm451, %v2211, -inf
    %2215 = vmax.xlane.f32.xlu0 %v2214
    %v2216 = vpop.xlane.xlu0 %2215
    %v2217 = vsub.f32 %v2211, %v2216
    %v2218 = vmul.f32 %v2217, 1.442695
    %v2219 = vpow.pop %v2218
    %v2220 = vsel %vm451, %v2219, 0.0
    %2221 = vadd.xlane.f32.xlu0 %v2220
    %v2222 = vpop.xlane.xlu0 %2221
    %v2223 = vrcp.pop %v2222
    %v2224 = vmul.f32 1.0, %v2223
    %v2225 = vmul.f32 %v2219, %v2224
    %v2227 = vsel %vm451, %v2225, 0
    %2229 = vmatprep.subr.mxu0 0.0
    %2230 = vmatpush1.msra.mxu0 %v1887
    %2231 = vmatprep.subr.mxu0 0.0
    %2232 = vmatpush1.msra.mxu0 %v1892
    %2233 = vmatprep.subr.mxu0 0.0
    %2234 = vmatpush1.msra.mxu0 0.0
    %2235 = vmatprep.subr.mxu0 0.0
    %2236 = vmatpush1.msra.mxu0 0.0
    %2237 = vmatprep.subr.mxu0 0.0
    %2238 = vmatpush1.msra.mxu0 0.0
    %2239 = vmatprep.subr.mxu0 0.0
    %2240 = vmatpush1.msra.mxu0 0.0
    %2241 = vmatprep.subr.mxu0 0.0
    %2242 = vmatpush1.msra.mxu0 0.0
    %2243 = vmatprep.subr.mxu0 0.0
    %2244 = vmatpush1.msra.mxu0 0.0
    %2245 = vmatprep.subr.mxu0 0.0
    %2246 = vmatpush1.msra.mxu0 0.0
    %2247 = vmatprep.subr.mxu0 0.0
    %2248 = vmatpush1.msra.mxu0 0.0
    %2249 = vmatprep.subr.mxu0 0.0
    %2250 = vmatpush1.msra.mxu0 0.0
    %2251 = vmatprep.subr.mxu0 0.0
    %2252 = vmatpush1.msra.mxu0 0.0
    %2253 = vmatprep.subr.mxu0 0.0
    %2254 = vmatpush1.msra.mxu0 0.0
    %2255 = vmatprep.subr.mxu0 0.0
    %2256 = vmatpush1.msra.mxu0 0.0
    %2257 = vmatprep.subr.mxu0 0.0
    %2258 = vmatpush1.msra.mxu0 0.0
    %2259 = vmatprep.subr.mxu0 0.0
    %2260 = vmatpush1.msra.mxu0 0.0
    %2261 = vmatprep.subr.mxu0 0.0
    %2262 = vmatpush1.msra.mxu0 0.0
    %2263 = vmatprep.subr.mxu0 0.0
    %2264 = vmatpush1.msra.mxu0 0.0
    %2265 = vmatprep.subr.mxu0 0.0
    %2266 = vmatpush1.msra.mxu0 0.0
    %2267 = vmatprep.subr.mxu0 0.0
    %2268 = vmatpush1.msra.mxu0 0.0
    %2269 = vmatprep.subr.mxu0 0.0
    %2270 = vmatpush1.msra.mxu0 0.0
    %2271 = vmatprep.subr.mxu0 0.0
    %2272 = vmatpush1.msra.mxu0 0.0
    %2273 = vmatprep.subr.mxu0 0.0
    %2274 = vmatpush1.msra.mxu0 0.0
    %2275 = vmatprep.subr.mxu0 0.0
    %2276 = vmatpush1.msra.mxu0 0.0
    %2277 = vmatprep.subr.mxu0 0.0
    %2278 = vmatpush1.msra.mxu0 0.0
    %2279 = vmatprep.subr.mxu0 0.0
    %2280 = vmatpush1.msra.mxu0 0.0
    %2281 = vmatprep.subr.mxu0 0.0
    %2282 = vmatpush1.msra.mxu0 0.0
    %2283 = vmatprep.subr.mxu0 0.0
    %2284 = vmatpush1.msra.mxu0 0.0
    %2285 = vmatprep.subr.mxu0 0.0
    %2286 = vmatpush1.msra.mxu0 0.0
    %2287 = vmatprep.subr.mxu0 0.0
    %2288 = vmatpush1.msra.mxu0 0.0
    %2289 = vmatprep.subr.mxu0 0.0
    %2290 = vmatpush1.msra.mxu0 0.0
    %2291 = vmatprep.subr.mxu0 0.0
    %2292 = vmatpush1.msra.mxu0 0.0
    %2293 = vmatprep.mubr.f32.mxu0 0.0
    %2294 = vmatmul.mubr.f32.gmra.mrb[0].mxu0 %v2227
    %v2295 = vpop.f32.mrb[0].mxu0
    %v2296 = vadd.f32 0.0, %v2295
    %v2297 = vpop.f32.mrb[0].mxu0
    %2298 = vdwg.mxu0
    %v2300 = vsel %vm371, %v2296, 0
    %2302 = vmatprep.subr.mxu0 0.0
    %2303 = vmatpush1.msra.mxu0 %v1896
    %2304 = vmatprep.subr.mxu0 0.0
    %2305 = vmatpush1.msra.mxu0 0.0
    %2306 = vmatprep.subr.mxu0 0.0
    %2307 = vmatpush1.msra.mxu0 0.0
    %2308 = vmatprep.subr.mxu0 0.0
    %2309 = vmatpush1.msra.mxu0 0.0
    %2310 = vmatprep.subr.mxu0 0.0
    %2311 = vmatpush1.msra.mxu0 0.0
    %2312 = vmatprep.subr.mxu0 0.0
    %2313 = vmatpush1.msra.mxu0 0.0
    %2314 = vmatprep.subr.mxu0 0.0
    %2315 = vmatpush1.msra.mxu0 0.0
    %2316 = vmatprep.subr.mxu0 0.0
    %2317 = vmatpush1.msra.mxu0 0.0
    %2318 = vmatprep.subr.mxu0 0.0
    %2319 = vmatpush1.msra.mxu0 0.0
    %2320 = vmatprep.subr.mxu0 0.0
    %2321 = vmatpush1.msra.mxu0 0.0
    %2322 = vmatprep.subr.mxu0 0.0
    %2323 = vmatpush1.msra.mxu0 0.0
    %2324 = vmatprep.subr.mxu0 0.0
    %2325 = vmatpush1.msra.mxu0 0.0
    %2326 = vmatprep.subr.mxu0 0.0
    %2327 = vmatpush1.msra.mxu0 0.0
    %2328 = vmatprep.subr.mxu0 0.0
    %2329 = vmatpush1.msra.mxu0 0.0
    %2330 = vmatprep.subr.mxu0 0.0
    %2331 = vmatpush1.msra.mxu0 0.0
    %2332 = vmatprep.subr.mxu0 0.0
    %2333 = vmatpush1.msra.mxu0 0.0
    %2334 = vmatprep.subr.mxu0 0.0
    %2335 = vmatpush1.msra.mxu0 0.0
    %2336 = vmatprep.subr.mxu0 0.0
    %2337 = vmatpush1.msra.mxu0 0.0
    %2338 = vmatprep.subr.mxu0 0.0
    %2339 = vmatpush1.msra.mxu0 0.0
    %2340 = vmatprep.subr.mxu0 0.0
    %2341 = vmatpush1.msra.mxu0 0.0
    %2342 = vmatprep.subr.mxu0 0.0
    %2343 = vmatpush1.msra.mxu0 0.0
    %2344 = vmatprep.subr.mxu0 0.0
    %2345 = vmatpush1.msra.mxu0 0.0
    %2346 = vmatprep.subr.mxu0 0.0
    %2347 = vmatpush1.msra.mxu0 0.0
    %2348 = vmatprep.subr.mxu0 0.0
    %2349 = vmatpush1.msra.mxu0 0.0
    %2350 = vmatprep.subr.mxu0 0.0
    %2351 = vmatpush1.msra.mxu0 0.0
    %2352 = vmatprep.subr.mxu0 0.0
    %2353 = vmatpush1.msra.mxu0 0.0
    %2354 = vmatprep.subr.mxu0 0.0
    %2355 = vmatpush1.msra.mxu0 0.0
    %2356 = vmatprep.subr.mxu0 0.0
    %2357 = vmatpush1.msra.mxu0 0.0
    %2358 = vmatprep.subr.mxu0 0.0
    %2359 = vmatpush1.msra.mxu0 0.0
    %2360 = vmatprep.subr.mxu0 0.0
    %2361 = vmatpush1.msra.mxu0 0.0
    %2362 = vmatprep.subr.mxu0 0.0
    %2363 = vmatpush1.msra.mxu0 0.0
    %2364 = vmatprep.subr.mxu0 0.0
    %2365 = vmatpush1.msra.mxu0 0.0
    %2366 = vmatprep.mubr.f32.mxu0 0.0
    %2367 = vmatmul.mubr.f32.gmra.mrb[0].mxu0 %v2300
    %v2368 = vpop.f32.mrb[0].mxu0
    %v2369 = vadd.f32 0.0, %v2368
    %v2370 = vpop.f32.mrb[0].mxu0
    %2371 = vdwg.mxu0
    %v2372 = vadd.f32 %v1610, %v2369
    %s2373 = scalar_lea.vmem %s4, 96
    %v2374 = vld [vmem:[%s2373] sm:$0xff]
    %v2375 = vld [vmem:[%s2373 + $0x8] sm:$0xff]
    %v2376 = vld [vmem:[%s2373 + $0x10] sm:$0xff]
    %v2377 = vld [vmem:[%s2373 + $0x18] sm:$0xff]
    %s2378 = scalar_lea.vmem %s6, 3
    %v2379 = vld [vmem:[%s2378] sm:$0x1]
    %v2381 = vlaneseq
    %v2382 = vshrl.u32 %v2381, 7
    %v2383 = vsub.s32 0, %v2382
    %v2384 = vrot.slane %v2379, %v2383
    %2386 = vmatprep.subr.mxu0 0.0
    %2387 = vmatpush1.msra.mxu0 %v2374
    %2388 = vmatprep.subr.mxu0 0.0
    %2389 = vmatpush1.msra.mxu0 %v2375
    %2390 = vmatprep.subr.mxu0 0.0
    %2391 = vmatpush1.msra.mxu0 %v2376
    %2392 = vmatprep.subr.mxu0 0.0
    %2393 = vmatpush1.msra.mxu0 %v2377
    %2394 = vmatprep.subr.mxu0 0.0
    %2395 = vmatpush1.msra.mxu0 0.0
    %2396 = vmatprep.subr.mxu0 0.0
    %2397 = vmatpush1.msra.mxu0 0.0
    %2398 = vmatprep.subr.mxu0 0.0
    %2399 = vmatpush1.msra.mxu0 0.0
    %2400 = vmatprep.subr.mxu0 0.0
    %2401 = vmatpush1.msra.mxu0 0.0
    %2402 = vmatprep.subr.mxu0 0.0
    %2403 = vmatpush1.msra.mxu0 0.0
    %2404 = vmatprep.subr.mxu0 0.0
    %2405 = vmatpush1.msra.mxu0 0.0
    %2406 = vmatprep.subr.mxu0 0.0
    %2407 = vmatpush1.msra.mxu0 0.0
    %2408 = vmatprep.subr.mxu0 0.0
    %2409 = vmatpush1.msra.mxu0 0.0
    %2410 = vmatprep.subr.mxu0 0.0
    %2411 = vmatpush1.msra.mxu0 0.0
    %2412 = vmatprep.subr.mxu0 0.0
    %2413 = vmatpush1.msra.mxu0 0.0
    %2414 = vmatprep.subr.mxu0 0.0
    %2415 = vmatpush1.msra.mxu0 0.0
    %2416 = vmatprep.subr.mxu0 0.0
    %2417 = vmatpush1.msra.mxu0 0.0
    %2418 = vmatprep.subr.mxu0 0.0
    %2419 = vmatpush1.msra.mxu0 0.0
    %2420 = vmatprep.subr.mxu0 0.0
    %2421 = vmatpush1.msra.mxu0 0.0
    %2422 = vmatprep.subr.mxu0 0.0
    %2423 = vmatpush1.msra.mxu0 0.0
    %2424 = vmatprep.subr.mxu0 0.0
    %2425 = vmatpush1.msra.mxu0 0.0
    %2426 = vmatprep.subr.mxu0 0.0
    %2427 = vmatpush1.msra.mxu0 0.0
    %2428 = vmatprep.subr.mxu0 0.0
    %2429 = vmatpush1.msra.mxu0 0.0
    %2430 = vmatprep.subr.mxu0 0.0
    %2431 = vmatpush1.msra.mxu0 0.0
    %2432 = vmatprep.subr.mxu0 0.0
    %2433 = vmatpush1.msra.mxu0 0.0
    %2434 = vmatprep.subr.mxu0 0.0
    %2435 = vmatpush1.msra.mxu0 0.0
    %2436 = vmatprep.subr.mxu0 0.0
    %2437 = vmatpush1.msra.mxu0 0.0
    %2438 = vmatprep.subr.mxu0 0.0
    %2439 = vmatpush1.msra.mxu0 0.0
    %2440 = vmatprep.subr.mxu0 0.0
    %2441 = vmatpush1.msra.mxu0 0.0
    %2442 = vmatprep.subr.mxu0 0.0
    %2443 = vmatpush1.msra.mxu0 0.0
    %2444 = vmatprep.subr.mxu0 0.0
    %2445 = vmatpush1.msra.mxu0 0.0
    %2446 = vmatprep.subr.mxu0 0.0
    %2447 = vmatpush1.msra.mxu0 0.0
    %2448 = vmatprep.subr.mxu0 0.0
    %2449 = vmatpush1.msra.mxu0 0.0
    %2450 = vmatprep.mubr.f32.mxu0 0.0
    %2451 = vmatmul.mubr.f32.gmra.mrb[0].mxu0 %v70
    %v2452 = vpop.f32.mrb[0].mxu0
    %v2453 = vadd.f32 %v2384, %v2452
    %v2454 = vpop.f32.mrb[0].mxu0
    %2455 = vmatprep.mubr.f32.mxu0 0.0
    %2456 = vmatmul.mubr.f32.gmra.mrb[0].mxu0 %v73
    %v2457 = vpop.f32.mrb[0].mxu0
    %v2458 = vadd.f32 %v2384, %v2457
    %v2459 = vpop.f32.mrb[0].mxu0
    %2460 = vdwg.mxu0
    %s2461 = scalar_lea.vmem %s4, 224
    %v2462 = vld [vmem:[%s2461] sm:$0xff]
    %v2463 = vld [vmem:[%s2461 + $0x8] sm:$0xff]
    %v2464 = vld [vmem:[%s2461 + $0x10] sm:$0xff]
    %v2465 = vld [vmem:[%s2461 + $0x18] sm:$0xff]
    %s2466 = scalar_lea.vmem %s6, 7
    %v2467 = vld [vmem:[%s2466] sm:$0x1]
    %v2469 = vlaneseq
    %v2470 = vshrl.u32 %v2469, 7
    %v2471 = vsub.s32 0, %v2470
    %v2472 = vrot.slane %v2467, %v2471
    %2474 = vmatprep.subr.mxu0 0.0
    %2475 = vmatpush1.msra.mxu0 %v2462
    %2476 = vmatprep.subr.mxu0 0.0
    %2477 = vmatpush1.msra.mxu0 %v2463
    %2478 = vmatprep.subr.mxu0 0.0
    %2479 = vmatpush1.msra.mxu0 %v2464
    %2480 = vmatprep.subr.mxu0 0.0
    %2481 = vmatpush1.msra.mxu0 %v2465
    %2482 = vmatprep.subr.mxu0 0.0
    %2483 = vmatpush1.msra.mxu0 0.0
    %2484 = vmatprep.subr.mxu0 0.0
    %2485 = vmatpush1.msra.mxu0 0.0
    %2486 = vmatprep.subr.mxu0 0.0
    %2487 = vmatpush1.msra.mxu0 0.0
    %2488 = vmatprep.subr.mxu0 0.0
    %2489 = vmatpush1.msra.mxu0 0.0
    %2490 = vmatprep.subr.mxu0 0.0
    %2491 = vmatpush1.msra.mxu0 0.0
    %2492 = vmatprep.subr.mxu0 0.0
    %2493 = vmatpush1.msra.mxu0 0.0
    %2494 = vmatprep.subr.mxu0 0.0
    %2495 = vmatpush1.msra.mxu0 0.0
    %2496 = vmatprep.subr.mxu0 0.0
    %2497 = vmatpush1.msra.mxu0 0.0
    %2498 = vmatprep.subr.mxu0 0.0
    %2499 = vmatpush1.msra.mxu0 0.0
    %2500 = vmatprep.subr.mxu0 0.0
    %2501 = vmatpush1.msra.mxu0 0.0
    %2502 = vmatprep.subr.mxu0 0.0
    %2503 = vmatpush1.msra.mxu0 0.0
    %2504 = vmatprep.subr.mxu0 0.0
    %2505 = vmatpush1.msra.mxu0 0.0
    %2506 = vmatprep.subr.mxu0 0.0
    %2507 = vmatpush1.msra.mxu0 0.0
    %2508 = vmatprep.subr.mxu0 0.0
    %2509 = vmatpush1.msra.mxu0 0.0
    %2510 = vmatprep.subr.mxu0 0.0
    %2511 = vmatpush1.msra.mxu0 0.0
    %2512 = vmatprep.subr.mxu0 0.0
    %2513 = vmatpush1.msra.mxu0 0.0
    %2514 = vmatprep.subr.mxu0 0.0
    %2515 = vmatpush1.msra.mxu0 0.0
    %2516 = vmatprep.subr.mxu0 0.0
    %2517 = vmatpush1.msra.mxu0 0.0
    %2518 = vmatprep.subr.mxu0 0.0
    %2519 = vmatpush1.msra.mxu0 0.0
    %2520 = vmatprep.subr.mxu0 0.0
    %2521 = vmatpush1.msra.mxu0 0.0
    %2522 = vmatprep.subr.mxu0 0.0
    %2523 = vmatpush1.msra.mxu0 0.0
    %2524 = vmatprep.subr.mxu0 0.0
    %2525 = vmatpush1.msra.mxu0 0.0
    %2526 = vmatprep.subr.mxu0 0.0
    %2527 = vmatpush1.msra.mxu0 0.0
    %2528 = vmatprep.subr.mxu0 0.0
    %2529 = vmatpush1.msra.mxu0 0.0
    %2530 = vmatprep.subr.mxu0 0.0
    %2531 = vmatpush1.msra.mxu0 0.0
    %2532 = vmatprep.subr.mxu0 0.0
    %2533 = vmatpush1.msra.mxu0 0.0
    %2534 = vmatprep.subr.mxu0 0.0
    %2535 = vmatpush1.msra.mxu0 0.0
    %2536 = vmatprep.subr.mxu0 0.0
    %2537 = vmatpush1.msra.mxu0 0.0
    %2538 = vmatprep.mubr.f32.mxu0 0.0
    %2539 = vmatmul.mubr.f32.gmra.mrb[0].mxu0 %v164
    %v2540 = vpop.f32.mrb[0].mxu0
    %v2541 = vadd.f32 %v2472, %v2540
    %v2542 = vpop.f32.mrb[0].mxu0
    %2543 = vmatprep.mubr.f32.mxu0 0.0
    %2544 = vmatmul.mubr.f32.gmra.mrb[0].mxu0 %v167
    %v2545 = vpop.f32.mrb[0].mxu0
    %v2546 = vadd.f32 %v2472, %v2545
    %v2547 = vpop.f32.mrb[0].mxu0
    %2548 = vmatprep.mubr.f32.mxu0 0.0
    %2549 = vmatmul.mubr.f32.gmra.mrb[0].mxu0 %v170
    %v2550 = vpop.f32.mrb[0].mxu0
    %v2551 = vadd.f32 %v2472, %v2550
    %v2552 = vpop.f32.mrb[0].mxu0
    %2553 = vmatprep.mubr.f32.mxu0 0.0
    %2554 = vmatmul.mubr.f32.gmra.mrb[0].mxu0 %v173
    %v2555 = vpop.f32.mrb[0].mxu0
    %v2556 = vadd.f32 %v2472, %v2555
    %v2557 = vpop.f32.mrb[0].mxu0
    %2558 = vdwg.mxu0
    %s2559 = scalar_lea.vmem %s4, 352
    %v2560 = vld [vmem:[%s2559] sm:$0xff]
    %v2561 = vld [vmem:[%s2559 + $0x8] sm:$0xff]
    %v2562 = vld [vmem:[%s2559 + $0x10] sm:$0xff]
    %v2563 = vld [vmem:[%s2559 + $0x18] sm:$0xff]
    %s2564 = scalar_lea.vmem %s6, 11
    %v2565 = vld [vmem:[%s2564] sm:$0x1]
    %v2567 = vlaneseq
    %v2568 = vshrl.u32 %v2567, 7
    %v2569 = vsub.s32 0, %v2568
    %v2570 = vrot.slane %v2565, %v2569
    %2572 = vmatprep.subr.mxu0 0.0
    %2573 = vmatpush1.msra.mxu0 %v2560
    %2574 = vmatprep.subr.mxu0 0.0
    %2575 = vmatpush1.msra.mxu0 %v2561
    %2576 = vmatprep.subr.mxu0 0.0
    %2577 = vmatpush1.msra.mxu0 %v2562
    %2578 = vmatprep.subr.mxu0 0.0
    %2579 = vmatpush1.msra.mxu0 %v2563
    %2580 = vmatprep.subr.mxu0 0.0
    %2581 = vmatpush1.msra.mxu0 0.0
    %2582 = vmatprep.subr.mxu0 0.0
    %2583 = vmatpush1.msra.mxu0 0.0
    %2584 = vmatprep.subr.mxu0 0.0
    %2585 = vmatpush1.msra.mxu0 0.0
    %2586 = vmatprep.subr.mxu0 0.0
    %2587 = vmatpush1.msra.mxu0 0.0
    %2588 = vmatprep.subr.mxu0 0.0
    %2589 = vmatpush1.msra.mxu0 0.0
    %2590 = vmatprep.subr.mxu0 0.0
    %2591 = vmatpush1.msra.mxu0 0.0
    %2592 = vmatprep.subr.mxu0 0.0
    %2593 = vmatpush1.msra.mxu0 0.0
    %2594 = vmatprep.subr.mxu0 0.0
    %2595 = vmatpush1.msra.mxu0 0.0
    %2596 = vmatprep.subr.mxu0 0.0
    %2597 = vmatpush1.msra.mxu0 0.0
    %2598 = vmatprep.subr.mxu0 0.0
    %2599 = vmatpush1.msra.mxu0 0.0
    %2600 = vmatprep.subr.mxu0 0.0
    %2601 = vmatpush1.msra.mxu0 0.0
    %2602 = vmatprep.subr.mxu0 0.0
    %2603 = vmatpush1.msra.mxu0 0.0
    %2604 = vmatprep.subr.mxu0 0.0
    %2605 = vmatpush1.msra.mxu0 0.0
    %2606 = vmatprep.subr.mxu0 0.0
    %2607 = vmatpush1.msra.mxu0 0.0
    %2608 = vmatprep.subr.mxu0 0.0
    %2609 = vmatpush1.msra.mxu0 0.0
    %2610 = vmatprep.subr.mxu0 0.0
    %2611 = vmatpush1.msra.mxu0 0.0
    %2612 = vmatprep.subr.mxu0 0.0
    %2613 = vmatpush1.msra.mxu0 0.0
    %2614 = vmatprep.subr.mxu0 0.0
    %2615 = vmatpush1.msra.mxu0 0.0
    %2616 = vmatprep.subr.mxu0 0.0
    %2617 = vmatpush1.msra.mxu0 0.0
    %2618 = vmatprep.subr.mxu0 0.0
    %2619 = vmatpush1.msra.mxu0 0.0
    %2620 = vmatprep.subr.mxu0 0.0
    %2621 = vmatpush1.msra.mxu0 0.0
    %2622 = vmatprep.subr.mxu0 0.0
    %2623 = vmatpush1.msra.mxu0 0.0
    %2624 = vmatprep.subr.mxu0 0.0
    %2625 = vmatpush1.msra.mxu0 0.0
    %2626 = vmatprep.subr.mxu0 0.0
    %2627 = vmatpush1.msra.mxu0 0.0
    %2628 = vmatprep.subr.mxu0 0.0
    %2629 = vmatpush1.msra.mxu0 0.0
    %2630 = vmatprep.subr.mxu0 0.0
    %2631 = vmatpush1.msra.mxu0 0.0
    %2632 = vmatprep.subr.mxu0 0.0
    %2633 = vmatpush1.msra.mxu0 0.0
    %2634 = vmatprep.subr.mxu0 0.0
    %2635 = vmatpush1.msra.mxu0 0.0
    %2636 = vmatprep.mubr.f32.mxu0 0.0
    %2637 = vmatmul.mubr.f32.gmra.mrb[0].mxu0 %v274
    %v2638 = vpop.f32.mrb[0].mxu0
    %v2639 = vadd.f32 %v2570, %v2638
    %v2640 = vpop.f32.mrb[0].mxu0
    %2641 = vmatprep.mubr.f32.mxu0 0.0
    %2642 = vmatmul.mubr.f32.gmra.mrb[0].mxu0 %v277
    %v2643 = vpop.f32.mrb[0].mxu0
    %v2644 = vadd.f32 %v2570, %v2643
    %v2645 = vpop.f32.mrb[0].mxu0
    %2646 = vmatprep.mubr.f32.mxu0 0.0
    %2647 = vmatmul.mubr.f32.gmra.mrb[0].mxu0 %v280
    %v2648 = vpop.f32.mrb[0].mxu0
    %v2649 = vadd.f32 %v2570, %v2648
    %v2650 = vpop.f32.mrb[0].mxu0
    %2651 = vmatprep.mubr.f32.mxu0 0.0
    %2652 = vmatmul.mubr.f32.gmra.mrb[0].mxu0 %v283
    %v2653 = vpop.f32.mrb[0].mxu0
    %v2654 = vadd.f32 %v2570, %v2653
    %v2655 = vpop.f32.mrb[0].mxu0
    %2656 = vdwg.mxu0
    %s2657 = scalar_lea.vmem %s5, 24
    %v2658 = vld [vmem:[%s2657] sm:$0xff]
    %v2660 = vsel %vm371, %v2453, 0
    %v2663 = vsel %vm371, %v2541, 0
    %v2666 = vsel %vm371, %v2546, 0
    %2668 = vmatprep.subr.mxu0 0.0
    %2669 = vmatpush1.xpose.msra.mxu0 %v2663
    %2670 = vmatprep.subr.mxu0 0.0
    %2671 = vmatpush1.xpose.msra.mxu0 %v2666
    %2672 = vmatprep.subr.mxu0 0.0
    %2673 = vmatpush1.xpose.msra.mxu0 0.0
    %2674 = vmatprep.subr.mxu0 0.0
    %2675 = vmatpush1.xpose.msra.mxu0 0.0
    %2676 = vmatprep.subr.mxu0 0.0
    %2677 = vmatpush1.xpose.msra.mxu0 0.0
    %2678 = vmatprep.subr.mxu0 0.0
    %2679 = vmatpush1.xpose.msra.mxu0 0.0
    %2680 = vmatprep.subr.mxu0 0.0
    %2681 = vmatpush1.xpose.msra.mxu0 0.0
    %2682 = vmatprep.subr.mxu0 0.0
    %2683 = vmatpush1.xpose.msra.mxu0 0.0
    %2684 = vmatprep.subr.mxu0 0.0
    %2685 = vmatpush1.xpose.msra.mxu0 0.0
    %2686 = vmatprep.subr.mxu0 0.0
    %2687 = vmatpush1.xpose.msra.mxu0 0.0
    %2688 = vmatprep.subr.mxu0 0.0
    %2689 = vmatpush1.xpose.msra.mxu0 0.0
    %2690 = vmatprep.subr.mxu0 0.0
    %2691 = vmatpush1.xpose.msra.mxu0 0.0
    %2692 = vmatprep.subr.mxu0 0.0
    %2693 = vmatpush1.xpose.msra.mxu0 0.0
    %2694 = vmatprep.subr.mxu0 0.0
    %2695 = vmatpush1.xpose.msra.mxu0 0.0
    %2696 = vmatprep.subr.mxu0 0.0
    %2697 = vmatpush1.xpose.msra.mxu0 0.0
    %2698 = vmatprep.subr.mxu0 0.0
    %2699 = vmatpush1.xpose.msra.mxu0 0.0
    %2700 = vmatprep.subr.mxu0 0.0
    %2701 = vmatpush1.xpose.msra.mxu0 0.0
    %2702 = vmatprep.subr.mxu0 0.0
    %2703 = vmatpush1.xpose.msra.mxu0 0.0
    %2704 = vmatprep.subr.mxu0 0.0
    %2705 = vmatpush1.xpose.msra.mxu0 0.0
    %2706 = vmatprep.subr.mxu0 0.0
    %2707 = vmatpush1.xpose.msra.mxu0 0.0
    %2708 = vmatprep.subr.mxu0 0.0
    %2709 = vmatpush1.xpose.msra.mxu0 0.0
    %2710 = vmatprep.subr.mxu0 0.0
    %2711 = vmatpush1.xpose.msra.mxu0 0.0
    %2712 = vmatprep.subr.mxu0 0.0
    %2713 = vmatpush1.xpose.msra.mxu0 0.0
    %2714 = vmatprep.subr.mxu0 0.0
    %2715 = vmatpush1.xpose.msra.mxu0 0.0
    %2716 = vmatprep.subr.mxu0 0.0
    %2717 = vmatpush1.xpose.msra.mxu0 0.0
    %2718 = vmatprep.subr.mxu0 0.0
    %2719 = vmatpush1.xpose.msra.mxu0 0.0
    %2720 = vmatprep.subr.mxu0 0.0
    %2721 = vmatpush1.xpose.msra.mxu0 0.0
    %2722 = vmatprep.subr.mxu0 0.0
    %2723 = vmatpush1.xpose.msra.mxu0 0.0
    %2724 = vmatprep.subr.mxu0 0.0
    %2725 = vmatpush1.xpose.msra.mxu0 0.0
    %2726 = vmatprep.subr.mxu0 0.0
    %2727 = vmatpush1.xpose.msra.mxu0 0.0
    %2728 = vmatprep.subr.mxu0 0.0
    %2729 = vmatpush1.xpose.msra.mxu0 0.0
    %2730 = vmatprep.subr.mxu0 0.0
    %2731 = vmatpush1.xpose.msra.mxu0 0.0
    %2732 = vmatprep.mubr.f32.mxu0 0.0
    %2733 = vmatmul.mubr.f32.gmra.mrb[0].mxu0 %v2660
    %v2734 = vpop.f32.mrb[0].mxu0
    %v2735 = vadd.f32 0.0, %v2734
    %v2736 = vpop.f32.mrb[0].mxu0
    %2737 = vdwg.mxu0
    %v2738 = vsel %vm451, %v2735, -inf
    %2739 = vmax.xlane.f32.xlu0 %v2738
    %v2740 = vpop.xlane.xlu0 %2739
    %v2741 = vsub.f32 %v2735, %v2740
    %v2742 = vmul.f32 %v2741, 1.442695
    %v2743 = vpow.pop %v2742
    %v2744 = vsel %vm451, %v2743, 0.0
    %2745 = vadd.xlane.f32.xlu0 %v2744
    %v2746 = vpop.xlane.xlu0 %2745
    %v2747 = vrcp.pop %v2746
    %v2748 = vmul.f32 1.0, %v2747
    %v2749 = vmul.f32 %v2743, %v2748
    %v2751 = vsel %vm451, %v2749, 0
    %2753 = vmatprep.subr.mxu0 0.0
    %2754 = vmatpush1.msra.mxu0 %v2639
    %2755 = vmatprep.subr.mxu0 0.0
    %2756 = vmatpush1.msra.mxu0 %v2644
    %2757 = vmatprep.subr.mxu0 0.0
    %2758 = vmatpush1.msra.mxu0 0.0
    %2759 = vmatprep.subr.mxu0 0.0
    %2760 = vmatpush1.msra.mxu0 0.0
    %2761 = vmatprep.subr.mxu0 0.0
    %2762 = vmatpush1.msra.mxu0 0.0
    %2763 = vmatprep.subr.mxu0 0.0
    %2764 = vmatpush1.msra.mxu0 0.0
    %2765 = vmatprep.subr.mxu0 0.0
    %2766 = vmatpush1.msra.mxu0 0.0
    %2767 = vmatprep.subr.mxu0 0.0
    %2768 = vmatpush1.msra.mxu0 0.0
    %2769 = vmatprep.subr.mxu0 0.0
    %2770 = vmatpush1.msra.mxu0 0.0
    %2771 = vmatprep.subr.mxu0 0.0
    %2772 = vmatpush1.msra.mxu0 0.0
    %2773 = vmatprep.subr.mxu0 0.0
    %2774 = vmatpush1.msra.mxu0 0.0
    %2775 = vmatprep.subr.mxu0 0.0
    %2776 = vmatpush1.msra.mxu0 0.0
    %2777 = vmatprep.subr.mxu0 0.0
    %2778 = vmatpush1.msra.mxu0 0.0
    %2779 = vmatprep.subr.mxu0 0.0
    %2780 = vmatpush1.msra.mxu0 0.0
    %2781 = vmatprep.subr.mxu0 0.0
    %2782 = vmatpush1.msra.mxu0 0.0
    %2783 = vmatprep.subr.mxu0 0.0
    %2784 = vmatpush1.msra.mxu0 0.0
    %2785 = vmatprep.subr.mxu0 0.0
    %2786 = vmatpush1.msra.mxu0 0.0
    %2787 = vmatprep.subr.mxu0 0.0
    %2788 = vmatpush1.msra.mxu0 0.0
    %2789 = vmatprep.subr.mxu0 0.0
    %2790 = vmatpush1.msra.mxu0 0.0
    %2791 = vmatprep.subr.mxu0 0.0
    %2792 = vmatpush1.msra.mxu0 0.0
    %2793 = vmatprep.subr.mxu0 0.0
    %2794 = vmatpush1.msra.mxu0 0.0
    %2795 = vmatprep.subr.mxu0 0.0
    %2796 = vmatpush1.msra.mxu0 0.0
    %2797 = vmatprep.subr.mxu0 0.0
    %2798 = vmatpush1.msra.mxu0 0.0
    %2799 = vmatprep.subr.mxu0 0.0
    %2800 = vmatpush1.msra.mxu0 0.0
    %2801 = vmatprep.subr.mxu0 0.0
    %2802 = vmatpush1.msra.mxu0 0.0
    %2803 = vmatprep.subr.mxu0 0.0
    %2804 = vmatpush1.msra.mxu0 0.0
    %2805 = vmatprep.subr.mxu0 0.0
    %2806 = vmatpush1.msra.mxu0 0.0
    %2807 = vmatprep.subr.mxu0 0.0
    %2808 = vmatpush1.msra.mxu0 0.0
    %2809 = vmatprep.subr.mxu0 0.0
    %2810 = vmatpush1.msra.mxu0 0.0
    %2811 = vmatprep.subr.mxu0 0.0
    %2812 = vmatpush1.msra.mxu0 0.0
    %2813 = vmatprep.subr.mxu0 0.0
    %2814 = vmatpush1.msra.mxu0 0.0
    %2815 = vmatprep.subr.mxu0 0.0
    %2816 = vmatpush1.msra.mxu0 0.0
    %2817 = vmatprep.mubr.f32.mxu0 0.0
    %2818 = vmatmul.mubr.f32.gmra.mrb[0].mxu0 %v2751
    %v2819 = vpop.f32.mrb[0].mxu0
    %v2820 = vadd.f32 0.0, %v2819
    %v2821 = vpop.f32.mrb[0].mxu0
    %2822 = vdwg.mxu0
    %v2824 = vsel %vm371, %v2820, 0
    %2826 = vmatprep.subr.mxu0 0.0
    %2827 = vmatpush1.msra.mxu0 %v2658
    %2828 = vmatprep.subr.mxu0 0.0
    %2829 = vmatpush1.msra.mxu0 0.0
    %2830 = vmatprep.subr.mxu0 0.0
    %2831 = vmatpush1.msra.mxu0 0.0
    %2832 = vmatprep.subr.mxu0 0.0
    %2833 = vmatpush1.msra.mxu0 0.0
    %2834 = vmatprep.subr.mxu0 0.0
    %2835 = vmatpush1.msra.mxu0 0.0
    %2836 = vmatprep.subr.mxu0 0.0
    %2837 = vmatpush1.msra.mxu0 0.0
    %2838 = vmatprep.subr.mxu0 0.0
    %2839 = vmatpush1.msra.mxu0 0.0
    %2840 = vmatprep.subr.mxu0 0.0
    %2841 = vmatpush1.msra.mxu0 0.0
    %2842 = vmatprep.subr.mxu0 0.0
    %2843 = vmatpush1.msra.mxu0 0.0
    %2844 = vmatprep.subr.mxu0 0.0
    %2845 = vmatpush1.msra.mxu0 0.0
    %2846 = vmatprep.subr.mxu0 0.0
    %2847 = vmatpush1.msra.mxu0 0.0
    %2848 = vmatprep.subr.mxu0 0.0
    %2849 = vmatpush1.msra.mxu0 0.0
    %2850 = vmatprep.subr.mxu0 0.0
    %2851 = vmatpush1.msra.mxu0 0.0
    %2852 = vmatprep.subr.mxu0 0.0
    %2853 = vmatpush1.msra.mxu0 0.0
    %2854 = vmatprep.subr.mxu0 0.0
    %2855 = vmatpush1.msra.mxu0 0.0
    %2856 = vmatprep.subr.mxu0 0.0
    %2857 = vmatpush1.msra.mxu0 0.0
    %2858 = vmatprep.subr.mxu0 0.0
    %2859 = vmatpush1.msra.mxu0 0.0
    %2860 = vmatprep.subr.mxu0 0.0
    %2861 = vmatpush1.msra.mxu0 0.0
    %2862 = vmatprep.subr.mxu0 0.0
    %2863 = vmatpush1.msra.mxu0 0.0
    %2864 = vmatprep.subr.mxu0 0.0
    %2865 = vmatpush1.msra.mxu0 0.0
    %2866 = vmatprep.subr.mxu0 0.0
    %2867 = vmatpush1.msra.mxu0 0.0
    %2868 = vmatprep.subr.mxu0 0.0
    %2869 = vmatpush1.msra.mxu0 0.0
    %2870 = vmatprep.subr.mxu0 0.0
    %2871 = vmatpush1.msra.mxu0 0.0
    %2872 = vmatprep.subr.mxu0 0.0
    %2873 = vmatpush1.msra.mxu0 0.0
    %2874 = vmatprep.subr.mxu0 0.0
    %2875 = vmatpush1.msra.mxu0 0.0
    %2876 = vmatprep.subr.mxu0 0.0
    %2877 = vmatpush1.msra.mxu0 0.0
    %2878 = vmatprep.subr.mxu0 0.0
    %2879 = vmatpush1.msra.mxu0 0.0
    %2880 = vmatprep.subr.mxu0 0.0
    %2881 = vmatpush1.msra.mxu0 0.0
    %2882 = vmatprep.subr.mxu0 0.0
    %2883 = vmatpush1.msra.mxu0 0.0
    %2884 = vmatprep.subr.mxu0 0.0
    %2885 = vmatpush1.msra.mxu0 0.0
    %2886 = vmatprep.subr.mxu0 0.0
    %2887 = vmatpush1.msra.mxu0 0.0
    %2888 = vmatprep.subr.mxu0 0.0
    %2889 = vmatpush1.msra.mxu0 0.0
    %2890 = vmatprep.mubr.f32.mxu0 0.0
    %2891 = vmatmul.mubr.f32.gmra.mrb[0].mxu0 %v2824
    %v2892 = vpop.f32.mrb[0].mxu0
    %v2893 = vadd.f32 0.0, %v2892
    %v2894 = vpop.f32.mrb[0].mxu0
    %2895 = vdwg.mxu0
    %v2896 = vadd.f32 %v2134, %v2893
    %v2898 = vsel %vm371, %v2458, 0
    %v2901 = vsel %vm371, %v2551, 0
    %v2904 = vsel %vm371, %v2556, 0
    %2906 = vmatprep.subr.mxu0 0.0
    %2907 = vmatpush1.xpose.msra.mxu0 %v2901
    %2908 = vmatprep.subr.mxu0 0.0
    %2909 = vmatpush1.xpose.msra.mxu0 %v2904
    %2910 = vmatprep.subr.mxu0 0.0
    %2911 = vmatpush1.xpose.msra.mxu0 0.0
    %2912 = vmatprep.subr.mxu0 0.0
    %2913 = vmatpush1.xpose.msra.mxu0 0.0
    %2914 = vmatprep.subr.mxu0 0.0
    %2915 = vmatpush1.xpose.msra.mxu0 0.0
    %2916 = vmatprep.subr.mxu0 0.0
    %2917 = vmatpush1.xpose.msra.mxu0 0.0
    %2918 = vmatprep.subr.mxu0 0.0
    %2919 = vmatpush1.xpose.msra.mxu0 0.0
    %2920 = vmatprep.subr.mxu0 0.0
    %2921 = vmatpush1.xpose.msra.mxu0 0.0
    %2922 = vmatprep.subr.mxu0 0.0
    %2923 = vmatpush1.xpose.msra.mxu0 0.0
    %2924 = vmatprep.subr.mxu0 0.0
    %2925 = vmatpush1.xpose.msra.mxu0 0.0
    %2926 = vmatprep.subr.mxu0 0.0
    %2927 = vmatpush1.xpose.msra.mxu0 0.0
    %2928 = vmatprep.subr.mxu0 0.0
    %2929 = vmatpush1.xpose.msra.mxu0 0.0
    %2930 = vmatprep.subr.mxu0 0.0
    %2931 = vmatpush1.xpose.msra.mxu0 0.0
    %2932 = vmatprep.subr.mxu0 0.0
    %2933 = vmatpush1.xpose.msra.mxu0 0.0
    %2934 = vmatprep.subr.mxu0 0.0
    %2935 = vmatpush1.xpose.msra.mxu0 0.0
    %2936 = vmatprep.subr.mxu0 0.0
    %2937 = vmatpush1.xpose.msra.mxu0 0.0
    %2938 = vmatprep.subr.mxu0 0.0
    %2939 = vmatpush1.xpose.msra.mxu0 0.0
    %2940 = vmatprep.subr.mxu0 0.0
    %2941 = vmatpush1.xpose.msra.mxu0 0.0
    %2942 = vmatprep.subr.mxu0 0.0
    %2943 = vmatpush1.xpose.msra.mxu0 0.0
    %2944 = vmatprep.subr.mxu0 0.0
    %2945 = vmatpush1.xpose.msra.mxu0 0.0
    %2946 = vmatprep.subr.mxu0 0.0
    %2947 = vmatpush1.xpose.msra.mxu0 0.0
    %2948 = vmatprep.subr.mxu0 0.0
    %2949 = vmatpush1.xpose.msra.mxu0 0.0
    %2950 = vmatprep.subr.mxu0 0.0
    %2951 = vmatpush1.xpose.msra.mxu0 0.0
    %2952 = vmatprep.subr.mxu0 0.0
    %2953 = vmatpush1.xpose.msra.mxu0 0.0
    %2954 = vmatprep.subr.mxu0 0.0
    %2955 = vmatpush1.xpose.msra.mxu0 0.0
    %2956 = vmatprep.subr.mxu0 0.0
    %2957 = vmatpush1.xpose.msra.mxu0 0.0
    %2958 = vmatprep.subr.mxu0 0.0
    %2959 = vmatpush1.xpose.msra.mxu0 0.0
    %2960 = vmatprep.subr.mxu0 0.0
    %2961 = vmatpush1.xpose.msra.mxu0 0.0
    %2962 = vmatprep.subr.mxu0 0.0
    %2963 = vmatpush1.xpose.msra.mxu0 0.0
    %2964 = vmatprep.subr.mxu0 0.0
    %2965 = vmatpush1.xpose.msra.mxu0 0.0
    %2966 = vmatprep.subr.mxu0 0.0
    %2967 = vmatpush1.xpose.msra.mxu0 0.0
    %2968 = vmatprep.subr.mxu0 0.0
    %2969 = vmatpush1.xpose.msra.mxu0 0.0
    %2970 = vmatprep.mubr.f32.mxu0 0.0
    %2971 = vmatmul.mubr.f32.gmra.mrb[0].mxu0 %v2898
    %v2972 = vpop.f32.mrb[0].mxu0
    %v2973 = vadd.f32 0.0, %v2972
    %v2974 = vpop.f32.mrb[0].mxu0
    %2975 = vdwg.mxu0
    %v2976 = vsel %vm451, %v2973, -inf
    %2977 = vmax.xlane.f32.xlu0 %v2976
    %v2978 = vpop.xlane.xlu0 %2977
    %v2979 = vsub.f32 %v2973, %v2978
    %v2980 = vmul.f32 %v2979, 1.442695
    %v2981 = vpow.pop %v2980
    %v2982 = vsel %vm451, %v2981, 0.0
    %2983 = vadd.xlane.f32.xlu0 %v2982
    %v2984 = vpop.xlane.xlu0 %2983
    %v2985 = vrcp.pop %v2984
    %v2986 = vmul.f32 1.0, %v2985
    %v2987 = vmul.f32 %v2981, %v2986
    %v2989 = vsel %vm451, %v2987, 0
    %2991 = vmatprep.subr.mxu0 0.0
    %2992 = vmatpush1.msra.mxu0 %v2649
    %2993 = vmatprep.subr.mxu0 0.0
    %2994 = vmatpush1.msra.mxu0 %v2654
    %2995 = vmatprep.subr.mxu0 0.0
    %2996 = vmatpush1.msra.mxu0 0.0
    %2997 = vmatprep.subr.mxu0 0.0
    %2998 = vmatpush1.msra.mxu0 0.0
    %2999 = vmatprep.subr.mxu0 0.0
    %3000 = vmatpush1.msra.mxu0 0.0
    %3001 = vmatprep.subr.mxu0 0.0
    %3002 = vmatpush1.msra.mxu0 0.0
    %3003 = vmatprep.subr.mxu0 0.0
    %3004 = vmatpush1.msra.mxu0 0.0
    %3005 = vmatprep.subr.mxu0 0.0
    %3006 = vmatpush1.msra.mxu0 0.0
    %3007 = vmatprep.subr.mxu0 0.0
    %3008 = vmatpush1.msra.mxu0 0.0
    %3009 = vmatprep.subr.mxu0 0.0
    %3010 = vmatpush1.msra.mxu0 0.0
    %3011 = vmatprep.subr.mxu0 0.0
    %3012 = vmatpush1.msra.mxu0 0.0
    %3013 = vmatprep.subr.mxu0 0.0
    %3014 = vmatpush1.msra.mxu0 0.0
    %3015 = vmatprep.subr.mxu0 0.0
    %3016 = vmatpush1.msra.mxu0 0.0
    %3017 = vmatprep.subr.mxu0 0.0
    %3018 = vmatpush1.msra.mxu0 0.0
    %3019 = vmatprep.subr.mxu0 0.0
    %3020 = vmatpush1.msra.mxu0 0.0
    %3021 = vmatprep.subr.mxu0 0.0
    %3022 = vmatpush1.msra.mxu0 0.0
    %3023 = vmatprep.subr.mxu0 0.0
    %3024 = vmatpush1.msra.mxu0 0.0
    %3025 = vmatprep.subr.mxu0 0.0
    %3026 = vmatpush1.msra.mxu0 0.0
    %3027 = vmatprep.subr.mxu0 0.0
    %3028 = vmatpush1.msra.mxu0 0.0
    %3029 = vmatprep.subr.mxu0 0.0
    %3030 = vmatpush1.msra.mxu0 0.0
    %3031 = vmatprep.subr.mxu0 0.0
    %3032 = vmatpush1.msra.mxu0 0.0
    %3033 = vmatprep.subr.mxu0 0.0
    %3034 = vmatpush1.msra.mxu0 0.0
    %3035 = vmatprep.subr.mxu0 0.0
    %3036 = vmatpush1.msra.mxu0 0.0
    %3037 = vmatprep.subr.mxu0 0.0
    %3038 = vmatpush1.msra.mxu0 0.0
    %3039 = vmatprep.subr.mxu0 0.0
    %3040 = vmatpush1.msra.mxu0 0.0
    %3041 = vmatprep.subr.mxu0 0.0
    %3042 = vmatpush1.msra.mxu0 0.0
    %3043 = vmatprep.subr.mxu0 0.0
    %3044 = vmatpush1.msra.mxu0 0.0
    %3045 = vmatprep.subr.mxu0 0.0
    %3046 = vmatpush1.msra.mxu0 0.0
    %3047 = vmatprep.subr.mxu0 0.0
    %3048 = vmatpush1.msra.mxu0 0.0
    %3049 = vmatprep.subr.mxu0 0.0
    %3050 = vmatpush1.msra.mxu0 0.0
    %3051 = vmatprep.subr.mxu0 0.0
    %3052 = vmatpush1.msra.mxu0 0.0
    %3053 = vmatprep.subr.mxu0 0.0
    %3054 = vmatpush1.msra.mxu0 0.0
    %3055 = vmatprep.mubr.f32.mxu0 0.0
    %3056 = vmatmul.mubr.f32.gmra.mrb[0].mxu0 %v2989
    %v3057 = vpop.f32.mrb[0].mxu0
    %v3058 = vadd.f32 0.0, %v3057
    %v3059 = vpop.f32.mrb[0].mxu0
    %3060 = vdwg.mxu0
    %v3062 = vsel %vm371, %v3058, 0
    %3064 = vmatprep.subr.mxu0 0.0
    %3065 = vmatpush1.msra.mxu0 %v2658
    %3066 = vmatprep.subr.mxu0 0.0
    %3067 = vmatpush1.msra.mxu0 0.0
    %3068 = vmatprep.subr.mxu0 0.0
    %3069 = vmatpush1.msra.mxu0 0.0
    %3070 = vmatprep.subr.mxu0 0.0
    %3071 = vmatpush1.msra.mxu0 0.0
    %3072 = vmatprep.subr.mxu0 0.0
    %3073 = vmatpush1.msra.mxu0 0.0
    %3074 = vmatprep.subr.mxu0 0.0
    %3075 = vmatpush1.msra.mxu0 0.0
    %3076 = vmatprep.subr.mxu0 0.0
    %3077 = vmatpush1.msra.mxu0 0.0
    %3078 = vmatprep.subr.mxu0 0.0
    %3079 = vmatpush1.msra.mxu0 0.0
    %3080 = vmatprep.subr.mxu0 0.0
    %3081 = vmatpush1.msra.mxu0 0.0
    %3082 = vmatprep.subr.mxu0 0.0
    %3083 = vmatpush1.msra.mxu0 0.0
    %3084 = vmatprep.subr.mxu0 0.0
    %3085 = vmatpush1.msra.mxu0 0.0
    %3086 = vmatprep.subr.mxu0 0.0
    %3087 = vmatpush1.msra.mxu0 0.0
    %3088 = vmatprep.subr.mxu0 0.0
    %3089 = vmatpush1.msra.mxu0 0.0
    %3090 = vmatprep.subr.mxu0 0.0
    %3091 = vmatpush1.msra.mxu0 0.0
    %3092 = vmatprep.subr.mxu0 0.0
    %3093 = vmatpush1.msra.mxu0 0.0
    %3094 = vmatprep.subr.mxu0 0.0
    %3095 = vmatpush1.msra.mxu0 0.0
    %3096 = vmatprep.subr.mxu0 0.0
    %3097 = vmatpush1.msra.mxu0 0.0
    %3098 = vmatprep.subr.mxu0 0.0
    %3099 = vmatpush1.msra.mxu0 0.0
    %3100 = vmatprep.subr.mxu0 0.0
    %3101 = vmatpush1.msra.mxu0 0.0
    %3102 = vmatprep.subr.mxu0 0.0
    %3103 = vmatpush1.msra.mxu0 0.0
    %3104 = vmatprep.subr.mxu0 0.0
    %3105 = vmatpush1.msra.mxu0 0.0
    %3106 = vmatprep.subr.mxu0 0.0
    %3107 = vmatpush1.msra.mxu0 0.0
    %3108 = vmatprep.subr.mxu0 0.0
    %3109 = vmatpush1.msra.mxu0 0.0
    %3110 = vmatprep.subr.mxu0 0.0
    %3111 = vmatpush1.msra.mxu0 0.0
    %3112 = vmatprep.subr.mxu0 0.0
    %3113 = vmatpush1.msra.mxu0 0.0
    %3114 = vmatprep.subr.mxu0 0.0
    %3115 = vmatpush1.msra.mxu0 0.0
    %3116 = vmatprep.subr.mxu0 0.0
    %3117 = vmatpush1.msra.mxu0 0.0
    %3118 = vmatprep.subr.mxu0 0.0
    %3119 = vmatpush1.msra.mxu0 0.0
    %3120 = vmatprep.subr.mxu0 0.0
    %3121 = vmatpush1.msra.mxu0 0.0
    %3122 = vmatprep.subr.mxu0 0.0
    %3123 = vmatpush1.msra.mxu0 0.0
    %3124 = vmatprep.subr.mxu0 0.0
    %3125 = vmatpush1.msra.mxu0 0.0
    %3126 = vmatprep.subr.mxu0 0.0
    %3127 = vmatpush1.msra.mxu0 0.0
    %3128 = vmatprep.mubr.f32.mxu0 0.0
    %3129 = vmatmul.mubr.f32.gmra.mrb[0].mxu0 %v3062
    %v3130 = vpop.f32.mrb[0].mxu0
    %v3131 = vadd.f32 0.0, %v3130
    %v3132 = vpop.f32.mrb[0].mxu0
    %3133 = vdwg.mxu0
    %v3134 = vadd.f32 %v2372, %v3131
    %v3135 = vsel %vm68, %v2896, 0.0
    %3136 = vadd.xlane.f32.xlu0 %v3135
    %v3137 = vpop.xlane.xlu0 %3136
    %v3138 = vrcp.pop 32.0
    %v3139 = vmul.f32 %v3137, %v3138
    %v3140 = vsub.f32 %v2896, %v3139
    %v3141 = vmul.f32 %v3140, %v3140
    %v3142 = vsel %vm68, %v3141, 0.0
    %3143 = vadd.xlane.f32.xlu0 %v3142
    %v3144 = vpop.xlane.xlu0 %3143
    %v3145 = vmul.f32 %v3144, %v3138
    %v3146 = vadd.f32 %v3145, 1e-05
    %v3147 = vrsqrt.pop %v3146
    %v3148 = vmul.f32 %v3140, %v3147
    %v3149 = vlaneseq
    %v3150 = vshrl.u32 %v3149, 7
    %v3151 = vsub.s32 0, %v3150
    %v3152 = vrot.slane %v31, %v3151
    %v3153 = vmul.f32 %v3148, %v3152
    %v3154 = vlaneseq
    %v3155 = vshrl.u32 %v3154, 7
    %v3156 = vsub.s32 0, %v3155
    %v3157 = vrot.slane %v32, %v3156
    %v3158 = vadd.f32 %v3153, %v3157
    %3159 = vst.msk [vmem:[#allocation2] sm:$0xff] %vm68, %v3158
    %v3160 = vsel %vm68, %v3134, 0.0
    %3161 = vadd.xlane.f32.xlu0 %v3160
    %v3162 = vpop.xlane.xlu0 %3161
    %v3163 = vmul.f32 %v3162, %v3138
    %v3164 = vsub.f32 %v3134, %v3163
    %v3165 = vmul.f32 %v3164, %v3164
    %v3166 = vsel %vm68, %v3165, 0.0
    %3167 = vadd.xlane.f32.xlu0 %v3166
    %v3168 = vpop.xlane.xlu0 %3167
    %v3169 = vmul.f32 %v3168, %v3138
    %v3170 = vadd.f32 %v3169, 1e-05
    %v3171 = vrsqrt.pop %v3170
    %v3172 = vmul.f32 %v3164, %v3171
    %v3173 = vmul.f32 %v3172, %v3152
    %v3174 = vadd.f32 %v3173, %v3157
    %s3175 = scalar_lea.vmem [#allocation2], 8
    %3176 = vst.msk [vmem:[%s3175] sm:$0xff] %vm68, %v3174
    // Predicated region
    $region34: #{tpu_custom_call.1} parent=1 // pred_check
      _
    $region35: #{tpu_custom_call.1} parent=1 // pred_check_branch
      %3178 = sbr.rel (0) target = $region37
    $region36: #{tpu_custom_call.1} parent=1 // pred_region
      %s3180 = ssub.s32 256, 256
      %3181 = vsyncadd [#allocation3], %s3180
      %s3182 = sshll.u32 [#allocation2], 4
      %s3183 = int_to_ptr.vmem [resolvable:$true] %s3182
      %3188 = dma.vmem_to_hbm [thread:$0]  %s3183, 256, %s8, [#allocation3], 128, 128, 8
    $region37: #{tpu_custom_call.1} parent=1 // pred_fallthru
      _
    // Predicated region
    $region38: #{tpu_custom_call.1} parent=1 // pred_check
      _
    $region39: #{tpu_custom_call.1} parent=1 // pred_check_branch
      %3190 = sbr.rel (0) target = $region41
    $region40: #{tpu_custom_call.1} parent=1 // pred_region
      %3191 = dma.done [#allocation3], 256
    $region41: #{tpu_custom_call.1} parent=1 // pred_fallthru
      _
    %3192 = vsyncpa [#allocation3], 1

</llo_original>
